<compile_context>
chip_gen: v7x
topology: tpu7x:2x2x1
jax: 0.10.0
libtpu: 0.0.40
codegen_flags: <defaults>
</compile_context>

<pallas_src>
import jax
import jax.numpy as jnp
from jax.experimental import pallas as pl
from jax.experimental.pallas import tpu as pltpu

BN_EPS = 1e-5
LANE = 128
_VMEM_LIMIT = 32 * 1024 * 1024   # safe on v5e/v6e/v7x; the tiles below use ~2 MiB


def _round_up(x, m):
    return ((x + m - 1) // m) * m


def _pick_tk(k_pad):
    for cand in (512, 384, 256, 128):
        if k_pad % cand == 0:
            return cand
    return 128


# ----------------------------------------------------------------------------
# Pass 1: tiled conv-as-matmul + per-tile channel stats (for batch-stat BN)
# ----------------------------------------------------------------------------
def _matmul_stats_kernel(x_ref, w_ref, y_ref, stat_ref, acc_ref):
    k = pl.program_id(2)

    @pl.when(k == 0)
    def _():
        acc_ref[...] = jnp.zeros_like(acc_ref)

    acc_ref[...] += jnp.dot(x_ref[...], w_ref[...],
                            preferred_element_type=jnp.float32)

    @pl.when(k == pl.num_programs(2) - 1)
    def _():
        acc = acc_ref[...]
        y_ref[...] = acc
        s1 = jnp.sum(acc, axis=0, keepdims=True)        # (1, tn) channel sum
        s2 = jnp.sum(acc * acc, axis=0, keepdims=True)  # (1, tn) channel sum-of-squares
        stat_ref[...] = jnp.concatenate([s1, s2], axis=0)[None, :, :]


# ----------------------------------------------------------------------------
# Pass 2: elementwise BN (scale/shift) + ReLU + optional residual, tiled over M
# ----------------------------------------------------------------------------
def _make_bn_act_kernel(apply_relu, has_residual):
    def kernel(*refs):
        if has_residual:
            y_ref, sc_ref, sh_ref, res_ref, o_ref = refs
        else:
            y_ref, sc_ref, sh_ref, o_ref = refs
        y = y_ref[...] * sc_ref[...] + sh_ref[...]
        if apply_relu:
            y = jnp.maximum(y, 0.0)
        if has_residual:
            y = y + res_ref[...]
        o_ref[...] = y
    return kernel


# ----------------------------------------------------------------------------
# im2col (wrapper-side indexing glue)
# ----------------------------------------------------------------------------
# TODO(synk): stream the k*k taps inside the matmul kernel (manual DMA of
# shifted/strided windows) instead of materializing im2col in HBM; that would
# cut HBM traffic ~k*k-fold on the memory-bound stem / early blocks.
def _im2col(x_nhwc, k, stride, pad):
    n, h, w, c = x_nhwc.shape
    xp = jnp.pad(x_nhwc, ((0, 0), (pad, pad), (pad, pad), (0, 0)))
    ho = (h + 2 * pad - k) // stride + 1
    wo = (w + 2 * pad - k) // stride + 1
    cols = []
    for di in range(k):
        for dj in range(k):
            patch = xp[:, di:di + stride * ho:stride, dj:dj + stride * wo:stride, :]
            cols.append(patch)
    patches = jnp.concatenate(cols, axis=-1)   # (N, Ho, Wo, k*k*C): tap-major, chan-minor
    return patches.reshape(n * ho * wo, k * k * c), ho, wo


# ----------------------------------------------------------------------------
# Conv2d + BatchNorm (batch stats) + optional ReLU / residual
# ----------------------------------------------------------------------------
def conv_bn(x_nhwc, params, stride, padding, apply_relu, residual=None):
    w, _b, gamma, beta = params      # conv bias is exactly cancelled by batch-stat BN
    cout, cin_w, k, _ = w.shape
    n, _, _, cin = x_nhwc.shape      # cin >= cin_w (padded activation channels are zero)

    cols, ho, wo = _im2col(x_nhwc, k, stride, padding)     # (M, k*k*cin)
    m = n * ho * wo
    k_raw = k * k * cin

    # weight matrix in im2col order (tap-major, channel-minor), input channels
    # padded to the (possibly channel-padded) activation width
    wmat = jnp.transpose(w, (2, 3, 1, 0))                  # (k, k, cin_w, cout)
    if cin > cin_w:
        wmat = jnp.pad(wmat, ((0, 0), (0, 0), (0, cin - cin_w), (0, 0)))
    wmat = wmat.reshape(k_raw, cout)

    # lane/tile-friendly padding and tile sizes
    cout_pad = _round_up(cout, LANE)
    k_pad = _round_up(k_raw, LANE)
    tk = _pick_tk(k_pad)
    tn = 256 if cout_pad % 256 == 0 else LANE
    tm = min(256, _round_up(m, 16))
    m_pad = _round_up(m, tm)

    cols = jnp.pad(cols, ((0, m_pad - m), (0, k_pad - k_raw))).astype(jnp.bfloat16)
    wmat = jnp.pad(wmat, ((0, k_pad - k_raw), (0, cout_pad - cout))).astype(jnp.bfloat16)

    gm, gn, gk = m_pad // tm, cout_pad // tn, k_pad // tk

    y, stats = pl.pallas_call(
        _matmul_stats_kernel,
        out_shape=(jax.ShapeDtypeStruct((m_pad, cout_pad), jnp.float32),
                   jax.ShapeDtypeStruct((gm, 2, cout_pad), jnp.float32)),
        grid_spec=pltpu.PrefetchScalarGridSpec(
            num_scalar_prefetch=0,
            grid=(gm, gn, gk),
            in_specs=[pl.BlockSpec((tm, tk), lambda i, j, kk: (i, kk)),
                      pl.BlockSpec((tk, tn), lambda i, j, kk: (kk, j))],
            out_specs=[pl.BlockSpec((tm, tn), lambda i, j, kk: (i, j)),
                       pl.BlockSpec((1, 2, tn), lambda i, j, kk: (i, 0, j))],
            scratch_shapes=[pltpu.VMEM((tm, tn), jnp.float32)]),
        compiler_params=pltpu.CompilerParams(
            dimension_semantics=("parallel", "parallel", "arbitrary"),
            vmem_limit_bytes=_VMEM_LIMIT),
    )(cols, wmat)

    # batch statistics over all real rows (tiny per-channel math in plain JAX)
    tot = jnp.sum(stats, axis=0)                       # (2, cout_pad)
    mu = tot[0] / m
    var = jnp.maximum(tot[1] / m - mu * mu, 0.0)       # biased variance, single pass
    gamma_p = jnp.pad(gamma, (0, cout_pad - cout))
    beta_p = jnp.pad(beta, (0, cout_pad - cout))
    scale_v = gamma_p * jax.lax.rsqrt(var + BN_EPS)
    shift_v = beta_p - mu * scale_v
    scale = scale_v.reshape(1, cout_pad)
    shift = shift_v.reshape(1, cout_pad)

    inputs = [y, scale, shift]
    in_specs = [pl.BlockSpec((tm, cout_pad), lambda i: (i, 0)),
                pl.BlockSpec((1, cout_pad), lambda i: (0, 0)),
                pl.BlockSpec((1, cout_pad), lambda i: (0, 0))]
    if residual is not None:
        res = residual.reshape(m, cout_pad)
        inputs.append(jnp.pad(res, ((0, m_pad - m), (0, 0))))
        in_specs.append(pl.BlockSpec((tm, cout_pad), lambda i: (i, 0)))

    out = pl.pallas_call(
        _make_bn_act_kernel(apply_relu, residual is not None),
        out_shape=jax.ShapeDtypeStruct((m_pad, cout_pad), jnp.float32),
        grid=(gm,),
        in_specs=in_specs,
        out_specs=pl.BlockSpec((tm, cout_pad), lambda i: (i, 0)),
        compiler_params=pltpu.CompilerParams(
            dimension_semantics=("parallel",),
            vmem_limit_bytes=_VMEM_LIMIT),
    )(*inputs)

    return out[:m].reshape(n, ho, wo, cout_pad)


# ----------------------------------------------------------------------------
# Global spatial mean + Linear head (VPU multiply + reduce; no MXU)
# ----------------------------------------------------------------------------
def _head_kernel(z_ref, w_ref, b_ref, o_ref):
    zw = z_ref[...] * w_ref[...]                   # (N, HW, C)
    s = jnp.sum(jnp.sum(zw, axis=2), axis=1)       # (N,)
    o_ref[...] = s[:, None] + b_ref[...]


def head(z_nhwc, w, b):
    n, h, wd, cpad = z_nhwc.shape
    c = w.shape[1]
    w_p = jnp.pad(w, ((0, 0), (0, cpad - c))) if cpad > c else w
    w_scaled = (w_p / float(h * wd)).reshape(1, 1, cpad)   # fold the spatial mean in
    z = z_nhwc.reshape(n, h * wd, cpad)
    out = pl.pallas_call(
        _head_kernel,
        grid=(1,),
        in_specs=[pl.BlockSpec((n, h * wd, cpad), lambda i: (0, 0, 0)),
                  pl.BlockSpec((1, 1, cpad), lambda i: (0, 0, 0)),
                  pl.BlockSpec((1, 1), lambda i: (0, 0))],
        out_specs=pl.BlockSpec((n, 1), lambda i: (0, 0)),
        out_shape=jax.ShapeDtypeStruct((n, 1), jnp.float32),
    )(z, w_scaled, b.reshape(1, 1))
    return out[:, 0]   # matches [:, 0] in the torch forward


# ----------------------------------------------------------------------------
# Parameter init (deterministic, PyTorch-style shapes)
# ----------------------------------------------------------------------------
def init_conv(key, cout, cin, k):
    kw, kb = jax.random.split(key)
    fan_in = cin * k * k
    bound = 1.0 / jnp.sqrt(jnp.float32(fan_in))
    w = jax.random.uniform(kw, (cout, cin, k, k), jnp.float32, -bound, bound)
    b = jax.random.uniform(kb, (cout,), jnp.float32, -bound, bound)
    return w, b


def init_conv_bn(key, cout, cin, k):
    w, b = init_conv(key, cout, cin, k)
    return (w, b, jnp.ones((cout,), jnp.float32), jnp.zeros((cout,), jnp.float32))


def init_params(key, layers=(32, 64, 128), n_input_channels=3):
    keys = jax.random.split(key, 2 + 3 * len(layers))
    params = {"stem": init_conv_bn(keys[0], 32, n_input_channels, 7), "blocks": []}
    c = 32
    i = 1
    for l in layers:
        params["blocks"].append({
            "conv1": init_conv_bn(keys[i], l, c, 3),
            "conv2": init_conv_bn(keys[i + 1], l, l, 3),
            "down": init_conv_bn(keys[i + 2], l, c, 1),
        })
        c = l
        i += 3
    kw, kb = jax.random.split(keys[-1])
    bound = 1.0 / jnp.sqrt(jnp.float32(c))
    params["cls_w"] = jax.random.uniform(kw, (1, c), jnp.float32, -bound, bound)
    params["cls_b"] = jax.random.uniform(kb, (1,), jnp.float32, -bound, bound)
    return params


# ----------------------------------------------------------------------------
# Forward pass
# ----------------------------------------------------------------------------
def block_forward(x, p):
    # All blocks in ConvNet use stride=2, so the downsample branch always exists.
    a = conv_bn(x, p["conv1"], stride=2, padding=1, apply_relu=True)
    identity = conv_bn(x, p["down"], stride=2, padding=0, apply_relu=False)
    # torch: net(x) + identity, with ReLU applied before the residual add
    return conv_bn(a, p["conv2"], stride=1, padding=1, apply_relu=True,
                   residual=identity)


def convnet_forward(params, x_nchw):
    x = jnp.transpose(x_nchw, (0, 2, 3, 1))   # NCHW -> NHWC
    x = conv_bn(x, params["stem"], stride=2, padding=3, apply_relu=True)
    for blk in params["blocks"]:
        x = block_forward(x, blk)
    return head(x, params["cls_w"], params["cls_b"])   # shape (N,)


if __name__ == "__main__":
    key = jax.random.PRNGKey(0)
    kp, kx = jax.random.split(key)
    params = init_params(kp)
    x = jax.random.normal(kx, (2, 3, 16, 16), jnp.float32)   # NCHW, like torch
    out = jax.jit(convnet_forward)(params, x)
    jax.block_until_ready(out)
    assert out.shape == (2,)
    print("KERNEL_OK")
</pallas_src>

<mosaic_0001>
module attributes {stable_mosaic.version = 11 : i64} {
  func.func @_matmul_stats_kernel(%arg0: i32, %arg1: i32, %arg2: i32, %arg3: memref<128x256xbf16, #tpu.memory_space<vmem>>, %arg4: memref<256x128xbf16, #tpu.memory_space<vmem>>, %arg5: memref<128x128xf32, #tpu.memory_space<vmem>>, %arg6: memref<1x2x128xf32, #tpu.memory_space<vmem>>, %arg7: memref<128x128xf32, #tpu.memory_space<vmem>>) attributes {dimension_semantics = [#tpu.dimension_semantics<parallel>, #tpu.dimension_semantics<parallel>, #tpu.dimension_semantics<arbitrary>], iteration_bounds = array<i64: 1, 1, 1>, scalar_prefetch = 0 : i64, scratch_operands = 1 : i64, tpu.core_type = #tpu.core_type<tc>, window_params = [{transform_indices = @transform_0, window_bounds = array<i64: 128, 256>}, {transform_indices = @transform_1, window_bounds = array<i64: 256, 128>}, {transform_indices = @transform_2, window_bounds = array<i64: 128, 128>}, {transform_indices = @transform_3, window_bounds = array<i64: 1, 2, 128>}]} {
    %c0_i32 = arith.constant 0 : i32
    %0 = arith.cmpi eq, %arg2, %c0_i32 : i32
    %1 = arith.extui %0 : i1 to i32
    %c0_i32_0 = arith.constant 0 : i32
    %2 = arith.cmpi ne, %1, %c0_i32_0 : i32
    scf.if %2 {
      %cst_10 = arith.constant 0.000000e+00 : f32
      %12 = vector.broadcast %cst_10 : f32 to vector<128x128xf32>
      %c0_11 = arith.constant 0 : index
      %c0_12 = arith.constant 0 : index
      %13 = vector.load %arg7[%c0_11, %c0_12] : memref<128x128xf32, #tpu.memory_space<vmem>>, vector<128x128xf32>
      tpu.vector_store %arg7[%c0_11, %c0_12], %12 {strides = array<i32>} : memref<128x128xf32, #tpu.memory_space<vmem>>, vector<128x128xf32>,
    } else {
    }
    %c0 = arith.constant 0 : index
    %c0_1 = arith.constant 0 : index
    %3 = vector.load %arg7[%c0, %c0_1] : memref<128x128xf32, #tpu.memory_space<vmem>>, vector<128x128xf32>
    %c0_2 = arith.constant 0 : index
    %c0_3 = arith.constant 0 : index
    %4 = vector.load %arg3[%c0_2, %c0_3] : memref<128x256xbf16, #tpu.memory_space<vmem>>, vector<128x256xbf16>
    %c0_4 = arith.constant 0 : index
    %c0_5 = arith.constant 0 : index
    %5 = vector.load %arg4[%c0_4, %c0_5] : memref<256x128xbf16, #tpu.memory_space<vmem>>, vector<256x128xbf16>
    %cst = arith.constant dense<0.000000e+00> : vector<128x128xf32>
    %6 = tpu.matmul %4, %5, %cst {dimension_numbers = #tpu.dot_dimension_numbers<[1], [0], [0], [1], [0, 0, 1, 1], [], []>} : vector<128x256xbf16>, vector<256x128xbf16>, vector<128x128xf32> -> vector<128x128xf32>
    %7 = arith.addf %3, %6 : vector<128x128xf32>
    %c0_6 = arith.constant 0 : index
    %c0_7 = arith.constant 0 : index
    %8 = vector.load %arg7[%c0_6, %c0_7] : memref<128x128xf32, #tpu.memory_space<vmem>>, vector<128x128xf32>
    tpu.vector_store %arg7[%c0_6, %c0_7], %7 {strides = array<i32>} : memref<128x128xf32, #tpu.memory_space<vmem>>, vector<128x128xf32>,
    %c0_i32_8 = arith.constant 0 : i32
    %9 = arith.cmpi eq, %arg2, %c0_i32_8 : i32
    %10 = arith.extui %9 : i1 to i32
    %c0_i32_9 = arith.constant 0 : i32
    %11 = arith.cmpi ne, %10, %c0_i32_9 : i32
    scf.if %11 {
      %c0_10 = arith.constant 0 : index
      %c0_11 = arith.constant 0 : index
      %12 = vector.load %arg7[%c0_10, %c0_11] : memref<128x128xf32, #tpu.memory_space<vmem>>, vector<128x128xf32>
      %c0_12 = arith.constant 0 : index
      %c0_13 = arith.constant 0 : index
      %13 = vector.load %arg5[%c0_12, %c0_13] : memref<128x128xf32, #tpu.memory_space<vmem>>, vector<128x128xf32>
      tpu.vector_store %arg5[%c0_12, %c0_13], %12 {strides = array<i32>} : memref<128x128xf32, #tpu.memory_space<vmem>>, vector<128x128xf32>,
      %cst_14 = arith.constant dense<0.000000e+00> : vector<128xf32>
      %14 = vector.multi_reduction <add>, %12, %cst_14 [0] : vector<128x128xf32> to vector<128xf32>
      %15 = vector.shape_cast %14 : vector<128xf32> to vector<1x128xf32>
      %16 = arith.mulf %12, %12 : vector<128x128xf32>
      %cst_15 = arith.constant dense<0.000000e+00> : vector<128xf32>
      %17 = vector.multi_reduction <add>, %16, %cst_15 [0] : vector<128x128xf32> to vector<128xf32>
      %18 = vector.shape_cast %17 : vector<128xf32> to vector<1x128xf32>
      %19 = tpu.concatenate %15, %18 in 0 : vector<1x128xf32>, vector<1x128xf32> -> vector<2x128xf32>
      %20 = vector.shape_cast %19 : vector<2x128xf32> to vector<1x2x128xf32>
      %c0_16 = arith.constant 0 : index
      %c0_17 = arith.constant 0 : index
      %c0_18 = arith.constant 0 : index
      %21 = vector.load %arg6[%c0_16, %c0_17, %c0_18] : memref<1x2x128xf32, #tpu.memory_space<vmem>>, vector<1x2x128xf32>
      tpu.vector_store %arg6[%c0_16, %c0_17, %c0_18], %20 {strides = array<i32>} : memref<1x2x128xf32, #tpu.memory_space<vmem>>, vector<1x2x128xf32>,
    } else {
    }
    return
  }
  func.func @transform_0(%arg0: i32, %arg1: i32, %arg2: i32) -> (i32, i32) {
    %c0_i32 = arith.constant 0 : i32
    return %arg0, %arg2 : i32, i32
  }
  func.func @transform_1(%arg0: i32, %arg1: i32, %arg2: i32) -> (i32, i32) {
    %c0_i32 = arith.constant 0 : i32
    return %arg2, %arg1 : i32, i32
  }
  func.func @transform_2(%arg0: i32, %arg1: i32, %arg2: i32) -> (i32, i32) {
    %c0_i32 = arith.constant 0 : i32
    return %arg0, %arg1 : i32, i32
  }
  func.func @transform_3(%arg0: i32, %arg1: i32, %arg2: i32) -> (i32, i32, i32) {
    %c0_i32 = arith.constant 0 : i32
    %c0_i32_0 = arith.constant 0 : i32
    return %arg0, %c0_i32, %arg1 : i32, i32, i32
  }
}

module attributes {stable_mosaic.version = 11 : i64} {
  func.func @kernel(%arg0: i32, %arg1: memref<128x128xf32, #tpu.memory_space<vmem>>, %arg2: memref<1x128xf32, #tpu.memory_space<vmem>>, %arg3: memref<1x128xf32, #tpu.memory_space<vmem>>, %arg4: memref<128x128xf32, #tpu.memory_space<vmem>>) attributes {dimension_semantics = [#tpu.dimension_semantics<parallel>], iteration_bounds = array<i64: 1>, scalar_prefetch = 0 : i64, scratch_operands = 0 : i64, tpu.core_type = #tpu.core_type<tc>, window_params = [{transform_indices = @transform_0, window_bounds = array<i64: 128, 128>}, {pipeline_mode = #tpu.pipeline_mode<synchronous>, transform_indices = @transform_1, window_bounds = array<i64: 1, 128>}, {pipeline_mode = #tpu.pipeline_mode<synchronous>, transform_indices = @transform_2, window_bounds = array<i64: 1, 128>}, {transform_indices = @transform_3, window_bounds = array<i64: 128, 128>}]} {
    %c0 = arith.constant 0 : index
    %c0_0 = arith.constant 0 : index
    %0 = vector.load %arg1[%c0, %c0_0] : memref<128x128xf32, #tpu.memory_space<vmem>>, vector<128x128xf32>
    %c0_1 = arith.constant 0 : index
    %c0_2 = arith.constant 0 : index
    %1 = vector.load %arg2[%c0_1, %c0_2] : memref<1x128xf32, #tpu.memory_space<vmem>>, vector<1x128xf32>
    %2 = vector.broadcast %1 : vector<1x128xf32> to vector<128x128xf32>
    %3 = arith.mulf %0, %2 : vector<128x128xf32>
    %c0_3 = arith.constant 0 : index
    %c0_4 = arith.constant 0 : index
    %4 = vector.load %arg3[%c0_3, %c0_4] : memref<1x128xf32, #tpu.memory_space<vmem>>, vector<1x128xf32>
    %5 = vector.broadcast %4 : vector<1x128xf32> to vector<128x128xf32>
    %6 = arith.addf %3, %5 : vector<128x128xf32>
    %cst = arith.constant 0.000000e+00 : f32
    %7 = vector.broadcast %cst : f32 to vector<128x128xf32>
    %8 = arith.maximumf %6, %7 : vector<128x128xf32>
    %c0_5 = arith.constant 0 : index
    %c0_6 = arith.constant 0 : index
    %9 = vector.load %arg4[%c0_5, %c0_6] : memref<128x128xf32, #tpu.memory_space<vmem>>, vector<128x128xf32>
    tpu.vector_store %arg4[%c0_5, %c0_6], %8 {strides = array<i32>} : memref<128x128xf32, #tpu.memory_space<vmem>>, vector<128x128xf32>,
    return
  }
  func.func @transform_0(%arg0: i32) -> (i32, i32) {
    %c0_i32 = arith.constant 0 : i32
    %c0_i32_0 = arith.constant 0 : i32
    return %arg0, %c0_i32 : i32, i32
  }
  func.func @transform_1(%arg0: i32) -> (i32, i32) {
    %c0_i32 = arith.constant 0 : i32
    %c0_i32_0 = arith.constant 0 : i32
    %c0_i32_1 = arith.constant 0 : i32
    return %c0_i32, %c0_i32_0 : i32, i32
  }
  func.func @transform_2(%arg0: i32) -> (i32, i32) {
    %c0_i32 = arith.constant 0 : i32
    %c0_i32_0 = arith.constant 0 : i32
    %c0_i32_1 = arith.constant 0 : i32
    return %c0_i32, %c0_i32_0 : i32, i32
  }
  func.func @transform_3(%arg0: i32) -> (i32, i32) {
    %c0_i32 = arith.constant 0 : i32
    %c0_i32_0 = arith.constant 0 : i32
    return %arg0, %c0_i32 : i32, i32
  }
}

module attributes {stable_mosaic.version = 11 : i64} {
  func.func @_matmul_stats_kernel(%arg0: i32, %arg1: i32, %arg2: i32, %arg3: memref<32x128xbf16, #tpu.memory_space<vmem>>, %arg4: memref<128x128xbf16, #tpu.memory_space<vmem>>, %arg5: memref<32x128xf32, #tpu.memory_space<vmem>>, %arg6: memref<1x2x128xf32, #tpu.memory_space<vmem>>, %arg7: memref<32x128xf32, #tpu.memory_space<vmem>>) attributes {dimension_semantics = [#tpu.dimension_semantics<parallel>, #tpu.dimension_semantics<parallel>, #tpu.dimension_semantics<arbitrary>], iteration_bounds = array<i64: 1, 1, 1>, scalar_prefetch = 0 : i64, scratch_operands = 1 : i64, tpu.core_type = #tpu.core_type<tc>, window_params = [{transform_indices = @transform_0, window_bounds = array<i64: 32, 128>}, {transform_indices = @transform_1, window_bounds = array<i64: 128, 128>}, {transform_indices = @transform_2, window_bounds = array<i64: 32, 128>}, {transform_indices = @transform_3, window_bounds = array<i64: 1, 2, 128>}]} {
    %c0_i32 = arith.constant 0 : i32
    %0 = arith.cmpi eq, %arg2, %c0_i32 : i32
    %1 = arith.extui %0 : i1 to i32
    %c0_i32_0 = arith.constant 0 : i32
    %2 = arith.cmpi ne, %1, %c0_i32_0 : i32
    scf.if %2 {
      %cst_10 = arith.constant 0.000000e+00 : f32
      %12 = vector.broadcast %cst_10 : f32 to vector<32x128xf32>
      %c0_11 = arith.constant 0 : index
      %c0_12 = arith.constant 0 : index
      %13 = vector.load %arg7[%c0_11, %c0_12] : memref<32x128xf32, #tpu.memory_space<vmem>>, vector<32x128xf32>
      tpu.vector_store %arg7[%c0_11, %c0_12], %12 {strides = array<i32>} : memref<32x128xf32, #tpu.memory_space<vmem>>, vector<32x128xf32>,
    } else {
    }
    %c0 = arith.constant 0 : index
    %c0_1 = arith.constant 0 : index
    %3 = vector.load %arg7[%c0, %c0_1] : memref<32x128xf32, #tpu.memory_space<vmem>>, vector<32x128xf32>
    %c0_2 = arith.constant 0 : index
    %c0_3 = arith.constant 0 : index
    %4 = vector.load %arg3[%c0_2, %c0_3] : memref<32x128xbf16, #tpu.memory_space<vmem>>, vector<32x128xbf16>
    %c0_4 = arith.constant 0 : index
    %c0_5 = arith.constant 0 : index
    %5 = vector.load %arg4[%c0_4, %c0_5] : memref<128x128xbf16, #tpu.memory_space<vmem>>, vector<128x128xbf16>
    %cst = arith.constant dense<0.000000e+00> : vector<32x128xf32>
    %6 = tpu.matmul %4, %5, %cst {dimension_numbers = #tpu.dot_dimension_numbers<[1], [0], [0], [1], [0, 0, 1, 1], [], []>} : vector<32x128xbf16>, vector<128x128xbf16>, vector<32x128xf32> -> vector<32x128xf32>
    %7 = arith.addf %3, %6 : vector<32x128xf32>
    %c0_6 = arith.constant 0 : index
    %c0_7 = arith.constant 0 : index
    %8 = vector.load %arg7[%c0_6, %c0_7] : memref<32x128xf32, #tpu.memory_space<vmem>>, vector<32x128xf32>
    tpu.vector_store %arg7[%c0_6, %c0_7], %7 {strides = array<i32>} : memref<32x128xf32, #tpu.memory_space<vmem>>, vector<32x128xf32>,
    %c0_i32_8 = arith.constant 0 : i32
    %9 = arith.cmpi eq, %arg2, %c0_i32_8 : i32
    %10 = arith.extui %9 : i1 to i32
    %c0_i32_9 = arith.constant 0 : i32
    %11 = arith.cmpi ne, %10, %c0_i32_9 : i32
    scf.if %11 {
      %c0_10 = arith.constant 0 : index
      %c0_11 = arith.constant 0 : index
      %12 = vector.load %arg7[%c0_10, %c0_11] : memref<32x128xf32, #tpu.memory_space<vmem>>, vector<32x128xf32>
      %c0_12 = arith.constant 0 : index
      %c0_13 = arith.constant 0 : index
      %13 = vector.load %arg5[%c0_12, %c0_13] : memref<32x128xf32, #tpu.memory_space<vmem>>, vector<32x128xf32>
      tpu.vector_store %arg5[%c0_12, %c0_13], %12 {strides = array<i32>} : memref<32x128xf32, #tpu.memory_space<vmem>>, vector<32x128xf32>,
      %cst_14 = arith.constant dense<0.000000e+00> : vector<128xf32>
      %14 = vector.multi_reduction <add>, %12, %cst_14 [0] : vector<32x128xf32> to vector<128xf32>
      %15 = vector.shape_cast %14 : vector<128xf32> to vector<1x128xf32>
      %16 = arith.mulf %12, %12 : vector<32x128xf32>
      %cst_15 = arith.constant dense<0.000000e+00> : vector<128xf32>
      %17 = vector.multi_reduction <add>, %16, %cst_15 [0] : vector<32x128xf32> to vector<128xf32>
      %18 = vector.shape_cast %17 : vector<128xf32> to vector<1x128xf32>
      %19 = tpu.concatenate %15, %18 in 0 : vector<1x128xf32>, vector<1x128xf32> -> vector<2x128xf32>
      %20 = vector.shape_cast %19 : vector<2x128xf32> to vector<1x2x128xf32>
      %c0_16 = arith.constant 0 : index
      %c0_17 = arith.constant 0 : index
      %c0_18 = arith.constant 0 : index
      %21 = vector.load %arg6[%c0_16, %c0_17, %c0_18] : memref<1x2x128xf32, #tpu.memory_space<vmem>>, vector<1x2x128xf32>
      tpu.vector_store %arg6[%c0_16, %c0_17, %c0_18], %20 {strides = array<i32>} : memref<1x2x128xf32, #tpu.memory_space<vmem>>, vector<1x2x128xf32>,
    } else {
    }
    return
  }
  func.func @transform_0(%arg0: i32, %arg1: i32, %arg2: i32) -> (i32, i32) {
    %c0_i32 = arith.constant 0 : i32
    return %arg0, %arg2 : i32, i32
  }
  func.func @transform_1(%arg0: i32, %arg1: i32, %arg2: i32) -> (i32, i32) {
    %c0_i32 = arith.constant 0 : i32
    return %arg2, %arg1 : i32, i32
  }
  func.func @transform_2(%arg0: i32, %arg1: i32, %arg2: i32) -> (i32, i32) {
    %c0_i32 = arith.constant 0 : i32
    return %arg0, %arg1 : i32, i32
  }
  func.func @transform_3(%arg0: i32, %arg1: i32, %arg2: i32) -> (i32, i32, i32) {
    %c0_i32 = arith.constant 0 : i32
    %c0_i32_0 = arith.constant 0 : i32
    return %arg0, %c0_i32, %arg1 : i32, i32, i32
  }
}

module attributes {stable_mosaic.version = 11 : i64} {
  func.func @kernel(%arg0: i32, %arg1: memref<32x128xf32, #tpu.memory_space<vmem>>, %arg2: memref<1x128xf32, #tpu.memory_space<vmem>>, %arg3: memref<1x128xf32, #tpu.memory_space<vmem>>, %arg4: memref<32x128xf32, #tpu.memory_space<vmem>>) attributes {dimension_semantics = [#tpu.dimension_semantics<parallel>], iteration_bounds = array<i64: 1>, scalar_prefetch = 0 : i64, scratch_operands = 0 : i64, tpu.core_type = #tpu.core_type<tc>, window_params = [{transform_indices = @transform_0, window_bounds = array<i64: 32, 128>}, {pipeline_mode = #tpu.pipeline_mode<synchronous>, transform_indices = @transform_1, window_bounds = array<i64: 1, 128>}, {pipeline_mode = #tpu.pipeline_mode<synchronous>, transform_indices = @transform_2, window_bounds = array<i64: 1, 128>}, {transform_indices = @transform_3, window_bounds = array<i64: 32, 128>}]} {
    %c0 = arith.constant 0 : index
    %c0_0 = arith.constant 0 : index
    %0 = vector.load %arg1[%c0, %c0_0] : memref<32x128xf32, #tpu.memory_space<vmem>>, vector<32x128xf32>
    %c0_1 = arith.constant 0 : index
    %c0_2 = arith.constant 0 : index
    %1 = vector.load %arg2[%c0_1, %c0_2] : memref<1x128xf32, #tpu.memory_space<vmem>>, vector<1x128xf32>
    %2 = vector.broadcast %1 : vector<1x128xf32> to vector<32x128xf32>
    %3 = arith.mulf %0, %2 : vector<32x128xf32>
    %c0_3 = arith.constant 0 : index
    %c0_4 = arith.constant 0 : index
    %4 = vector.load %arg3[%c0_3, %c0_4] : memref<1x128xf32, #tpu.memory_space<vmem>>, vector<1x128xf32>
    %5 = vector.broadcast %4 : vector<1x128xf32> to vector<32x128xf32>
    %6 = arith.addf %3, %5 : vector<32x128xf32>
    %c0_5 = arith.constant 0 : index
    %c0_6 = arith.constant 0 : index
    %7 = vector.load %arg4[%c0_5, %c0_6] : memref<32x128xf32, #tpu.memory_space<vmem>>, vector<32x128xf32>
    tpu.vector_store %arg4[%c0_5, %c0_6], %6 {strides = array<i32>} : memref<32x128xf32, #tpu.memory_space<vmem>>, vector<32x128xf32>,
    return
  }
  func.func @transform_0(%arg0: i32) -> (i32, i32) {
    %c0_i32 = arith.constant 0 : i32
    %c0_i32_0 = arith.constant 0 : i32
    return %arg0, %c0_i32 : i32, i32
  }
  func.func @transform_1(%arg0: i32) -> (i32, i32) {
    %c0_i32 = arith.constant 0 : i32
    %c0_i32_0 = arith.constant 0 : i32
    %c0_i32_1 = arith.constant 0 : i32
    return %c0_i32, %c0_i32_0 : i32, i32
  }
  func.func @transform_2(%arg0: i32) -> (i32, i32) {
    %c0_i32 = arith.constant 0 : i32
    %c0_i32_0 = arith.constant 0 : i32
    %c0_i32_1 = arith.constant 0 : i32
    return %c0_i32, %c0_i32_0 : i32, i32
  }
  func.func @transform_3(%arg0: i32) -> (i32, i32) {
    %c0_i32 = arith.constant 0 : i32
    %c0_i32_0 = arith.constant 0 : i32
    return %arg0, %c0_i32 : i32, i32
  }
}

module attributes {stable_mosaic.version = 11 : i64} {
  func.func @_matmul_stats_kernel(%arg0: i32, %arg1: i32, %arg2: i32, %arg3: memref<32x384xbf16, #tpu.memory_space<vmem>>, %arg4: memref<384x128xbf16, #tpu.memory_space<vmem>>, %arg5: memref<32x128xf32, #tpu.memory_space<vmem>>, %arg6: memref<1x2x128xf32, #tpu.memory_space<vmem>>, %arg7: memref<32x128xf32, #tpu.memory_space<vmem>>) attributes {dimension_semantics = [#tpu.dimension_semantics<parallel>, #tpu.dimension_semantics<parallel>, #tpu.dimension_semantics<arbitrary>], iteration_bounds = array<i64: 1, 1, 3>, scalar_prefetch = 0 : i64, scratch_operands = 1 : i64, tpu.core_type = #tpu.core_type<tc>, window_params = [{transform_indices = @transform_0, window_bounds = array<i64: 32, 384>}, {transform_indices = @transform_1, window_bounds = array<i64: 384, 128>}, {transform_indices = @transform_2, window_bounds = array<i64: 32, 128>}, {transform_indices = @transform_3, window_bounds = array<i64: 1, 2, 128>}]} {
    %c0_i32 = arith.constant 0 : i32
    %0 = arith.cmpi eq, %arg2, %c0_i32 : i32
    %1 = arith.extui %0 : i1 to i32
    %c0_i32_0 = arith.constant 0 : i32
    %2 = arith.cmpi ne, %1, %c0_i32_0 : i32
    scf.if %2 {
      %cst_9 = arith.constant 0.000000e+00 : f32
      %12 = vector.broadcast %cst_9 : f32 to vector<32x128xf32>
      %c0_10 = arith.constant 0 : index
      %c0_11 = arith.constant 0 : index
      %13 = vector.load %arg7[%c0_10, %c0_11] : memref<32x128xf32, #tpu.memory_space<vmem>>, vector<32x128xf32>
      tpu.vector_store %arg7[%c0_10, %c0_11], %12 {strides = array<i32>} : memref<32x128xf32, #tpu.memory_space<vmem>>, vector<32x128xf32>,
    } else {
    }
    %c0 = arith.constant 0 : index
    %c0_1 = arith.constant 0 : index
    %3 = vector.load %arg7[%c0, %c0_1] : memref<32x128xf32, #tpu.memory_space<vmem>>, vector<32x128xf32>
    %c0_2 = arith.constant 0 : index
    %c0_3 = arith.constant 0 : index
    %4 = vector.load %arg3[%c0_2, %c0_3] : memref<32x384xbf16, #tpu.memory_space<vmem>>, vector<32x384xbf16>
    %c0_4 = arith.constant 0 : index
    %c0_5 = arith.constant 0 : index
    %5 = vector.load %arg4[%c0_4, %c0_5] : memref<384x128xbf16, #tpu.memory_space<vmem>>, vector<384x128xbf16>
    %cst = arith.constant dense<0.000000e+00> : vector<32x128xf32>
    %6 = tpu.matmul %4, %5, %cst {dimension_numbers = #tpu.dot_dimension_numbers<[1], [0], [0], [1], [0, 0, 1, 1], [], []>} : vector<32x384xbf16>, vector<384x128xbf16>, vector<32x128xf32> -> vector<32x128xf32>
    %7 = arith.addf %3, %6 : vector<32x128xf32>
    %c0_6 = arith.constant 0 : index
    %c0_7 = arith.constant 0 : index
    %8 = vector.load %arg7[%c0_6, %c0_7] : memref<32x128xf32, #tpu.memory_space<vmem>>, vector<32x128xf32>
    tpu.vector_store %arg7[%c0_6, %c0_7], %7 {strides = array<i32>} : memref<32x128xf32, #tpu.memory_space<vmem>>, vector<32x128xf32>,
    %c2_i32 = arith.constant 2 : i32
    %9 = arith.cmpi eq, %arg2, %c2_i32 : i32
    %10 = arith.extui %9 : i1 to i32
    %c0_i32_8 = arith.constant 0 : i32
    %11 = arith.cmpi ne, %10, %c0_i32_8 : i32
    scf.if %11 {
      %c0_9 = arith.constant 0 : index
      %c0_10 = arith.constant 0 : index
      %12 = vector.load %arg7[%c0_9, %c0_10] : memref<32x128xf32, #tpu.memory_space<vmem>>, vector<32x128xf32>
      %c0_11 = arith.constant 0 : index
      %c0_12 = arith.constant 0 : index
      %13 = vector.load %arg5[%c0_11, %c0_12] : memref<32x128xf32, #tpu.memory_space<vmem>>, vector<32x128xf32>
      tpu.vector_store %arg5[%c0_11, %c0_12], %12 {strides = array<i32>} : memref<32x128xf32, #tpu.memory_space<vmem>>, vector<32x128xf32>,
      %cst_13 = arith.constant dense<0.000000e+00> : vector<128xf32>
      %14 = vector.multi_reduction <add>, %12, %cst_13 [0] : vector<32x128xf32> to vector<128xf32>
      %15 = vector.shape_cast %14 : vector<128xf32> to vector<1x128xf32>
      %16 = arith.mulf %12, %12 : vector<32x128xf32>
      %cst_14 = arith.constant dense<0.000000e+00> : vector<128xf32>
      %17 = vector.multi_reduction <add>, %16, %cst_14 [0] : vector<32x128xf32> to vector<128xf32>
      %18 = vector.shape_cast %17 : vector<128xf32> to vector<1x128xf32>
      %19 = tpu.concatenate %15, %18 in 0 : vector<1x128xf32>, vector<1x128xf32> -> vector<2x128xf32>
      %20 = vector.shape_cast %19 : vector<2x128xf32> to vector<1x2x128xf32>
      %c0_15 = arith.constant 0 : index
      %c0_16 = arith.constant 0 : index
      %c0_17 = arith.constant 0 : index
      %21 = vector.load %arg6[%c0_15, %c0_16, %c0_17] : memref<1x2x128xf32, #tpu.memory_space<vmem>>, vector<1x2x128xf32>
      tpu.vector_store %arg6[%c0_15, %c0_16, %c0_17], %20 {strides = array<i32>} : memref<1x2x128xf32, #tpu.memory_space<vmem>>, vector<1x2x128xf32>,
    } else {
    }
    return
  }
  func.func @transform_0(%arg0: i32, %arg1: i32, %arg2: i32) -> (i32, i32) {
    %c0_i32 = arith.constant 0 : i32
    return %arg0, %arg2 : i32, i32
  }
  func.func @transform_1(%arg0: i32, %arg1: i32, %arg2: i32) -> (i32, i32) {
    %c0_i32 = arith.constant 0 : i32
    return %arg2, %arg1 : i32, i32
  }
  func.func @transform_2(%arg0: i32, %arg1: i32, %arg2: i32) -> (i32, i32) {
    %c0_i32 = arith.constant 0 : i32
    return %arg0, %arg1 : i32, i32
  }
  func.func @transform_3(%arg0: i32, %arg1: i32, %arg2: i32) -> (i32, i32, i32) {
    %c0_i32 = arith.constant 0 : i32
    %c0_i32_0 = arith.constant 0 : i32
    return %arg0, %c0_i32, %arg1 : i32, i32, i32
  }
}

module attributes {stable_mosaic.version = 11 : i64} {
  func.func @kernel(%arg0: i32, %arg1: memref<32x128xf32, #tpu.memory_space<vmem>>, %arg2: memref<1x128xf32, #tpu.memory_space<vmem>>, %arg3: memref<1x128xf32, #tpu.memory_space<vmem>>, %arg4: memref<32x128xf32, #tpu.memory_space<vmem>>) attributes {dimension_semantics = [#tpu.dimension_semantics<parallel>], iteration_bounds = array<i64: 1>, scalar_prefetch = 0 : i64, scratch_operands = 0 : i64, tpu.core_type = #tpu.core_type<tc>, window_params = [{transform_indices = @transform_0, window_bounds = array<i64: 32, 128>}, {pipeline_mode = #tpu.pipeline_mode<synchronous>, transform_indices = @transform_1, window_bounds = array<i64: 1, 128>}, {pipeline_mode = #tpu.pipeline_mode<synchronous>, transform_indices = @transform_2, window_bounds = array<i64: 1, 128>}, {transform_indices = @transform_3, window_bounds = array<i64: 32, 128>}]} {
    %c0 = arith.constant 0 : index
    %c0_0 = arith.constant 0 : index
    %0 = vector.load %arg1[%c0, %c0_0] : memref<32x128xf32, #tpu.memory_space<vmem>>, vector<32x128xf32>
    %c0_1 = arith.constant 0 : index
    %c0_2 = arith.constant 0 : index
    %1 = vector.load %arg2[%c0_1, %c0_2] : memref<1x128xf32, #tpu.memory_space<vmem>>, vector<1x128xf32>
    %2 = vector.broadcast %1 : vector<1x128xf32> to vector<32x128xf32>
    %3 = arith.mulf %0, %2 : vector<32x128xf32>
    %c0_3 = arith.constant 0 : index
    %c0_4 = arith.constant 0 : index
    %4 = vector.load %arg3[%c0_3, %c0_4] : memref<1x128xf32, #tpu.memory_space<vmem>>, vector<1x128xf32>
    %5 = vector.broadcast %4 : vector<1x128xf32> to vector<32x128xf32>
    %6 = arith.addf %3, %5 : vector<32x128xf32>
    %cst = arith.constant 0.000000e+00 : f32
    %7 = vector.broadcast %cst : f32 to vector<32x128xf32>
    %8 = arith.maximumf %6, %7 : vector<32x128xf32>
    %c0_5 = arith.constant 0 : index
    %c0_6 = arith.constant 0 : index
    %9 = vector.load %arg4[%c0_5, %c0_6] : memref<32x128xf32, #tpu.memory_space<vmem>>, vector<32x128xf32>
    tpu.vector_store %arg4[%c0_5, %c0_6], %8 {strides = array<i32>} : memref<32x128xf32, #tpu.memory_space<vmem>>, vector<32x128xf32>,
    return
  }
  func.func @transform_0(%arg0: i32) -> (i32, i32) {
    %c0_i32 = arith.constant 0 : i32
    %c0_i32_0 = arith.constant 0 : i32
    return %arg0, %c0_i32 : i32, i32
  }
  func.func @transform_1(%arg0: i32) -> (i32, i32) {
    %c0_i32 = arith.constant 0 : i32
    %c0_i32_0 = arith.constant 0 : i32
    %c0_i32_1 = arith.constant 0 : i32
    return %c0_i32, %c0_i32_0 : i32, i32
  }
  func.func @transform_2(%arg0: i32) -> (i32, i32) {
    %c0_i32 = arith.constant 0 : i32
    %c0_i32_0 = arith.constant 0 : i32
    %c0_i32_1 = arith.constant 0 : i32
    return %c0_i32, %c0_i32_0 : i32, i32
  }
  func.func @transform_3(%arg0: i32) -> (i32, i32) {
    %c0_i32 = arith.constant 0 : i32
    %c0_i32_0 = arith.constant 0 : i32
    return %arg0, %c0_i32 : i32, i32
  }
}

module attributes {stable_mosaic.version = 11 : i64} {
  func.func @kernel(%arg0: i32, %arg1: memref<32x128xf32, #tpu.memory_space<vmem>>, %arg2: memref<1x128xf32, #tpu.memory_space<vmem>>, %arg3: memref<1x128xf32, #tpu.memory_space<vmem>>, %arg4: memref<32x128xf32, #tpu.memory_space<vmem>>, %arg5: memref<32x128xf32, #tpu.memory_space<vmem>>) attributes {dimension_semantics = [#tpu.dimension_semantics<parallel>], iteration_bounds = array<i64: 1>, scalar_prefetch = 0 : i64, scratch_operands = 0 : i64, tpu.core_type = #tpu.core_type<tc>, window_params = [{transform_indices = @transform_0, window_bounds = array<i64: 32, 128>}, {pipeline_mode = #tpu.pipeline_mode<synchronous>, transform_indices = @transform_1, window_bounds = array<i64: 1, 128>}, {pipeline_mode = #tpu.pipeline_mode<synchronous>, transform_indices = @transform_2, window_bounds = array<i64: 1, 128>}, {transform_indices = @transform_3, window_bounds = array<i64: 32, 128>}, {transform_indices = @transform_4, window_bounds = array<i64: 32, 128>}]} {
    %c0 = arith.constant 0 : index
    %c0_0 = arith.constant 0 : index
    %0 = vector.load %arg1[%c0, %c0_0] : memref<32x128xf32, #tpu.memory_space<vmem>>, vector<32x128xf32>
    %c0_1 = arith.constant 0 : index
    %c0_2 = arith.constant 0 : index
    %1 = vector.load %arg2[%c0_1, %c0_2] : memref<1x128xf32, #tpu.memory_space<vmem>>, vector<1x128xf32>
    %2 = vector.broadcast %1 : vector<1x128xf32> to vector<32x128xf32>
    %3 = arith.mulf %0, %2 : vector<32x128xf32>
    %c0_3 = arith.constant 0 : index
    %c0_4 = arith.constant 0 : index
    %4 = vector.load %arg3[%c0_3, %c0_4] : memref<1x128xf32, #tpu.memory_space<vmem>>, vector<1x128xf32>
    %5 = vector.broadcast %4 : vector<1x128xf32> to vector<32x128xf32>
    %6 = arith.addf %3, %5 : vector<32x128xf32>
    %cst = arith.constant 0.000000e+00 : f32
    %7 = vector.broadcast %cst : f32 to vector<32x128xf32>
    %8 = arith.maximumf %6, %7 : vector<32x128xf32>
    %c0_5 = arith.constant 0 : index
    %c0_6 = arith.constant 0 : index
    %9 = vector.load %arg4[%c0_5, %c0_6] : memref<32x128xf32, #tpu.memory_space<vmem>>, vector<32x128xf32>
    %10 = arith.addf %8, %9 : vector<32x128xf32>
    %c0_7 = arith.constant 0 : index
    %c0_8 = arith.constant 0 : index
    %11 = vector.load %arg5[%c0_7, %c0_8] : memref<32x128xf32, #tpu.memory_space<vmem>>, vector<32x128xf32>
    tpu.vector_store %arg5[%c0_7, %c0_8], %10 {strides = array<i32>} : memref<32x128xf32, #tpu.memory_space<vmem>>, vector<32x128xf32>,
    return
  }
  func.func @transform_0(%arg0: i32) -> (i32, i32) {
    %c0_i32 = arith.constant 0 : i32
    %c0_i32_0 = arith.constant 0 : i32
    return %arg0, %c0_i32 : i32, i32
  }
  func.func @transform_1(%arg0: i32) -> (i32, i32) {
    %c0_i32 = arith.constant 0 : i32
    %c0_i32_0 = arith.constant 0 : i32
    %c0_i32_1 = arith.constant 0 : i32
    return %c0_i32, %c0_i32_0 : i32, i32
  }
  func.func @transform_2(%arg0: i32) -> (i32, i32) {
    %c0_i32 = arith.constant 0 : i32
    %c0_i32_0 = arith.constant 0 : i32
    %c0_i32_1 = arith.constant 0 : i32
    return %c0_i32, %c0_i32_0 : i32, i32
  }
  func.func @transform_3(%arg0: i32) -> (i32, i32) {
    %c0_i32 = arith.constant 0 : i32
    %c0_i32_0 = arith.constant 0 : i32
    return %arg0, %c0_i32 : i32, i32
  }
  func.func @transform_4(%arg0: i32) -> (i32, i32) {
    %c0_i32 = arith.constant 0 : i32
    %c0_i32_0 = arith.constant 0 : i32
    return %arg0, %c0_i32 : i32, i32
  }
}

module attributes {stable_mosaic.version = 11 : i64} {
  func.func @_matmul_stats_kernel(%arg0: i32, %arg1: i32, %arg2: i32, %arg3: memref<16x128xbf16, #tpu.memory_space<vmem>>, %arg4: memref<128x128xbf16, #tpu.memory_space<vmem>>, %arg5: memref<16x128xf32, #tpu.memory_space<vmem>>, %arg6: memref<1x2x128xf32, #tpu.memory_space<vmem>>, %arg7: memref<16x128xf32, #tpu.memory_space<vmem>>) attributes {dimension_semantics = [#tpu.dimension_semantics<parallel>, #tpu.dimension_semantics<parallel>, #tpu.dimension_semantics<arbitrary>], iteration_bounds = array<i64: 1, 1, 1>, scalar_prefetch = 0 : i64, scratch_operands = 1 : i64, tpu.core_type = #tpu.core_type<tc>, window_params = [{transform_indices = @transform_0, window_bounds = array<i64: 16, 128>}, {transform_indices = @transform_1, window_bounds = array<i64: 128, 128>}, {transform_indices = @transform_2, window_bounds = array<i64: 16, 128>}, {transform_indices = @transform_3, window_bounds = array<i64: 1, 2, 128>}]} {
    %c0_i32 = arith.constant 0 : i32
    %0 = arith.cmpi eq, %arg2, %c0_i32 : i32
    %1 = arith.extui %0 : i1 to i32
    %c0_i32_0 = arith.constant 0 : i32
    %2 = arith.cmpi ne, %1, %c0_i32_0 : i32
    scf.if %2 {
      %cst_10 = arith.constant 0.000000e+00 : f32
      %12 = vector.broadcast %cst_10 : f32 to vector<16x128xf32>
      %c0_11 = arith.constant 0 : index
      %c0_12 = arith.constant 0 : index
      %13 = vector.load %arg7[%c0_11, %c0_12] : memref<16x128xf32, #tpu.memory_space<vmem>>, vector<16x128xf32>
      tpu.vector_store %arg7[%c0_11, %c0_12], %12 {strides = array<i32>} : memref<16x128xf32, #tpu.memory_space<vmem>>, vector<16x128xf32>,
    } else {
    }
    %c0 = arith.constant 0 : index
    %c0_1 = arith.constant 0 : index
    %3 = vector.load %arg7[%c0, %c0_1] : memref<16x128xf32, #tpu.memory_space<vmem>>, vector<16x128xf32>
    %c0_2 = arith.constant 0 : index
    %c0_3 = arith.constant 0 : index
    %4 = vector.load %arg3[%c0_2, %c0_3] : memref<16x128xbf16, #tpu.memory_space<vmem>>, vector<16x128xbf16>
    %c0_4 = arith.constant 0 : index
    %c0_5 = arith.constant 0 : index
    %5 = vector.load %arg4[%c0_4, %c0_5] : memref<128x128xbf16, #tpu.memory_space<vmem>>, vector<128x128xbf16>
    %cst = arith.constant dense<0.000000e+00> : vector<16x128xf32>
    %6 = tpu.matmul %4, %5, %cst {dimension_numbers = #tpu.dot_dimension_numbers<[1], [0], [0], [1], [0, 0, 1, 1], [], []>} : vector<16x128xbf16>, vector<128x128xbf16>, vector<16x128xf32> -> vector<16x128xf32>
    %7 = arith.addf %3, %6 : vector<16x128xf32>
    %c0_6 = arith.constant 0 : index
    %c0_7 = arith.constant 0 : index
    %8 = vector.load %arg7[%c0_6, %c0_7] : memref<16x128xf32, #tpu.memory_space<vmem>>, vector<16x128xf32>
    tpu.vector_store %arg7[%c0_6, %c0_7], %7 {strides = array<i32>} : memref<16x128xf32, #tpu.memory_space<vmem>>, vector<16x128xf32>,
    %c0_i32_8 = arith.constant 0 : i32
    %9 = arith.cmpi eq, %arg2, %c0_i32_8 : i32
    %10 = arith.extui %9 : i1 to i32
    %c0_i32_9 = arith.constant 0 : i32
    %11 = arith.cmpi ne, %10, %c0_i32_9 : i32
    scf.if %11 {
      %c0_10 = arith.constant 0 : index
      %c0_11 = arith.constant 0 : index
      %12 = vector.load %arg7[%c0_10, %c0_11] : memref<16x128xf32, #tpu.memory_space<vmem>>, vector<16x128xf32>
      %c0_12 = arith.constant 0 : index
      %c0_13 = arith.constant 0 : index
      %13 = vector.load %arg5[%c0_12, %c0_13] : memref<16x128xf32, #tpu.memory_space<vmem>>, vector<16x128xf32>
      tpu.vector_store %arg5[%c0_12, %c0_13], %12 {strides = array<i32>} : memref<16x128xf32, #tpu.memory_space<vmem>>, vector<16x128xf32>,
      %cst_14 = arith.constant dense<0.000000e+00> : vector<128xf32>
      %14 = vector.multi_reduction <add>, %12, %cst_14 [0] : vector<16x128xf32> to vector<128xf32>
      %15 = vector.shape_cast %14 : vector<128xf32> to vector<1x128xf32>
      %16 = arith.mulf %12, %12 : vector<16x128xf32>
      %cst_15 = arith.constant dense<0.000000e+00> : vector<128xf32>
      %17 = vector.multi_reduction <add>, %16, %cst_15 [0] : vector<16x128xf32> to vector<128xf32>
      %18 = vector.shape_cast %17 : vector<128xf32> to vector<1x128xf32>
      %19 = tpu.concatenate %15, %18 in 0 : vector<1x128xf32>, vector<1x128xf32> -> vector<2x128xf32>
      %20 = vector.shape_cast %19 : vector<2x128xf32> to vector<1x2x128xf32>
      %c0_16 = arith.constant 0 : index
      %c0_17 = arith.constant 0 : index
      %c0_18 = arith.constant 0 : index
      %21 = vector.load %arg6[%c0_16, %c0_17, %c0_18] : memref<1x2x128xf32, #tpu.memory_space<vmem>>, vector<1x2x128xf32>
      tpu.vector_store %arg6[%c0_16, %c0_17, %c0_18], %20 {strides = array<i32>} : memref<1x2x128xf32, #tpu.memory_space<vmem>>, vector<1x2x128xf32>,
    } else {
    }
    return
  }
  func.func @transform_0(%arg0: i32, %arg1: i32, %arg2: i32) -> (i32, i32) {
    %c0_i32 = arith.constant 0 : i32
    return %arg0, %arg2 : i32, i32
  }
  func.func @transform_1(%arg0: i32, %arg1: i32, %arg2: i32) -> (i32, i32) {
    %c0_i32 = arith.constant 0 : i32
    return %arg2, %arg1 : i32, i32
  }
  func.func @transform_2(%arg0: i32, %arg1: i32, %arg2: i32) -> (i32, i32) {
    %c0_i32 = arith.constant 0 : i32
    return %arg0, %arg1 : i32, i32
  }
  func.func @transform_3(%arg0: i32, %arg1: i32, %arg2: i32) -> (i32, i32, i32) {
    %c0_i32 = arith.constant 0 : i32
    %c0_i32_0 = arith.constant 0 : i32
    return %arg0, %c0_i32, %arg1 : i32, i32, i32
  }
}

module attributes {stable_mosaic.version = 11 : i64} {
  func.func @kernel(%arg0: i32, %arg1: memref<16x128xf32, #tpu.memory_space<vmem>>, %arg2: memref<1x128xf32, #tpu.memory_space<vmem>>, %arg3: memref<1x128xf32, #tpu.memory_space<vmem>>, %arg4: memref<16x128xf32, #tpu.memory_space<vmem>>) attributes {dimension_semantics = [#tpu.dimension_semantics<parallel>], iteration_bounds = array<i64: 1>, scalar_prefetch = 0 : i64, scratch_operands = 0 : i64, tpu.core_type = #tpu.core_type<tc>, window_params = [{transform_indices = @transform_0, window_bounds = array<i64: 16, 128>}, {pipeline_mode = #tpu.pipeline_mode<synchronous>, transform_indices = @transform_1, window_bounds = array<i64: 1, 128>}, {pipeline_mode = #tpu.pipeline_mode<synchronous>, transform_indices = @transform_2, window_bounds = array<i64: 1, 128>}, {transform_indices = @transform_3, window_bounds = array<i64: 16, 128>}]} {
    %c0 = arith.constant 0 : index
    %c0_0 = arith.constant 0 : index
    %0 = vector.load %arg1[%c0, %c0_0] : memref<16x128xf32, #tpu.memory_space<vmem>>, vector<16x128xf32>
    %c0_1 = arith.constant 0 : index
    %c0_2 = arith.constant 0 : index
    %1 = vector.load %arg2[%c0_1, %c0_2] : memref<1x128xf32, #tpu.memory_space<vmem>>, vector<1x128xf32>
    %2 = vector.broadcast %1 : vector<1x128xf32> to vector<16x128xf32>
    %3 = arith.mulf %0, %2 : vector<16x128xf32>
    %c0_3 = arith.constant 0 : index
    %c0_4 = arith.constant 0 : index
    %4 = vector.load %arg3[%c0_3, %c0_4] : memref<1x128xf32, #tpu.memory_space<vmem>>, vector<1x128xf32>
    %5 = vector.broadcast %4 : vector<1x128xf32> to vector<16x128xf32>
    %6 = arith.addf %3, %5 : vector<16x128xf32>
    %c0_5 = arith.constant 0 : index
    %c0_6 = arith.constant 0 : index
    %7 = vector.load %arg4[%c0_5, %c0_6] : memref<16x128xf32, #tpu.memory_space<vmem>>, vector<16x128xf32>
    tpu.vector_store %arg4[%c0_5, %c0_6], %6 {strides = array<i32>} : memref<16x128xf32, #tpu.memory_space<vmem>>, vector<16x128xf32>,
    return
  }
  func.func @transform_0(%arg0: i32) -> (i32, i32) {
    %c0_i32 = arith.constant 0 : i32
    %c0_i32_0 = arith.constant 0 : i32
    return %arg0, %c0_i32 : i32, i32
  }
  func.func @transform_1(%arg0: i32) -> (i32, i32) {
    %c0_i32 = arith.constant 0 : i32
    %c0_i32_0 = arith.constant 0 : i32
    %c0_i32_1 = arith.constant 0 : i32
    return %c0_i32, %c0_i32_0 : i32, i32
  }
  func.func @transform_2(%arg0: i32) -> (i32, i32) {
    %c0_i32 = arith.constant 0 : i32
    %c0_i32_0 = arith.constant 0 : i32
    %c0_i32_1 = arith.constant 0 : i32
    return %c0_i32, %c0_i32_0 : i32, i32
  }
  func.func @transform_3(%arg0: i32) -> (i32, i32) {
    %c0_i32 = arith.constant 0 : i32
    %c0_i32_0 = arith.constant 0 : i32
    return %arg0, %c0_i32 : i32, i32
  }
}

module attributes {stable_mosaic.version = 11 : i64} {
  func.func @kernel(%arg0: i32, %arg1: memref<16x128xf32, #tpu.memory_space<vmem>>, %arg2: memref<1x128xf32, #tpu.memory_space<vmem>>, %arg3: memref<1x128xf32, #tpu.memory_space<vmem>>, %arg4: memref<16x128xf32, #tpu.memory_space<vmem>>) attributes {dimension_semantics = [#tpu.dimension_semantics<parallel>], iteration_bounds = array<i64: 1>, scalar_prefetch = 0 : i64, scratch_operands = 0 : i64, tpu.core_type = #tpu.core_type<tc>, window_params = [{transform_indices = @transform_0, window_bounds = array<i64: 16, 128>}, {pipeline_mode = #tpu.pipeline_mode<synchronous>, transform_indices = @transform_1, window_bounds = array<i64: 1, 128>}, {pipeline_mode = #tpu.pipeline_mode<synchronous>, transform_indices = @transform_2, window_bounds = array<i64: 1, 128>}, {transform_indices = @transform_3, window_bounds = array<i64: 16, 128>}]} {
    %c0 = arith.constant 0 : index
    %c0_0 = arith.constant 0 : index
    %0 = vector.load %arg1[%c0, %c0_0] : memref<16x128xf32, #tpu.memory_space<vmem>>, vector<16x128xf32>
    %c0_1 = arith.constant 0 : index
    %c0_2 = arith.constant 0 : index
    %1 = vector.load %arg2[%c0_1, %c0_2] : memref<1x128xf32, #tpu.memory_space<vmem>>, vector<1x128xf32>
    %2 = vector.broadcast %1 : vector<1x128xf32> to vector<16x128xf32>
    %3 = arith.mulf %0, %2 : vector<16x128xf32>
    %c0_3 = arith.constant 0 : index
    %c0_4 = arith.constant 0 : index
    %4 = vector.load %arg3[%c0_3, %c0_4] : memref<1x128xf32, #tpu.memory_space<vmem>>, vector<1x128xf32>
    %5 = vector.broadcast %4 : vector<1x128xf32> to vector<16x128xf32>
    %6 = arith.addf %3, %5 : vector<16x128xf32>
    %cst = arith.constant 0.000000e+00 : f32
    %7 = vector.broadcast %cst : f32 to vector<16x128xf32>
    %8 = arith.maximumf %6, %7 : vector<16x128xf32>
    %c0_5 = arith.constant 0 : index
    %c0_6 = arith.constant 0 : index
    %9 = vector.load %arg4[%c0_5, %c0_6] : memref<16x128xf32, #tpu.memory_space<vmem>>, vector<16x128xf32>
    tpu.vector_store %arg4[%c0_5, %c0_6], %8 {strides = array<i32>} : memref<16x128xf32, #tpu.memory_space<vmem>>, vector<16x128xf32>,
    return
  }
  func.func @transform_0(%arg0: i32) -> (i32, i32) {
    %c0_i32 = arith.constant 0 : i32
    %c0_i32_0 = arith.constant 0 : i32
    return %arg0, %c0_i32 : i32, i32
  }
  func.func @transform_1(%arg0: i32) -> (i32, i32) {
    %c0_i32 = arith.constant 0 : i32
    %c0_i32_0 = arith.constant 0 : i32
    %c0_i32_1 = arith.constant 0 : i32
    return %c0_i32, %c0_i32_0 : i32, i32
  }
  func.func @transform_2(%arg0: i32) -> (i32, i32) {
    %c0_i32 = arith.constant 0 : i32
    %c0_i32_0 = arith.constant 0 : i32
    %c0_i32_1 = arith.constant 0 : i32
    return %c0_i32, %c0_i32_0 : i32, i32
  }
  func.func @transform_3(%arg0: i32) -> (i32, i32) {
    %c0_i32 = arith.constant 0 : i32
    %c0_i32_0 = arith.constant 0 : i32
    return %arg0, %c0_i32 : i32, i32
  }
}

module attributes {stable_mosaic.version = 11 : i64} {
  func.func @_matmul_stats_kernel(%arg0: i32, %arg1: i32, %arg2: i32, %arg3: memref<16x384xbf16, #tpu.memory_space<vmem>>, %arg4: memref<384x128xbf16, #tpu.memory_space<vmem>>, %arg5: memref<16x128xf32, #tpu.memory_space<vmem>>, %arg6: memref<1x2x128xf32, #tpu.memory_space<vmem>>, %arg7: memref<16x128xf32, #tpu.memory_space<vmem>>) attributes {dimension_semantics = [#tpu.dimension_semantics<parallel>, #tpu.dimension_semantics<parallel>, #tpu.dimension_semantics<arbitrary>], iteration_bounds = array<i64: 1, 1, 3>, scalar_prefetch = 0 : i64, scratch_operands = 1 : i64, tpu.core_type = #tpu.core_type<tc>, window_params = [{transform_indices = @transform_0, window_bounds = array<i64: 16, 384>}, {transform_indices = @transform_1, window_bounds = array<i64: 384, 128>}, {transform_indices = @transform_2, window_bounds = array<i64: 16, 128>}, {transform_indices = @transform_3, window_bounds = array<i64: 1, 2, 128>}]} {
    %c0_i32 = arith.constant 0 : i32
    %0 = arith.cmpi eq, %arg2, %c0_i32 : i32
    %1 = arith.extui %0 : i1 to i32
    %c0_i32_0 = arith.constant 0 : i32
    %2 = arith.cmpi ne, %1, %c0_i32_0 : i32
    scf.if %2 {
      %cst_9 = arith.constant 0.000000e+00 : f32
      %12 = vector.broadcast %cst_9 : f32 to vector<16x128xf32>
      %c0_10 = arith.constant 0 : index
      %c0_11 = arith.constant 0 : index
      %13 = vector.load %arg7[%c0_10, %c0_11] : memref<16x128xf32, #tpu.memory_space<vmem>>, vector<16x128xf32>
      tpu.vector_store %arg7[%c0_10, %c0_11], %12 {strides = array<i32>} : memref<16x128xf32, #tpu.memory_space<vmem>>, vector<16x128xf32>,
    } else {
    }
    %c0 = arith.constant 0 : index
    %c0_1 = arith.constant 0 : index
    %3 = vector.load %arg7[%c0, %c0_1] : memref<16x128xf32, #tpu.memory_space<vmem>>, vector<16x128xf32>
    %c0_2 = arith.constant 0 : index
    %c0_3 = arith.constant 0 : index
    %4 = vector.load %arg3[%c0_2, %c0_3] : memref<16x384xbf16, #tpu.memory_space<vmem>>, vector<16x384xbf16>
    %c0_4 = arith.constant 0 : index
    %c0_5 = arith.constant 0 : index
    %5 = vector.load %arg4[%c0_4, %c0_5] : memref<384x128xbf16, #tpu.memory_space<vmem>>, vector<384x128xbf16>
    %cst = arith.constant dense<0.000000e+00> : vector<16x128xf32>
    %6 = tpu.matmul %4, %5, %cst {dimension_numbers = #tpu.dot_dimension_numbers<[1], [0], [0], [1], [0, 0, 1, 1], [], []>} : vector<16x384xbf16>, vector<384x128xbf16>, vector<16x128xf32> -> vector<16x128xf32>
    %7 = arith.addf %3, %6 : vector<16x128xf32>
    %c0_6 = arith.constant 0 : index
    %c0_7 = arith.constant 0 : index
    %8 = vector.load %arg7[%c0_6, %c0_7] : memref<16x128xf32, #tpu.memory_space<vmem>>, vector<16x128xf32>
    tpu.vector_store %arg7[%c0_6, %c0_7], %7 {strides = array<i32>} : memref<16x128xf32, #tpu.memory_space<vmem>>, vector<16x128xf32>,
    %c2_i32 = arith.constant 2 : i32
    %9 = arith.cmpi eq, %arg2, %c2_i32 : i32
    %10 = arith.extui %9 : i1 to i32
    %c0_i32_8 = arith.constant 0 : i32
    %11 = arith.cmpi ne, %10, %c0_i32_8 : i32
    scf.if %11 {
      %c0_9 = arith.constant 0 : index
      %c0_10 = arith.constant 0 : index
      %12 = vector.load %arg7[%c0_9, %c0_10] : memref<16x128xf32, #tpu.memory_space<vmem>>, vector<16x128xf32>
      %c0_11 = arith.constant 0 : index
      %c0_12 = arith.constant 0 : index
      %13 = vector.load %arg5[%c0_11, %c0_12] : memref<16x128xf32, #tpu.memory_space<vmem>>, vector<16x128xf32>
      tpu.vector_store %arg5[%c0_11, %c0_12], %12 {strides = array<i32>} : memref<16x128xf32, #tpu.memory_space<vmem>>, vector<16x128xf32>,
      %cst_13 = arith.constant dense<0.000000e+00> : vector<128xf32>
      %14 = vector.multi_reduction <add>, %12, %cst_13 [0] : vector<16x128xf32> to vector<128xf32>
      %15 = vector.shape_cast %14 : vector<128xf32> to vector<1x128xf32>
      %16 = arith.mulf %12, %12 : vector<16x128xf32>
      %cst_14 = arith.constant dense<0.000000e+00> : vector<128xf32>
      %17 = vector.multi_reduction <add>, %16, %cst_14 [0] : vector<16x128xf32> to vector<128xf32>
      %18 = vector.shape_cast %17 : vector<128xf32> to vector<1x128xf32>
      %19 = tpu.concatenate %15, %18 in 0 : vector<1x128xf32>, vector<1x128xf32> -> vector<2x128xf32>
      %20 = vector.shape_cast %19 : vector<2x128xf32> to vector<1x2x128xf32>
      %c0_15 = arith.constant 0 : index
      %c0_16 = arith.constant 0 : index
      %c0_17 = arith.constant 0 : index
      %21 = vector.load %arg6[%c0_15, %c0_16, %c0_17] : memref<1x2x128xf32, #tpu.memory_space<vmem>>, vector<1x2x128xf32>
      tpu.vector_store %arg6[%c0_15, %c0_16, %c0_17], %20 {strides = array<i32>} : memref<1x2x128xf32, #tpu.memory_space<vmem>>, vector<1x2x128xf32>,
    } else {
    }
    return
  }
  func.func @transform_0(%arg0: i32, %arg1: i32, %arg2: i32) -> (i32, i32) {
    %c0_i32 = arith.constant 0 : i32
    return %arg0, %arg2 : i32, i32
  }
  func.func @transform_1(%arg0: i32, %arg1: i32, %arg2: i32) -> (i32, i32) {
    %c0_i32 = arith.constant 0 : i32
    return %arg2, %arg1 : i32, i32
  }
  func.func @transform_2(%arg0: i32, %arg1: i32, %arg2: i32) -> (i32, i32) {
    %c0_i32 = arith.constant 0 : i32
    return %arg0, %arg1 : i32, i32
  }
  func.func @transform_3(%arg0: i32, %arg1: i32, %arg2: i32) -> (i32, i32, i32) {
    %c0_i32 = arith.constant 0 : i32
    %c0_i32_0 = arith.constant 0 : i32
    return %arg0, %c0_i32, %arg1 : i32, i32, i32
  }
}

module attributes {stable_mosaic.version = 11 : i64} {
  func.func @kernel(%arg0: i32, %arg1: memref<16x128xf32, #tpu.memory_space<vmem>>, %arg2: memref<1x128xf32, #tpu.memory_space<vmem>>, %arg3: memref<1x128xf32, #tpu.memory_space<vmem>>, %arg4: memref<16x128xf32, #tpu.memory_space<vmem>>, %arg5: memref<16x128xf32, #tpu.memory_space<vmem>>) attributes {dimension_semantics = [#tpu.dimension_semantics<parallel>], iteration_bounds = array<i64: 1>, scalar_prefetch = 0 : i64, scratch_operands = 0 : i64, tpu.core_type = #tpu.core_type<tc>, window_params = [{transform_indices = @transform_0, window_bounds = array<i64: 16, 128>}, {pipeline_mode = #tpu.pipeline_mode<synchronous>, transform_indices = @transform_1, window_bounds = array<i64: 1, 128>}, {pipeline_mode = #tpu.pipeline_mode<synchronous>, transform_indices = @transform_2, window_bounds = array<i64: 1, 128>}, {transform_indices = @transform_3, window_bounds = array<i64: 16, 128>}, {transform_indices = @transform_4, window_bounds = array<i64: 16, 128>}]} {
    %c0 = arith.constant 0 : index
    %c0_0 = arith.constant 0 : index
    %0 = vector.load %arg1[%c0, %c0_0] : memref<16x128xf32, #tpu.memory_space<vmem>>, vector<16x128xf32>
    %c0_1 = arith.constant 0 : index
    %c0_2 = arith.constant 0 : index
    %1 = vector.load %arg2[%c0_1, %c0_2] : memref<1x128xf32, #tpu.memory_space<vmem>>, vector<1x128xf32>
    %2 = vector.broadcast %1 : vector<1x128xf32> to vector<16x128xf32>
    %3 = arith.mulf %0, %2 : vector<16x128xf32>
    %c0_3 = arith.constant 0 : index
    %c0_4 = arith.constant 0 : index
    %4 = vector.load %arg3[%c0_3, %c0_4] : memref<1x128xf32, #tpu.memory_space<vmem>>, vector<1x128xf32>
    %5 = vector.broadcast %4 : vector<1x128xf32> to vector<16x128xf32>
    %6 = arith.addf %3, %5 : vector<16x128xf32>
    %cst = arith.constant 0.000000e+00 : f32
    %7 = vector.broadcast %cst : f32 to vector<16x128xf32>
    %8 = arith.maximumf %6, %7 : vector<16x128xf32>
    %c0_5 = arith.constant 0 : index
    %c0_6 = arith.constant 0 : index
    %9 = vector.load %arg4[%c0_5, %c0_6] : memref<16x128xf32, #tpu.memory_space<vmem>>, vector<16x128xf32>
    %10 = arith.addf %8, %9 : vector<16x128xf32>
    %c0_7 = arith.constant 0 : index
    %c0_8 = arith.constant 0 : index
    %11 = vector.load %arg5[%c0_7, %c0_8] : memref<16x128xf32, #tpu.memory_space<vmem>>, vector<16x128xf32>
    tpu.vector_store %arg5[%c0_7, %c0_8], %10 {strides = array<i32>} : memref<16x128xf32, #tpu.memory_space<vmem>>, vector<16x128xf32>,
    return
  }
  func.func @transform_0(%arg0: i32) -> (i32, i32) {
    %c0_i32 = arith.constant 0 : i32
    %c0_i32_0 = arith.constant 0 : i32
    return %arg0, %c0_i32 : i32, i32
  }
  func.func @transform_1(%arg0: i32) -> (i32, i32) {
    %c0_i32 = arith.constant 0 : i32
    %c0_i32_0 = arith.constant 0 : i32
    %c0_i32_1 = arith.constant 0 : i32
    return %c0_i32, %c0_i32_0 : i32, i32
  }
  func.func @transform_2(%arg0: i32) -> (i32, i32) {
    %c0_i32 = arith.constant 0 : i32
    %c0_i32_0 = arith.constant 0 : i32
    %c0_i32_1 = arith.constant 0 : i32
    return %c0_i32, %c0_i32_0 : i32, i32
  }
  func.func @transform_3(%arg0: i32) -> (i32, i32) {
    %c0_i32 = arith.constant 0 : i32
    %c0_i32_0 = arith.constant 0 : i32
    return %arg0, %c0_i32 : i32, i32
  }
  func.func @transform_4(%arg0: i32) -> (i32, i32) {
    %c0_i32 = arith.constant 0 : i32
    %c0_i32_0 = arith.constant 0 : i32
    return %arg0, %c0_i32 : i32, i32
  }
}

module attributes {stable_mosaic.version = 11 : i64} {
  func.func @_head_kernel(%arg0: i32, %arg1: memref<2x1x128xf32, #tpu.memory_space<vmem>>, %arg2: memref<1x1x128xf32, #tpu.memory_space<vmem>>, %arg3: memref<1x1xf32, #tpu.memory_space<vmem>>, %arg4: memref<2x1xf32, #tpu.memory_space<vmem>>) attributes {dimension_semantics = [#tpu.dimension_semantics<arbitrary>], iteration_bounds = array<i64: 1>, scalar_prefetch = 0 : i64, scratch_operands = 0 : i64, tpu.core_type = #tpu.core_type<tc>, window_params = [{pipeline_mode = #tpu.pipeline_mode<synchronous>, transform_indices = @transform_0, window_bounds = array<i64: 2, 1, 128>}, {pipeline_mode = #tpu.pipeline_mode<synchronous>, transform_indices = @transform_1, window_bounds = array<i64: 1, 1, 128>}, {pipeline_mode = #tpu.pipeline_mode<synchronous>, transform_indices = @transform_2, window_bounds = array<i64: 1, 1>}, {pipeline_mode = #tpu.pipeline_mode<synchronous>, transform_indices = @transform_3, window_bounds = array<i64: 2, 1>}]} {
    %c0 = arith.constant 0 : index
    %c0_0 = arith.constant 0 : index
    %c0_1 = arith.constant 0 : index
    %0 = vector.load %arg1[%c0, %c0_0, %c0_1] : memref<2x1x128xf32, #tpu.memory_space<vmem>>, vector<2x1x128xf32>
    %c0_2 = arith.constant 0 : index
    %c0_3 = arith.constant 0 : index
    %c0_4 = arith.constant 0 : index
    %1 = vector.load %arg2[%c0_2, %c0_3, %c0_4] : memref<1x1x128xf32, #tpu.memory_space<vmem>>, vector<1x1x128xf32>
    %2 = vector.broadcast %1 : vector<1x1x128xf32> to vector<2x1x128xf32>
    %3 = arith.mulf %0, %2 : vector<2x1x128xf32>
    %cst = arith.constant dense<0.000000e+00> : vector<2x1xf32>
    %4 = vector.multi_reduction <add>, %3, %cst [2] : vector<2x1x128xf32> to vector<2x1xf32>
    %cst_5 = arith.constant dense<0.000000e+00> : vector<2xf32>
    %5 = vector.multi_reduction <add>, %4, %cst_5 [1] : vector<2x1xf32> to vector<2xf32>
    %6 = vector.shape_cast %5 : vector<2xf32> to vector<2x1xf32>
    %c0_6 = arith.constant 0 : index
    %c0_7 = arith.constant 0 : index
    %7 = vector.load %arg3[%c0_6, %c0_7] : memref<1x1xf32, #tpu.memory_space<vmem>>, vector<1x1xf32>
    %8 = vector.broadcast %7 : vector<1x1xf32> to vector<2x1xf32>
    %9 = arith.addf %6, %8 : vector<2x1xf32>
    %c0_8 = arith.constant 0 : index
    %c0_9 = arith.constant 0 : index
    %10 = vector.load %arg4[%c0_8, %c0_9] : memref<2x1xf32, #tpu.memory_space<vmem>>, vector<2x1xf32>
    tpu.vector_store %arg4[%c0_8, %c0_9], %9 {strides = array<i32>} : memref<2x1xf32, #tpu.memory_space<vmem>>, vector<2x1xf32>,
    return
  }
  func.func @transform_0(%arg0: i32) -> (i32, i32, i32) {
    %c0_i32 = arith.constant 0 : i32
    %c0_i32_0 = arith.constant 0 : i32
    %c0_i32_1 = arith.constant 0 : i32
    %c0_i32_2 = arith.constant 0 : i32
    return %c0_i32, %c0_i32_0, %c0_i32_1 : i32, i32, i32
  }
  func.func @transform_1(%arg0: i32) -> (i32, i32, i32) {
    %c0_i32 = arith.constant 0 : i32
    %c0_i32_0 = arith.constant 0 : i32
    %c0_i32_1 = arith.constant 0 : i32
    %c0_i32_2 = arith.constant 0 : i32
    return %c0_i32, %c0_i32_0, %c0_i32_1 : i32, i32, i32
  }
  func.func @transform_2(%arg0: i32) -> (i32, i32) {
    %c0_i32 = arith.constant 0 : i32
    %c0_i32_0 = arith.constant 0 : i32
    %c0_i32_1 = arith.constant 0 : i32
    return %c0_i32, %c0_i32_0 : i32, i32
  }
  func.func @transform_3(%arg0: i32) -> (i32, i32) {
    %c0_i32 = arith.constant 0 : i32
    %c0_i32_0 = arith.constant 0 : i32
    %c0_i32_1 = arith.constant 0 : i32
    return %c0_i32, %c0_i32_0 : i32, i32
  }
}

</mosaic_0001>

<llo_original>
// kernel: convnet_forward.22
$region0: #{convnet_forward.22}
  #allocation0 [shape = 'u32[]', space=smem, size = 0x4, offset = 0x4, fixed_abs, tag = 'smem constant byte address 0x4 - core index']
  #allocation1 [shape = 'u32[144,128]{1,0:T(1,128)}', space=vmem, size = 0x12000, scoped, tag = 'internal scratch']
  %s0 = inlined_call_operand.vmem [shape: f32[128,128], index: 0, kind: input, shape index: {}]
  %s1 = inlined_call_operand.vmem [shape: f32[1,128], index: 1, kind: input, shape index: {}]
  %s2 = inlined_call_operand.vmem [shape: f32[1,128], index: 2, kind: input, shape index: {}]
  %s3 = inlined_call_operand.vmem [shape: f32[128,128], index: 3, kind: output, shape index: {}]
  %s4 = sld [smem:[#allocation0]]
  $region22: #{convnet_forward.22} parent=0
    _
  %s6 = ssub.s32 1, %s4
  %s7 = scalar_select 0, %s6, %s4
  // Predicated region
  $region2: #{convnet_forward.22} parent=0 // pred_check
    _
  $region3: #{convnet_forward.22} parent=0 // pred_check_branch
    %9 = sbr.rel (0) target = $region5
  $region4: #{convnet_forward.22} parent=0 // pred_region
    _
  $region5: #{convnet_forward.22} parent=0 // pred_fallthru
    _
  // Predicated region
  $region6: #{convnet_forward.22} parent=0 // pred_check
    _
  $region7: #{convnet_forward.22} parent=0 // pred_check_branch
    %11 = sbr.rel (0) target = $region9
  $region8: #{convnet_forward.22} parent=0 // pred_region
    _
  $region9: #{convnet_forward.22} parent=0 // pred_fallthru
    _
  // Predicated region
  $region10: #{convnet_forward.22} parent=0 // pred_check
    _
  $region11: #{convnet_forward.22} parent=0 // pred_check_branch
    %13 = sbr.rel (0) target = $region13
  $region12: #{convnet_forward.22} parent=0 // pred_region
    _
  $region13: #{convnet_forward.22} parent=0 // pred_fallthru
    _
  %v14 = vld [vmem:[%s0] sm:$0xff]
  %v15 = vld [vmem:[%s0 + $0x8] sm:$0xff]
  %v16 = vld [vmem:[%s0 + $0x10] sm:$0xff]
  %v17 = vld [vmem:[%s0 + $0x18] sm:$0xff]
  %v18 = vld [vmem:[%s0 + $0x20] sm:$0xff]
  %v19 = vld [vmem:[%s0 + $0x28] sm:$0xff]
  %v20 = vld [vmem:[%s0 + $0x30] sm:$0xff]
  %v21 = vld [vmem:[%s0 + $0x38] sm:$0xff]
  %v22 = vld [vmem:[%s0 + $0x40] sm:$0xff]
  %v23 = vld [vmem:[%s0 + $0x48] sm:$0xff]
  %v24 = vld [vmem:[%s0 + $0x50] sm:$0xff]
  %v25 = vld [vmem:[%s0 + $0x58] sm:$0xff]
  %v26 = vld [vmem:[%s0 + $0x60] sm:$0xff]
  %v27 = vld [vmem:[%s0 + $0x68] sm:$0xff]
  %v28 = vld [vmem:[%s0 + $0x70] sm:$0xff]
  %v29 = vld [vmem:[%s0 + $0x78] sm:$0xff]
  %v30 = vld [vmem:[%s1] sm:$0x1]
  %v32 = vlaneseq
  %v33 = vshrl.u32 %v32, 7
  %v34 = vsub.s32 0, %v33
  %v35 = vrot.slane %v30, %v34
  %v37 = vmul.f32 %v14, %v35
  %v38 = vmul.f32 %v15, %v35
  %v39 = vmul.f32 %v16, %v35
  %v40 = vmul.f32 %v17, %v35
  %v41 = vmul.f32 %v18, %v35
  %v42 = vmul.f32 %v19, %v35
  %v43 = vmul.f32 %v20, %v35
  %v44 = vmul.f32 %v21, %v35
  %v45 = vmul.f32 %v22, %v35
  %v46 = vmul.f32 %v23, %v35
  %v47 = vmul.f32 %v24, %v35
  %v48 = vmul.f32 %v25, %v35
  %v49 = vmul.f32 %v26, %v35
  %v50 = vmul.f32 %v27, %v35
  %v51 = vmul.f32 %v28, %v35
  %v52 = vmul.f32 %v29, %v35
  %v53 = vld [vmem:[%s2] sm:$0x1]
  %v55 = vlaneseq
  %v56 = vshrl.u32 %v55, 7
  %v57 = vsub.s32 0, %v56
  %v58 = vrot.slane %v53, %v57
  %v60 = vadd.f32 %v37, %v58
  %v61 = vadd.f32 %v38, %v58
  %v62 = vadd.f32 %v39, %v58
  %v63 = vadd.f32 %v40, %v58
  %v64 = vadd.f32 %v41, %v58
  %v65 = vadd.f32 %v42, %v58
  %v66 = vadd.f32 %v43, %v58
  %v67 = vadd.f32 %v44, %v58
  %v68 = vadd.f32 %v45, %v58
  %v69 = vadd.f32 %v46, %v58
  %v70 = vadd.f32 %v47, %v58
  %v71 = vadd.f32 %v48, %v58
  %v72 = vadd.f32 %v49, %v58
  %v73 = vadd.f32 %v50, %v58
  %v74 = vadd.f32 %v51, %v58
  %v75 = vadd.f32 %v52, %v58
  %v76 = vmax.f32 %v60, 0.0
  %v77 = vmax.f32 %v61, 0.0
  %v78 = vmax.f32 %v62, 0.0
  %v79 = vmax.f32 %v63, 0.0
  %v80 = vmax.f32 %v64, 0.0
  %v81 = vmax.f32 %v65, 0.0
  %v82 = vmax.f32 %v66, 0.0
  %v83 = vmax.f32 %v67, 0.0
  %v84 = vmax.f32 %v68, 0.0
  %v85 = vmax.f32 %v69, 0.0
  %v86 = vmax.f32 %v70, 0.0
  %v87 = vmax.f32 %v71, 0.0
  %v88 = vmax.f32 %v72, 0.0
  %v89 = vmax.f32 %v73, 0.0
  %v90 = vmax.f32 %v74, 0.0
  %v91 = vmax.f32 %v75, 0.0
  %92 = vst [vmem:[%s3] sm:$0xff] %v76
  %93 = vst [vmem:[%s3 + $0x8] sm:$0xff] %v77
  %94 = vst [vmem:[%s3 + $0x10] sm:$0xff] %v78
  %95 = vst [vmem:[%s3 + $0x18] sm:$0xff] %v79
  %96 = vst [vmem:[%s3 + $0x20] sm:$0xff] %v80
  %97 = vst [vmem:[%s3 + $0x28] sm:$0xff] %v81
  %98 = vst [vmem:[%s3 + $0x30] sm:$0xff] %v82
  %99 = vst [vmem:[%s3 + $0x38] sm:$0xff] %v83
  %100 = vst [vmem:[%s3 + $0x40] sm:$0xff] %v84
  %101 = vst [vmem:[%s3 + $0x48] sm:$0xff] %v85
  %102 = vst [vmem:[%s3 + $0x50] sm:$0xff] %v86
  %103 = vst [vmem:[%s3 + $0x58] sm:$0xff] %v87
  %104 = vst [vmem:[%s3 + $0x60] sm:$0xff] %v88
  %105 = vst [vmem:[%s3 + $0x68] sm:$0xff] %v89
  %106 = vst [vmem:[%s3 + $0x70] sm:$0xff] %v90
  %107 = vst [vmem:[%s3 + $0x78] sm:$0xff] %v91
  // Predicated region
  $region14: #{convnet_forward.22} parent=0 // pred_check
    _
  $region15: #{convnet_forward.22} parent=0 // pred_check_branch
    %109 = sbr.rel (0) target = $region17
  $region16: #{convnet_forward.22} parent=0 // pred_region
    _
  $region17: #{convnet_forward.22} parent=0 // pred_fallthru
    _
  // Predicated region
  $region18: #{convnet_forward.22} parent=0 // pred_check
    _
  $region19: #{convnet_forward.22} parent=0 // pred_check_branch
    %111 = sbr.rel (0) target = $region21
  $region20: #{convnet_forward.22} parent=0 // pred_region
    _
  $region21: #{convnet_forward.22} parent=0 // pred_fallthru
    _

// kernel: convnet_forward.26
$region0: #{convnet_forward.26}
  #allocation0 [shape = 'u32[]', space=smem, size = 0x4, offset = 0x4, fixed_abs, tag = 'smem constant byte address 0x4 - core index']
  #allocation1 [shape = 'u32[144,128]{1,0:T(1,128)}', space=vmem, size = 0x12000, scoped, tag = 'internal scratch']
  %s0 = inlined_call_operand.vmem [shape: f32[32,128], index: 0, kind: input, shape index: {}]
  %s1 = inlined_call_operand.vmem [shape: f32[1,128], index: 1, kind: input, shape index: {}]
  %s2 = inlined_call_operand.vmem [shape: f32[1,128], index: 2, kind: input, shape index: {}]
  %s3 = inlined_call_operand.vmem [shape: f32[32,128], index: 3, kind: output, shape index: {}]
  %s4 = sld [smem:[#allocation0]]
  $region22: #{convnet_forward.26} parent=0
    _
  %s6 = ssub.s32 1, %s4
  %s7 = scalar_select 0, %s6, %s4
  // Predicated region
  $region2: #{convnet_forward.26} parent=0 // pred_check
    _
  $region3: #{convnet_forward.26} parent=0 // pred_check_branch
    %9 = sbr.rel (0) target = $region5
  $region4: #{convnet_forward.26} parent=0 // pred_region
    _
  $region5: #{convnet_forward.26} parent=0 // pred_fallthru
    _
  // Predicated region
  $region6: #{convnet_forward.26} parent=0 // pred_check
    _
  $region7: #{convnet_forward.26} parent=0 // pred_check_branch
    %11 = sbr.rel (0) target = $region9
  $region8: #{convnet_forward.26} parent=0 // pred_region
    _
  $region9: #{convnet_forward.26} parent=0 // pred_fallthru
    _
  // Predicated region
  $region10: #{convnet_forward.26} parent=0 // pred_check
    _
  $region11: #{convnet_forward.26} parent=0 // pred_check_branch
    %13 = sbr.rel (0) target = $region13
  $region12: #{convnet_forward.26} parent=0 // pred_region
    _
  $region13: #{convnet_forward.26} parent=0 // pred_fallthru
    _
  %v14 = vld [vmem:[%s0] sm:$0xff]
  %v15 = vld [vmem:[%s0 + $0x8] sm:$0xff]
  %v16 = vld [vmem:[%s0 + $0x10] sm:$0xff]
  %v17 = vld [vmem:[%s0 + $0x18] sm:$0xff]
  %v18 = vld [vmem:[%s1] sm:$0x1]
  %v20 = vlaneseq
  %v21 = vshrl.u32 %v20, 7
  %v22 = vsub.s32 0, %v21
  %v23 = vrot.slane %v18, %v22
  %v25 = vmul.f32 %v14, %v23
  %v26 = vmul.f32 %v15, %v23
  %v27 = vmul.f32 %v16, %v23
  %v28 = vmul.f32 %v17, %v23
  %v29 = vld [vmem:[%s2] sm:$0x1]
  %v31 = vlaneseq
  %v32 = vshrl.u32 %v31, 7
  %v33 = vsub.s32 0, %v32
  %v34 = vrot.slane %v29, %v33
  %v36 = vadd.f32 %v25, %v34
  %v37 = vadd.f32 %v26, %v34
  %v38 = vadd.f32 %v27, %v34
  %v39 = vadd.f32 %v28, %v34
  %40 = vst [vmem:[%s3] sm:$0xff] %v36
  %41 = vst [vmem:[%s3 + $0x8] sm:$0xff] %v37
  %42 = vst [vmem:[%s3 + $0x10] sm:$0xff] %v38
  %43 = vst [vmem:[%s3 + $0x18] sm:$0xff] %v39
  // Predicated region
  $region14: #{convnet_forward.26} parent=0 // pred_check
    _
  $region15: #{convnet_forward.26} parent=0 // pred_check_branch
    %45 = sbr.rel (0) target = $region17
  $region16: #{convnet_forward.26} parent=0 // pred_region
    _
  $region17: #{convnet_forward.26} parent=0 // pred_fallthru
    _
  // Predicated region
  $region18: #{convnet_forward.26} parent=0 // pred_check
    _
  $region19: #{convnet_forward.26} parent=0 // pred_check_branch
    %47 = sbr.rel (0) target = $region21
  $region20: #{convnet_forward.26} parent=0 // pred_region
    _
  $region21: #{convnet_forward.26} parent=0 // pred_fallthru
    _

// kernel: convnet_forward.21
$region0: #{convnet_forward.21}
  #allocation0 [shape = 'u32[]', space=smem, size = 0x4, offset = 0x4, fixed_abs, tag = 'smem constant byte address 0x4 - core index']
  #allocation1 [shape = 'u32[144,128]{1,0:T(1,128)}', space=vmem, size = 0x12000, scoped, tag = 'internal scratch']
  #allocation2 [shape = 'f32[128,128]{1,0:T(8,128)}', space=vmem, size = 0x10000, scoped, tag = 'scratch operand']
  %s0 = inlined_call_operand.vmem [shape: bf16[128,256], index: 0, kind: input, shape index: {}]
  %s1 = inlined_call_operand.vmem [shape: bf16[256,128], index: 1, kind: input, shape index: {}]
  %s2 = inlined_call_operand.vmem [shape: f32[128,128], index: 2, kind: output, shape index: {0}]
  %s3 = inlined_call_operand.vmem [shape: f32[1,2,128], index: 3, kind: output, shape index: {1}]
  %4 = xla_tuple %s2, %s3
  %s5 = sld [smem:[#allocation0]]
  $region34: #{convnet_forward.21} parent=0
    _
  %s7 = ssub.s32 1, %s5
  %s8 = scalar_select 0, %s7, %s5
  // Predicated region
  $region2: #{convnet_forward.21} parent=0 // pred_check
    _
  $region3: #{convnet_forward.21} parent=0 // pred_check_branch
    %10 = sbr.rel (0) target = $region5
  $region4: #{convnet_forward.21} parent=0 // pred_region
    _
  $region5: #{convnet_forward.21} parent=0 // pred_fallthru
    _
  // Predicated region
  $region6: #{convnet_forward.21} parent=0 // pred_check
    _
  $region7: #{convnet_forward.21} parent=0 // pred_check_branch
    %12 = sbr.rel (0) target = $region9
  $region8: #{convnet_forward.21} parent=0 // pred_region
    _
  $region9: #{convnet_forward.21} parent=0 // pred_fallthru
    _
  %p14 = scmp.eq.s32.totalorder 0, 0
  // Predicated region
  $region10: #{convnet_forward.21} parent=0 // pred_check
    %p15 = pneg %p14
  $region11: #{convnet_forward.21} parent=0 // pred_check_branch
    %17 = sbr.rel (%p15) target = $region13
  $region12: #{convnet_forward.21} parent=0 // pred_region
    %18 = vst [vmem:[#allocation2] sm:$0xff] 0.0
    %19 = vst [vmem:[#allocation2 + $0x8] sm:$0xff] 0.0
    %20 = vst [vmem:[#allocation2 + $0x10] sm:$0xff] 0.0
    %21 = vst [vmem:[#allocation2 + $0x18] sm:$0xff] 0.0
    %22 = vst [vmem:[#allocation2 + $0x20] sm:$0xff] 0.0
    %23 = vst [vmem:[#allocation2 + $0x28] sm:$0xff] 0.0
    %24 = vst [vmem:[#allocation2 + $0x30] sm:$0xff] 0.0
    %25 = vst [vmem:[#allocation2 + $0x38] sm:$0xff] 0.0
    %26 = vst [vmem:[#allocation2 + $0x40] sm:$0xff] 0.0
    %27 = vst [vmem:[#allocation2 + $0x48] sm:$0xff] 0.0
    %28 = vst [vmem:[#allocation2 + $0x50] sm:$0xff] 0.0
    %29 = vst [vmem:[#allocation2 + $0x58] sm:$0xff] 0.0
    %30 = vst [vmem:[#allocation2 + $0x60] sm:$0xff] 0.0
    %31 = vst [vmem:[#allocation2 + $0x68] sm:$0xff] 0.0
    %32 = vst [vmem:[#allocation2 + $0x70] sm:$0xff] 0.0
    %33 = vst [vmem:[#allocation2 + $0x78] sm:$0xff] 0.0
  $region13: #{convnet_forward.21} parent=0 // pred_fallthru
    _
  %v34 = vld [vmem:[#allocation2] sm:$0xff]
  %v35 = vld [vmem:[#allocation2 + $0x8] sm:$0xff]
  %v36 = vld [vmem:[#allocation2 + $0x10] sm:$0xff]
  %v37 = vld [vmem:[#allocation2 + $0x18] sm:$0xff]
  %v38 = vld [vmem:[#allocation2 + $0x20] sm:$0xff]
  %v39 = vld [vmem:[#allocation2 + $0x28] sm:$0xff]
  %v40 = vld [vmem:[#allocation2 + $0x30] sm:$0xff]
  %v41 = vld [vmem:[#allocation2 + $0x38] sm:$0xff]
  %v42 = vld [vmem:[#allocation2 + $0x40] sm:$0xff]
  %v43 = vld [vmem:[#allocation2 + $0x48] sm:$0xff]
  %v44 = vld [vmem:[#allocation2 + $0x50] sm:$0xff]
  %v45 = vld [vmem:[#allocation2 + $0x58] sm:$0xff]
  %v46 = vld [vmem:[#allocation2 + $0x60] sm:$0xff]
  %v47 = vld [vmem:[#allocation2 + $0x68] sm:$0xff]
  %v48 = vld [vmem:[#allocation2 + $0x70] sm:$0xff]
  %v49 = vld [vmem:[#allocation2 + $0x78] sm:$0xff]
  %v50 = vld [vmem:[%s0] sm:$0xff]
  %v51 = vld [vmem:[%s0 + $0x8] sm:$0xff]
  %v52 = vld [vmem:[%s0 + $0x10] sm:$0xff]
  %v53 = vld [vmem:[%s0 + $0x18] sm:$0xff]
  %v54 = vld [vmem:[%s0 + $0x20] sm:$0xff]
  %v55 = vld [vmem:[%s0 + $0x28] sm:$0xff]
  %v56 = vld [vmem:[%s0 + $0x30] sm:$0xff]
  %v57 = vld [vmem:[%s0 + $0x38] sm:$0xff]
  %v58 = vld [vmem:[%s0 + $0x40] sm:$0xff]
  %v59 = vld [vmem:[%s0 + $0x48] sm:$0xff]
  %v60 = vld [vmem:[%s0 + $0x50] sm:$0xff]
  %v61 = vld [vmem:[%s0 + $0x58] sm:$0xff]
  %v62 = vld [vmem:[%s0 + $0x60] sm:$0xff]
  %v63 = vld [vmem:[%s0 + $0x68] sm:$0xff]
  %v64 = vld [vmem:[%s0 + $0x70] sm:$0xff]
  %v65 = vld [vmem:[%s0 + $0x78] sm:$0xff]
  %v66 = vld [vmem:[%s1] sm:$0xf]
  %v67 = vld [vmem:[%s1 + $0x4] sm:$0xf]
  %v68 = vld [vmem:[%s1 + $0x8] sm:$0xf]
  %v69 = vld [vmem:[%s1 + $0xc] sm:$0xf]
  %v70 = vld [vmem:[%s1 + $0x10] sm:$0xf]
  %v71 = vld [vmem:[%s1 + $0x14] sm:$0xf]
  %v72 = vld [vmem:[%s1 + $0x18] sm:$0xf]
  %v73 = vld [vmem:[%s1 + $0x1c] sm:$0xf]
  %v74 = vld [vmem:[%s1 + $0x20] sm:$0xf]
  %v75 = vld [vmem:[%s1 + $0x24] sm:$0xf]
  %v76 = vld [vmem:[%s1 + $0x28] sm:$0xf]
  %v77 = vld [vmem:[%s1 + $0x2c] sm:$0xf]
  %v78 = vld [vmem:[%s1 + $0x30] sm:$0xf]
  %v79 = vld [vmem:[%s1 + $0x34] sm:$0xf]
  %v80 = vld [vmem:[%s1 + $0x38] sm:$0xf]
  %v81 = vld [vmem:[%s1 + $0x3c] sm:$0xf]
  %v82 = vld [vmem:[%s1 + $0x40] sm:$0xf]
  %v83 = vld [vmem:[%s1 + $0x44] sm:$0xf]
  %v84 = vld [vmem:[%s1 + $0x48] sm:$0xf]
  %v85 = vld [vmem:[%s1 + $0x4c] sm:$0xf]
  %v86 = vld [vmem:[%s1 + $0x50] sm:$0xf]
  %v87 = vld [vmem:[%s1 + $0x54] sm:$0xf]
  %v88 = vld [vmem:[%s1 + $0x58] sm:$0xf]
  %v89 = vld [vmem:[%s1 + $0x5c] sm:$0xf]
  %v90 = vld [vmem:[%s1 + $0x60] sm:$0xf]
  %v91 = vld [vmem:[%s1 + $0x64] sm:$0xf]
  %v92 = vld [vmem:[%s1 + $0x68] sm:$0xf]
  %v93 = vld [vmem:[%s1 + $0x6c] sm:$0xf]
  %v94 = vld [vmem:[%s1 + $0x70] sm:$0xf]
  %v95 = vld [vmem:[%s1 + $0x74] sm:$0xf]
  %v96 = vld [vmem:[%s1 + $0x78] sm:$0xf]
  %v97 = vld [vmem:[%s1 + $0x7c] sm:$0xf]
  %v114 = vunpack.c.l.b16 %v50
  %v115 = vunpack.c.h.b16 %v50
  %v116 = vunpack.c.l.b16 %v51
  %v117 = vunpack.c.h.b16 %v51
  %v118 = vunpack.c.l.b16 %v52
  %v119 = vunpack.c.h.b16 %v52
  %v120 = vunpack.c.l.b16 %v53
  %v121 = vunpack.c.h.b16 %v53
  %v122 = vunpack.c.l.b16 %v54
  %v123 = vunpack.c.h.b16 %v54
  %v124 = vunpack.c.l.b16 %v55
  %v125 = vunpack.c.h.b16 %v55
  %v126 = vunpack.c.l.b16 %v56
  %v127 = vunpack.c.h.b16 %v56
  %v128 = vunpack.c.l.b16 %v57
  %v129 = vunpack.c.h.b16 %v57
  %v130 = vunpack.c.l.b16 %v58
  %v131 = vunpack.c.h.b16 %v58
  %v132 = vunpack.c.l.b16 %v59
  %v133 = vunpack.c.h.b16 %v59
  %v134 = vunpack.c.l.b16 %v60
  %v135 = vunpack.c.h.b16 %v60
  %v136 = vunpack.c.l.b16 %v61
  %v137 = vunpack.c.h.b16 %v61
  %v138 = vunpack.c.l.b16 %v62
  %v139 = vunpack.c.h.b16 %v62
  %v140 = vunpack.c.l.b16 %v63
  %v141 = vunpack.c.h.b16 %v63
  %v142 = vunpack.c.l.b16 %v64
  %v143 = vunpack.c.h.b16 %v64
  %v144 = vunpack.c.l.b16 %v65
  %v145 = vunpack.c.h.b16 %v65
  %v146 = vpack.c.b16 %v116, %v114
  %v147 = vpack.c.b16 %v117, %v115
  %v148 = vpack.c.b16 %v120, %v118
  %v149 = vpack.c.b16 %v121, %v119
  %v150 = vpack.c.b16 %v124, %v122
  %v151 = vpack.c.b16 %v125, %v123
  %v152 = vpack.c.b16 %v128, %v126
  %v153 = vpack.c.b16 %v129, %v127
  %v154 = vpack.c.b16 %v132, %v130
  %v155 = vpack.c.b16 %v133, %v131
  %v156 = vpack.c.b16 %v136, %v134
  %v157 = vpack.c.b16 %v137, %v135
  %v158 = vpack.c.b16 %v140, %v138
  %v159 = vpack.c.b16 %v141, %v139
  %v160 = vpack.c.b16 %v144, %v142
  %v161 = vpack.c.b16 %v145, %v143
  %v210 = vunpack.c.l.b16 %v66
  %v211 = vunpack.c.l.b16 %v67
  %v212 = vunpack.c.l.b16 %v68
  %v213 = vunpack.c.l.b16 %v69
  %v214 = vunpack.c.l.b16 %v70
  %v215 = vunpack.c.l.b16 %v71
  %v216 = vunpack.c.l.b16 %v72
  %v217 = vunpack.c.l.b16 %v73
  %v218 = vunpack.c.l.b16 %v74
  %v219 = vunpack.c.l.b16 %v75
  %v220 = vunpack.c.l.b16 %v76
  %v221 = vunpack.c.l.b16 %v77
  %v222 = vunpack.c.l.b16 %v78
  %v223 = vunpack.c.l.b16 %v79
  %v224 = vunpack.c.l.b16 %v80
  %v225 = vunpack.c.l.b16 %v81
  %v226 = vunpack.c.l.b16 %v82
  %v227 = vunpack.c.l.b16 %v83
  %v228 = vunpack.c.l.b16 %v84
  %v229 = vunpack.c.l.b16 %v85
  %v230 = vunpack.c.l.b16 %v86
  %v231 = vunpack.c.l.b16 %v87
  %v232 = vunpack.c.l.b16 %v88
  %v233 = vunpack.c.l.b16 %v89
  %v234 = vunpack.c.l.b16 %v90
  %v235 = vunpack.c.l.b16 %v91
  %v236 = vunpack.c.l.b16 %v92
  %v237 = vunpack.c.l.b16 %v93
  %v238 = vunpack.c.l.b16 %v94
  %v239 = vunpack.c.l.b16 %v95
  %v240 = vunpack.c.l.b16 %v96
  %v241 = vunpack.c.l.b16 %v97
  %v242 = vpack.c.b16 %v211, %v210
  %v243 = vpack.c.b16 %v213, %v212
  %v244 = vpack.c.b16 %v215, %v214
  %v245 = vpack.c.b16 %v217, %v216
  %v246 = vpack.c.b16 %v219, %v218
  %v247 = vpack.c.b16 %v221, %v220
  %v248 = vpack.c.b16 %v223, %v222
  %v249 = vpack.c.b16 %v225, %v224
  %v250 = vpack.c.b16 %v227, %v226
  %v251 = vpack.c.b16 %v229, %v228
  %v252 = vpack.c.b16 %v231, %v230
  %v253 = vpack.c.b16 %v233, %v232
  %v254 = vpack.c.b16 %v235, %v234
  %v255 = vpack.c.b16 %v237, %v236
  %v256 = vpack.c.b16 %v239, %v238
  %v257 = vpack.c.b16 %v241, %v240
  %274 = vmatprep.subr.bf16.mxu0 0
  %275 = vmatpush1.bf16.msra.mxu0 %v242
  %276 = vmatprep.subr.bf16.mxu0 0
  %277 = vmatpush1.bf16.msra.mxu0 %v243
  %278 = vmatprep.subr.bf16.mxu0 0
  %279 = vmatpush1.bf16.msra.mxu0 %v244
  %280 = vmatprep.subr.bf16.mxu0 0
  %281 = vmatpush1.bf16.msra.mxu0 %v245
  %282 = vmatprep.subr.bf16.mxu0 0
  %283 = vmatpush1.bf16.msra.mxu0 %v246
  %284 = vmatprep.subr.bf16.mxu0 0
  %285 = vmatpush1.bf16.msra.mxu0 %v247
  %286 = vmatprep.subr.bf16.mxu0 0
  %287 = vmatpush1.bf16.msra.mxu0 %v248
  %288 = vmatprep.subr.bf16.mxu0 0
  %289 = vmatpush1.bf16.msra.mxu0 %v249
  %290 = vmatprep.subr.bf16.mxu0 0
  %291 = vmatpush1.bf16.msra.mxu0 %v250
  %292 = vmatprep.subr.bf16.mxu0 0
  %293 = vmatpush1.bf16.msra.mxu0 %v251
  %294 = vmatprep.subr.bf16.mxu0 0
  %295 = vmatpush1.bf16.msra.mxu0 %v252
  %296 = vmatprep.subr.bf16.mxu0 0
  %297 = vmatpush1.bf16.msra.mxu0 %v253
  %298 = vmatprep.subr.bf16.mxu0 0
  %299 = vmatpush1.bf16.msra.mxu0 %v254
  %300 = vmatprep.subr.bf16.mxu0 0
  %301 = vmatpush1.bf16.msra.mxu0 %v255
  %302 = vmatprep.subr.bf16.mxu0 0
  %303 = vmatpush1.bf16.msra.mxu0 %v256
  %304 = vmatprep.subr.bf16.mxu0 0
  %305 = vmatpush1.bf16.msra.mxu0 %v257
  %306 = vmatprep.mubr.bf16.mxu0 %v147
  %307 = vmatmul.mubr.bf16.gmra.mrb[0].mxu0 %v146
  %v308 = vpop.f32.mrb[0].mxu0
  %v309 = vadd.f32 0.0, %v308
  %v310 = vpop.f32.mrb[0].mxu0
  %v311 = vpop.f32.mrb[0].mxu0
  %v312 = vadd.f32 0.0, %v311
  %v313 = vpop.f32.mrb[0].mxu0
  %314 = vmatprep.mubr.bf16.mxu0 %v149
  %315 = vmatmul.mubr.bf16.gmra.mrb[0].mxu0 %v148
  %v316 = vpop.f32.mrb[0].mxu0
  %v317 = vadd.f32 0.0, %v316
  %v318 = vpop.f32.mrb[0].mxu0
  %v319 = vpop.f32.mrb[0].mxu0
  %v320 = vadd.f32 0.0, %v319
  %v321 = vpop.f32.mrb[0].mxu0
  %322 = vmatprep.mubr.bf16.mxu0 %v151
  %323 = vmatmul.mubr.bf16.gmra.mrb[0].mxu0 %v150
  %v324 = vpop.f32.mrb[0].mxu0
  %v325 = vadd.f32 0.0, %v324
  %v326 = vpop.f32.mrb[0].mxu0
  %v327 = vpop.f32.mrb[0].mxu0
  %v328 = vadd.f32 0.0, %v327
  %v329 = vpop.f32.mrb[0].mxu0
  %330 = vmatprep.mubr.bf16.mxu0 %v153
  %331 = vmatmul.mubr.bf16.gmra.mrb[0].mxu0 %v152
  %v332 = vpop.f32.mrb[0].mxu0
  %v333 = vadd.f32 0.0, %v332
  %v334 = vpop.f32.mrb[0].mxu0
  %v335 = vpop.f32.mrb[0].mxu0
  %v336 = vadd.f32 0.0, %v335
  %v337 = vpop.f32.mrb[0].mxu0
  %338 = vmatprep.mubr.bf16.mxu0 %v155
  %339 = vmatmul.mubr.bf16.gmra.mrb[0].mxu0 %v154
  %v340 = vpop.f32.mrb[0].mxu0
  %v341 = vadd.f32 0.0, %v340
  %v342 = vpop.f32.mrb[0].mxu0
  %v343 = vpop.f32.mrb[0].mxu0
  %v344 = vadd.f32 0.0, %v343
  %v345 = vpop.f32.mrb[0].mxu0
  %346 = vmatprep.mubr.bf16.mxu0 %v157
  %347 = vmatmul.mubr.bf16.gmra.mrb[0].mxu0 %v156
  %v348 = vpop.f32.mrb[0].mxu0
  %v349 = vadd.f32 0.0, %v348
  %v350 = vpop.f32.mrb[0].mxu0
  %v351 = vpop.f32.mrb[0].mxu0
  %v352 = vadd.f32 0.0, %v351
  %v353 = vpop.f32.mrb[0].mxu0
  %354 = vmatprep.mubr.bf16.mxu0 %v159
  %355 = vmatmul.mubr.bf16.gmra.mrb[0].mxu0 %v158
  %v356 = vpop.f32.mrb[0].mxu0
  %v357 = vadd.f32 0.0, %v356
  %v358 = vpop.f32.mrb[0].mxu0
  %v359 = vpop.f32.mrb[0].mxu0
  %v360 = vadd.f32 0.0, %v359
  %v361 = vpop.f32.mrb[0].mxu0
  %362 = vmatprep.mubr.bf16.mxu0 %v161
  %363 = vmatmul.mubr.bf16.gmra.mrb[0].mxu0 %v160
  %v364 = vpop.f32.mrb[0].mxu0
  %v365 = vadd.f32 0.0, %v364
  %v366 = vpop.f32.mrb[0].mxu0
  %v367 = vpop.f32.mrb[0].mxu0
  %v368 = vadd.f32 0.0, %v367
  %v369 = vpop.f32.mrb[0].mxu0
  %370 = vdwg.mxu0
  %v371 = vadd.f32 %v34, %v309
  %v372 = vadd.f32 %v35, %v312
  %v373 = vadd.f32 %v36, %v317
  %v374 = vadd.f32 %v37, %v320
  %v375 = vadd.f32 %v38, %v325
  %v376 = vadd.f32 %v39, %v328
  %v377 = vadd.f32 %v40, %v333
  %v378 = vadd.f32 %v41, %v336
  %v379 = vadd.f32 %v42, %v341
  %v380 = vadd.f32 %v43, %v344
  %v381 = vadd.f32 %v44, %v349
  %v382 = vadd.f32 %v45, %v352
  %v383 = vadd.f32 %v46, %v357
  %v384 = vadd.f32 %v47, %v360
  %v385 = vadd.f32 %v48, %v365
  %v386 = vadd.f32 %v49, %v368
  %387 = vst [vmem:[#allocation2] sm:$0xff] %v371
  %388 = vst [vmem:[#allocation2 + $0x8] sm:$0xff] %v372
  %389 = vst [vmem:[#allocation2 + $0x10] sm:$0xff] %v373
  %390 = vst [vmem:[#allocation2 + $0x18] sm:$0xff] %v374
  %391 = vst [vmem:[#allocation2 + $0x20] sm:$0xff] %v375
  %392 = vst [vmem:[#allocation2 + $0x28] sm:$0xff] %v376
  %393 = vst [vmem:[#allocation2 + $0x30] sm:$0xff] %v377
  %394 = vst [vmem:[#allocation2 + $0x38] sm:$0xff] %v378
  %395 = vst [vmem:[#allocation2 + $0x40] sm:$0xff] %v379
  %396 = vst [vmem:[#allocation2 + $0x48] sm:$0xff] %v380
  %397 = vst [vmem:[#allocation2 + $0x50] sm:$0xff] %v381
  %398 = vst [vmem:[#allocation2 + $0x58] sm:$0xff] %v382
  %399 = vst [vmem:[#allocation2 + $0x60] sm:$0xff] %v383
  %400 = vst [vmem:[#allocation2 + $0x68] sm:$0xff] %v384
  %401 = vst [vmem:[#allocation2 + $0x70] sm:$0xff] %v385
  %402 = vst [vmem:[#allocation2 + $0x78] sm:$0xff] %v386
  // Predicated region
  $region14: #{convnet_forward.21} parent=0 // pred_check
    %p403 = pneg %p14
  $region15: #{convnet_forward.21} parent=0 // pred_check_branch
    %405 = sbr.rel (%p403) target = $region17
  $region16: #{convnet_forward.21} parent=0 // pred_region
    %v406 = vld [vmem:[#allocation2] sm:$0xff]
    %v407 = vld [vmem:[#allocation2 + $0x8] sm:$0xff]
    %v408 = vld [vmem:[#allocation2 + $0x10] sm:$0xff]
    %v409 = vld [vmem:[#allocation2 + $0x18] sm:$0xff]
    %v410 = vld [vmem:[#allocation2 + $0x20] sm:$0xff]
    %v411 = vld [vmem:[#allocation2 + $0x28] sm:$0xff]
    %v412 = vld [vmem:[#allocation2 + $0x30] sm:$0xff]
    %v413 = vld [vmem:[#allocation2 + $0x38] sm:$0xff]
    %v414 = vld [vmem:[#allocation2 + $0x40] sm:$0xff]
    %v415 = vld [vmem:[#allocation2 + $0x48] sm:$0xff]
    %v416 = vld [vmem:[#allocation2 + $0x50] sm:$0xff]
    %v417 = vld [vmem:[#allocation2 + $0x58] sm:$0xff]
    %v418 = vld [vmem:[#allocation2 + $0x60] sm:$0xff]
    %v419 = vld [vmem:[#allocation2 + $0x68] sm:$0xff]
    %v420 = vld [vmem:[#allocation2 + $0x70] sm:$0xff]
    %v421 = vld [vmem:[#allocation2 + $0x78] sm:$0xff]
    %422 = vst [vmem:[%s2] sm:$0xff] %v406
    %423 = vst [vmem:[%s2 + $0x8] sm:$0xff] %v407
    %424 = vst [vmem:[%s2 + $0x10] sm:$0xff] %v408
    %425 = vst [vmem:[%s2 + $0x18] sm:$0xff] %v409
    %426 = vst [vmem:[%s2 + $0x20] sm:$0xff] %v410
    %427 = vst [vmem:[%s2 + $0x28] sm:$0xff] %v411
    %428 = vst [vmem:[%s2 + $0x30] sm:$0xff] %v412
    %429 = vst [vmem:[%s2 + $0x38] sm:$0xff] %v413
    %430 = vst [vmem:[%s2 + $0x40] sm:$0xff] %v414
    %431 = vst [vmem:[%s2 + $0x48] sm:$0xff] %v415
    %432 = vst [vmem:[%s2 + $0x50] sm:$0xff] %v416
    %433 = vst [vmem:[%s2 + $0x58] sm:$0xff] %v417
    %434 = vst [vmem:[%s2 + $0x60] sm:$0xff] %v418
    %435 = vst [vmem:[%s2 + $0x68] sm:$0xff] %v419
    %436 = vst [vmem:[%s2 + $0x70] sm:$0xff] %v420
    %437 = vst [vmem:[%s2 + $0x78] sm:$0xff] %v421
    %v438 = vadd.f32 %v406, %v407
    %v439 = vadd.f32 %v438, %v408
    %v440 = vadd.f32 %v439, %v409
    %v441 = vadd.f32 %v440, %v410
    %v442 = vadd.f32 %v441, %v411
    %v443 = vadd.f32 %v442, %v412
    %v444 = vadd.f32 %v443, %v413
    %v445 = vadd.f32 %v444, %v414
    %v446 = vadd.f32 %v445, %v415
    %v447 = vadd.f32 %v446, %v416
    %v448 = vadd.f32 %v447, %v417
    %v449 = vadd.f32 %v448, %v418
    %v450 = vadd.f32 %v449, %v419
    %v451 = vadd.f32 %v450, %v420
    %v452 = vadd.f32 %v451, %v421
    %v453 = vrot.slane %v452, 4
    %v454 = vadd.f32 %v452, %v453
    %v455 = vrot.slane %v454, 2
    %v456 = vadd.f32 %v454, %v455
    %v457 = vrot.slane %v456, 1
    %v458 = vadd.f32 %v456, %v457
    %v459 = vmul.f32 %v406, %v406
    %v460 = vmul.f32 %v407, %v407
    %v461 = vmul.f32 %v408, %v408
    %v462 = vmul.f32 %v409, %v409
    %v463 = vmul.f32 %v410, %v410
    %v464 = vmul.f32 %v411, %v411
    %v465 = vmul.f32 %v412, %v412
    %v466 = vmul.f32 %v413, %v413
    %v467 = vmul.f32 %v414, %v414
    %v468 = vmul.f32 %v415, %v415
    %v469 = vmul.f32 %v416, %v416
    %v470 = vmul.f32 %v417, %v417
    %v471 = vmul.f32 %v418, %v418
    %v472 = vmul.f32 %v419, %v419
    %v473 = vmul.f32 %v420, %v420
    %v474 = vmul.f32 %v421, %v421
    %v475 = vadd.f32 %v459, %v460
    %v476 = vadd.f32 %v475, %v461
    %v477 = vadd.f32 %v476, %v462
    %v478 = vadd.f32 %v477, %v463
    %v479 = vadd.f32 %v478, %v464
    %v480 = vadd.f32 %v479, %v465
    %v481 = vadd.f32 %v480, %v466
    %v482 = vadd.f32 %v481, %v467
    %v483 = vadd.f32 %v482, %v468
    %v484 = vadd.f32 %v483, %v469
    %v485 = vadd.f32 %v484, %v470
    %v486 = vadd.f32 %v485, %v471
    %v487 = vadd.f32 %v486, %v472
    %v488 = vadd.f32 %v487, %v473
    %v489 = vadd.f32 %v488, %v474
    %v490 = vrot.slane %v489, 4
    %v491 = vadd.f32 %v489, %v490
    %v492 = vrot.slane %v491, 2
    %v493 = vadd.f32 %v491, %v492
    %v494 = vrot.slane %v493, 1
    %v495 = vadd.f32 %v493, %v494
    %vm496 = vcmask 1040384
    %v497 = vsel %vm496, %v458, %v495
    %498 = vst [vmem:[%s3] sm:$0x3] %v497
  $region17: #{convnet_forward.21} parent=0 // pred_fallthru
    _
  // Predicated region
  $region18: #{convnet_forward.21} parent=0 // pred_check
    _
  $region19: #{convnet_forward.21} parent=0 // pred_check_branch
    %500 = sbr.rel (0) target = $region21
  $region20: #{convnet_forward.21} parent=0 // pred_region
    _
  $region21: #{convnet_forward.21} parent=0 // pred_fallthru
    _
  // Predicated region
  $region22: #{convnet_forward.21} parent=0 // pred_check
    _
  $region23: #{convnet_forward.21} parent=0 // pred_check_branch
    %502 = sbr.rel (0) target = $region25
  $region24: #{convnet_forward.21} parent=0 // pred_region
    _
  $region25: #{convnet_forward.21} parent=0 // pred_fallthru
    _
  // Predicated region
  $region26: #{convnet_forward.21} parent=0 // pred_check
    _
  $region27: #{convnet_forward.21} parent=0 // pred_check_branch
    %504 = sbr.rel (0) target = $region29
  $region28: #{convnet_forward.21} parent=0 // pred_region
    _
  $region29: #{convnet_forward.21} parent=0 // pred_fallthru
    _
  // Predicated region
  $region30: #{convnet_forward.21} parent=0 // pred_check
    _
  $region31: #{convnet_forward.21} parent=0 // pred_check_branch
    %506 = sbr.rel (0) target = $region33
  $region32: #{convnet_forward.21} parent=0 // pred_region
    _
  $region33: #{convnet_forward.21} parent=0 // pred_fallthru
    _

// kernel: convnet_forward.25
$region0: #{convnet_forward.25}
  #allocation0 [shape = 'u32[]', space=smem, size = 0x4, offset = 0x4, fixed_abs, tag = 'smem constant byte address 0x4 - core index']
  #allocation1 [shape = 'u32[144,128]{1,0:T(1,128)}', space=vmem, size = 0x12000, scoped, tag = 'internal scratch']
  #allocation2 [shape = 'f32[32,128]{1,0:T(8,128)}', space=vmem, size = 0x4000, scoped, tag = 'scratch operand']
  %s0 = inlined_call_operand.vmem [shape: bf16[32,128], index: 0, kind: input, shape index: {}]
  %s1 = inlined_call_operand.vmem [shape: bf16[128,128], index: 1, kind: input, shape index: {}]
  %s2 = inlined_call_operand.vmem [shape: f32[32,128], index: 2, kind: output, shape index: {0}]
  %s3 = inlined_call_operand.vmem [shape: f32[1,2,128], index: 3, kind: output, shape index: {1}]
  %4 = xla_tuple %s2, %s3
  %s5 = sld [smem:[#allocation0]]
  $region34: #{convnet_forward.25} parent=0
    _
  %s7 = ssub.s32 1, %s5
  %s8 = scalar_select 0, %s7, %s5
  // Predicated region
  $region2: #{convnet_forward.25} parent=0 // pred_check
    _
  $region3: #{convnet_forward.25} parent=0 // pred_check_branch
    %10 = sbr.rel (0) target = $region5
  $region4: #{convnet_forward.25} parent=0 // pred_region
    _
  $region5: #{convnet_forward.25} parent=0 // pred_fallthru
    _
  // Predicated region
  $region6: #{convnet_forward.25} parent=0 // pred_check
    _
  $region7: #{convnet_forward.25} parent=0 // pred_check_branch
    %12 = sbr.rel (0) target = $region9
  $region8: #{convnet_forward.25} parent=0 // pred_region
    _
  $region9: #{convnet_forward.25} parent=0 // pred_fallthru
    _
  %p14 = scmp.eq.s32.totalorder 0, 0
  // Predicated region
  $region10: #{convnet_forward.25} parent=0 // pred_check
    %p15 = pneg %p14
  $region11: #{convnet_forward.25} parent=0 // pred_check_branch
    %17 = sbr.rel (%p15) target = $region13
  $region12: #{convnet_forward.25} parent=0 // pred_region
    %18 = vst [vmem:[#allocation2] sm:$0xff] 0.0
    %19 = vst [vmem:[#allocation2 + $0x8] sm:$0xff] 0.0
    %20 = vst [vmem:[#allocation2 + $0x10] sm:$0xff] 0.0
    %21 = vst [vmem:[#allocation2 + $0x18] sm:$0xff] 0.0
  $region13: #{convnet_forward.25} parent=0 // pred_fallthru
    _
  %v22 = vld [vmem:[#allocation2] sm:$0xff]
  %v23 = vld [vmem:[#allocation2 + $0x8] sm:$0xff]
  %v24 = vld [vmem:[#allocation2 + $0x10] sm:$0xff]
  %v25 = vld [vmem:[#allocation2 + $0x18] sm:$0xff]
  %v26 = vld [vmem:[%s0] sm:$0xf]
  %v27 = vld [vmem:[%s0 + $0x4] sm:$0xf]
  %v28 = vld [vmem:[%s0 + $0x8] sm:$0xf]
  %v29 = vld [vmem:[%s0 + $0xc] sm:$0xf]
  %v30 = vld [vmem:[%s1] sm:$0xf]
  %v31 = vld [vmem:[%s1 + $0x4] sm:$0xf]
  %v32 = vld [vmem:[%s1 + $0x8] sm:$0xf]
  %v33 = vld [vmem:[%s1 + $0xc] sm:$0xf]
  %v34 = vld [vmem:[%s1 + $0x10] sm:$0xf]
  %v35 = vld [vmem:[%s1 + $0x14] sm:$0xf]
  %v36 = vld [vmem:[%s1 + $0x18] sm:$0xf]
  %v37 = vld [vmem:[%s1 + $0x1c] sm:$0xf]
  %v38 = vld [vmem:[%s1 + $0x20] sm:$0xf]
  %v39 = vld [vmem:[%s1 + $0x24] sm:$0xf]
  %v40 = vld [vmem:[%s1 + $0x28] sm:$0xf]
  %v41 = vld [vmem:[%s1 + $0x2c] sm:$0xf]
  %v42 = vld [vmem:[%s1 + $0x30] sm:$0xf]
  %v43 = vld [vmem:[%s1 + $0x34] sm:$0xf]
  %v44 = vld [vmem:[%s1 + $0x38] sm:$0xf]
  %v45 = vld [vmem:[%s1 + $0x3c] sm:$0xf]
  %v50 = vunpack.c.l.b16 %v26
  %v51 = vunpack.c.l.b16 %v27
  %v52 = vunpack.c.l.b16 %v28
  %v53 = vunpack.c.l.b16 %v29
  %v54 = vpack.c.b16 %v51, %v50
  %v55 = vpack.c.b16 %v53, %v52
  %v74 = vunpack.c.l.b16 %v30
  %v75 = vunpack.c.l.b16 %v31
  %v76 = vunpack.c.l.b16 %v32
  %v77 = vunpack.c.l.b16 %v33
  %v78 = vunpack.c.l.b16 %v34
  %v79 = vunpack.c.l.b16 %v35
  %v80 = vunpack.c.l.b16 %v36
  %v81 = vunpack.c.l.b16 %v37
  %v82 = vunpack.c.l.b16 %v38
  %v83 = vunpack.c.l.b16 %v39
  %v84 = vunpack.c.l.b16 %v40
  %v85 = vunpack.c.l.b16 %v41
  %v86 = vunpack.c.l.b16 %v42
  %v87 = vunpack.c.l.b16 %v43
  %v88 = vunpack.c.l.b16 %v44
  %v89 = vunpack.c.l.b16 %v45
  %v90 = vpack.c.b16 %v75, %v74
  %v91 = vpack.c.b16 %v77, %v76
  %v92 = vpack.c.b16 %v79, %v78
  %v93 = vpack.c.b16 %v81, %v80
  %v94 = vpack.c.b16 %v83, %v82
  %v95 = vpack.c.b16 %v85, %v84
  %v96 = vpack.c.b16 %v87, %v86
  %v97 = vpack.c.b16 %v89, %v88
  %106 = vmatprep.subr.bf16.mxu0 0
  %107 = vmatpush1.bf16.msra.mxu0 %v90
  %108 = vmatprep.subr.bf16.mxu0 0
  %109 = vmatpush1.bf16.msra.mxu0 %v91
  %110 = vmatprep.subr.bf16.mxu0 0
  %111 = vmatpush1.bf16.msra.mxu0 %v92
  %112 = vmatprep.subr.bf16.mxu0 0
  %113 = vmatpush1.bf16.msra.mxu0 %v93
  %114 = vmatprep.subr.bf16.mxu0 0
  %115 = vmatpush1.bf16.msra.mxu0 %v94
  %116 = vmatprep.subr.bf16.mxu0 0
  %117 = vmatpush1.bf16.msra.mxu0 %v95
  %118 = vmatprep.subr.bf16.mxu0 0
  %119 = vmatpush1.bf16.msra.mxu0 %v96
  %120 = vmatprep.subr.bf16.mxu0 0
  %121 = vmatpush1.bf16.msra.mxu0 %v97
  %122 = vmatprep.subr.bf16.mxu0 0
  %123 = vmatpush1.bf16.msra.mxu0 0
  %124 = vmatprep.subr.bf16.mxu0 0
  %125 = vmatpush1.bf16.msra.mxu0 0
  %126 = vmatprep.subr.bf16.mxu0 0
  %127 = vmatpush1.bf16.msra.mxu0 0
  %128 = vmatprep.subr.bf16.mxu0 0
  %129 = vmatpush1.bf16.msra.mxu0 0
  %130 = vmatprep.subr.bf16.mxu0 0
  %131 = vmatpush1.bf16.msra.mxu0 0
  %132 = vmatprep.subr.bf16.mxu0 0
  %133 = vmatpush1.bf16.msra.mxu0 0
  %134 = vmatprep.subr.bf16.mxu0 0
  %135 = vmatpush1.bf16.msra.mxu0 0
  %136 = vmatprep.subr.bf16.mxu0 0
  %137 = vmatpush1.bf16.msra.mxu0 0
  %138 = vmatprep.mubr.bf16.mxu0 0
  %139 = vmatmul.mubr.bf16.gmra.mrb[0].mxu0 %v54
  %v140 = vpop.f32.mrb[0].mxu0
  %v141 = vadd.f32 0.0, %v140
  %v142 = vpop.f32.mrb[0].mxu0
  %v143 = vpop.f32.mrb[0].mxu0
  %v144 = vadd.f32 0.0, %v143
  %v145 = vpop.f32.mrb[0].mxu0
  %146 = vmatprep.mubr.bf16.mxu0 0
  %147 = vmatmul.mubr.bf16.gmra.mrb[0].mxu0 %v55
  %v148 = vpop.f32.mrb[0].mxu0
  %v149 = vadd.f32 0.0, %v148
  %v150 = vpop.f32.mrb[0].mxu0
  %v151 = vpop.f32.mrb[0].mxu0
  %v152 = vadd.f32 0.0, %v151
  %v153 = vpop.f32.mrb[0].mxu0
  %154 = vdwg.mxu0
  %v155 = vadd.f32 %v22, %v141
  %v156 = vadd.f32 %v23, %v144
  %v157 = vadd.f32 %v24, %v149
  %v158 = vadd.f32 %v25, %v152
  %159 = vst [vmem:[#allocation2] sm:$0xff] %v155
  %160 = vst [vmem:[#allocation2 + $0x8] sm:$0xff] %v156
  %161 = vst [vmem:[#allocation2 + $0x10] sm:$0xff] %v157
  %162 = vst [vmem:[#allocation2 + $0x18] sm:$0xff] %v158
  // Predicated region
  $region14: #{convnet_forward.25} parent=0 // pred_check
    %p163 = pneg %p14
  $region15: #{convnet_forward.25} parent=0 // pred_check_branch
    %165 = sbr.rel (%p163) target = $region17
  $region16: #{convnet_forward.25} parent=0 // pred_region
    %v166 = vld [vmem:[#allocation2] sm:$0xff]
    %v167 = vld [vmem:[#allocation2 + $0x8] sm:$0xff]
    %v168 = vld [vmem:[#allocation2 + $0x10] sm:$0xff]
    %v169 = vld [vmem:[#allocation2 + $0x18] sm:$0xff]
    %170 = vst [vmem:[%s2] sm:$0xff] %v166
    %171 = vst [vmem:[%s2 + $0x8] sm:$0xff] %v167
    %172 = vst [vmem:[%s2 + $0x10] sm:$0xff] %v168
    %173 = vst [vmem:[%s2 + $0x18] sm:$0xff] %v169
    %v174 = vadd.f32 %v166, %v167
    %v175 = vadd.f32 %v174, %v168
    %v176 = vadd.f32 %v175, %v169
    %v177 = vrot.slane %v176, 4
    %v178 = vadd.f32 %v176, %v177
    %v179 = vrot.slane %v178, 2
    %v180 = vadd.f32 %v178, %v179
    %v181 = vrot.slane %v180, 1
    %v182 = vadd.f32 %v180, %v181
    %v183 = vmul.f32 %v166, %v166
    %v184 = vmul.f32 %v167, %v167
    %v185 = vmul.f32 %v168, %v168
    %v186 = vmul.f32 %v169, %v169
    %v187 = vadd.f32 %v183, %v184
    %v188 = vadd.f32 %v187, %v185
    %v189 = vadd.f32 %v188, %v186
    %v190 = vrot.slane %v189, 4
    %v191 = vadd.f32 %v189, %v190
    %v192 = vrot.slane %v191, 2
    %v193 = vadd.f32 %v191, %v192
    %v194 = vrot.slane %v193, 1
    %v195 = vadd.f32 %v193, %v194
    %vm196 = vcmask 1040384
    %v197 = vsel %vm196, %v182, %v195
    %198 = vst [vmem:[%s3] sm:$0x3] %v197
  $region17: #{convnet_forward.25} parent=0 // pred_fallthru
    _
  // Predicated region
  $region18: #{convnet_forward.25} parent=0 // pred_check
    _
  $region19: #{convnet_forward.25} parent=0 // pred_check_branch
    %200 = sbr.rel (0) target = $region21
  $region20: #{convnet_forward.25} parent=0 // pred_region
    _
  $region21: #{convnet_forward.25} parent=0 // pred_fallthru
    _
  // Predicated region
  $region22: #{convnet_forward.25} parent=0 // pred_check
    _
  $region23: #{convnet_forward.25} parent=0 // pred_check_branch
    %202 = sbr.rel (0) target = $region25
  $region24: #{convnet_forward.25} parent=0 // pred_region
    _
  $region25: #{convnet_forward.25} parent=0 // pred_fallthru
    _
  // Predicated region
  $region26: #{convnet_forward.25} parent=0 // pred_check
    _
  $region27: #{convnet_forward.25} parent=0 // pred_check_branch
    %204 = sbr.rel (0) target = $region29
  $region28: #{convnet_forward.25} parent=0 // pred_region
    _
  $region29: #{convnet_forward.25} parent=0 // pred_fallthru
    _
  // Predicated region
  $region30: #{convnet_forward.25} parent=0 // pred_check
    _
  $region31: #{convnet_forward.25} parent=0 // pred_check_branch
    %206 = sbr.rel (0) target = $region33
  $region32: #{convnet_forward.25} parent=0 // pred_region
    _
  $region33: #{convnet_forward.25} parent=0 // pred_fallthru
    _

// kernel: convnet_forward.24
$region0: #{convnet_forward.24}
  #allocation0 [shape = 'u32[]', space=smem, size = 0x4, offset = 0x4, fixed_abs, tag = 'smem constant byte address 0x4 - core index']
  #allocation1 [shape = 'u32[144,128]{1,0:T(1,128)}', space=vmem, size = 0x12000, scoped, tag = 'internal scratch']
  %s0 = inlined_call_operand.vmem [shape: f32[32,128], index: 0, kind: input, shape index: {}]
  %s1 = inlined_call_operand.vmem [shape: f32[1,128], index: 1, kind: input, shape index: {}]
  %s2 = inlined_call_operand.vmem [shape: f32[1,128], index: 2, kind: input, shape index: {}]
  %s3 = inlined_call_operand.vmem [shape: f32[32,128], index: 3, kind: output, shape index: {}]
  %s4 = sld [smem:[#allocation0]]
  $region22: #{convnet_forward.24} parent=0
    _
  %s6 = ssub.s32 1, %s4
  %s7 = scalar_select 0, %s6, %s4
  // Predicated region
  $region2: #{convnet_forward.24} parent=0 // pred_check
    _
  $region3: #{convnet_forward.24} parent=0 // pred_check_branch
    %9 = sbr.rel (0) target = $region5
  $region4: #{convnet_forward.24} parent=0 // pred_region
    _
  $region5: #{convnet_forward.24} parent=0 // pred_fallthru
    _
  // Predicated region
  $region6: #{convnet_forward.24} parent=0 // pred_check
    _
  $region7: #{convnet_forward.24} parent=0 // pred_check_branch
    %11 = sbr.rel (0) target = $region9
  $region8: #{convnet_forward.24} parent=0 // pred_region
    _
  $region9: #{convnet_forward.24} parent=0 // pred_fallthru
    _
  // Predicated region
  $region10: #{convnet_forward.24} parent=0 // pred_check
    _
  $region11: #{convnet_forward.24} parent=0 // pred_check_branch
    %13 = sbr.rel (0) target = $region13
  $region12: #{convnet_forward.24} parent=0 // pred_region
    _
  $region13: #{convnet_forward.24} parent=0 // pred_fallthru
    _
  %v14 = vld [vmem:[%s0] sm:$0xff]
  %v15 = vld [vmem:[%s0 + $0x8] sm:$0xff]
  %v16 = vld [vmem:[%s0 + $0x10] sm:$0xff]
  %v17 = vld [vmem:[%s0 + $0x18] sm:$0xff]
  %v18 = vld [vmem:[%s1] sm:$0x1]
  %v20 = vlaneseq
  %v21 = vshrl.u32 %v20, 7
  %v22 = vsub.s32 0, %v21
  %v23 = vrot.slane %v18, %v22
  %v25 = vmul.f32 %v14, %v23
  %v26 = vmul.f32 %v15, %v23
  %v27 = vmul.f32 %v16, %v23
  %v28 = vmul.f32 %v17, %v23
  %v29 = vld [vmem:[%s2] sm:$0x1]
  %v31 = vlaneseq
  %v32 = vshrl.u32 %v31, 7
  %v33 = vsub.s32 0, %v32
  %v34 = vrot.slane %v29, %v33
  %v36 = vadd.f32 %v25, %v34
  %v37 = vadd.f32 %v26, %v34
  %v38 = vadd.f32 %v27, %v34
  %v39 = vadd.f32 %v28, %v34
  %v40 = vmax.f32 %v36, 0.0
  %v41 = vmax.f32 %v37, 0.0
  %v42 = vmax.f32 %v38, 0.0
  %v43 = vmax.f32 %v39, 0.0
  %44 = vst [vmem:[%s3] sm:$0xff] %v40
  %45 = vst [vmem:[%s3 + $0x8] sm:$0xff] %v41
  %46 = vst [vmem:[%s3 + $0x10] sm:$0xff] %v42
  %47 = vst [vmem:[%s3 + $0x18] sm:$0xff] %v43
  // Predicated region
  $region14: #{convnet_forward.24} parent=0 // pred_check
    _
  $region15: #{convnet_forward.24} parent=0 // pred_check_branch
    %49 = sbr.rel (0) target = $region17
  $region16: #{convnet_forward.24} parent=0 // pred_region
    _
  $region17: #{convnet_forward.24} parent=0 // pred_fallthru
    _
  // Predicated region
  $region18: #{convnet_forward.24} parent=0 // pred_check
    _
  $region19: #{convnet_forward.24} parent=0 // pred_check_branch
    %51 = sbr.rel (0) target = $region21
  $region20: #{convnet_forward.24} parent=0 // pred_region
    _
  $region21: #{convnet_forward.24} parent=0 // pred_fallthru
    _

// kernel: convnet_forward.23
$region0: #{convnet_forward.23}
  #allocation0 [shape = 'u32[]', space=smem, size = 0x4, offset = 0x4, fixed_abs, tag = 'smem constant byte address 0x4 - core index']
  #allocation1 [shape = 'u32[144,128]{1,0:T(1,128)}', space=vmem, size = 0x12000, scoped, tag = 'internal scratch']
  #allocation2 [shape = 'f32[32,128]{1,0:T(8,128)}', space=vmem, size = 0x4000, scoped, tag = 'scratch operand']
  %s0 = inlined_call_operand.vmem [shape: bf16[32,1152], index: 0, kind: input, shape index: {}]
  %s1 = inlined_call_operand.vmem [shape: bf16[1152,128], index: 1, kind: input, shape index: {}]
  %s2 = inlined_call_operand.vmem [shape: f32[32,128], index: 2, kind: output, shape index: {0}]
  %s3 = inlined_call_operand.vmem [shape: f32[1,2,128], index: 3, kind: output, shape index: {1}]
  %4 = xla_tuple %s2, %s3
  %s5 = sld [smem:[#allocation0]]
  $region83: #{convnet_forward.23} parent=0
    _
  %s7 = ssub.s32 1, %s5
  %s8 = scalar_select 0, %s7, %s5
  $region1: #{convnet_forward.23} parent=0
    #allocation3 [shape = 'u8[49152]{0}', space=vmem, size = 0xc000, scoped, tag = 'input window, operand 0']
    loop: start=0, step=1, limit=5
    $region2: #{convnet_forward.23} parent=1 // loop_pre_header
      _
    $region3: #{convnet_forward.23} parent=1 // loop_header
      %s10 = sphi 0, %s14
      %p11 = scmp.ge.s32.totalorder %s10, 5
      %s17 = sphi 0, %s36
      %s18 = sphi 0, %s32
      %s19 = sphi 0, %s28
      %s20 = sphi 0, %s17
      %s21 = sphi 0, %s18
      %s22 = sphi 0, %s19
      %s23 = sphi 0, %s20
      %s24 = sphi 0, %s21
      %s25 = sphi 0, %s22
      %s41 = sphi 0, %s43
      %s44 = sphi 0, %s41
      %s45 = sphi 0, %s44
      %s61 = sphi 0, %s45
      %s69 = sphi 0, %s71
      %s72 = sphi 0, %s69
      %s73 = sphi 0, %s72
      %s89 = sphi 0, %s73
      %s97 = sphi 0, %s99
      %s100 = sphi 0, %s97
      %s101 = sphi 0, %s100
      %s117 = sphi 0, %s101
      %s125 = sphi 0, %s127
      %s128 = sphi 0, %s125
      %s129 = sphi 0, %s128
      %s145 = sphi 0, %s129
    $region4: #{convnet_forward.23} parent=1 // loop_header_branch
      %13 = sbr.rel (%p11) target = $region8
    $region5: #{convnet_forward.23} parent=1 // loop_body
      %s15 = ssub.s32 %s10, 1
      %s16 = ssub.s32 %s10, 2
      %s26 = sadd.s32 1, %s19
      %p27 = scmp.ge.s32.totalorder %s26, 3
      %s28 = scalar_select %p27, 0, %s26
      %s29 = sadd.s32 1, %s18
      %s30 = scalar_select %p27, %s29, %s18
      %p31 = scmp.ge.s32.totalorder %s30, 1
      %s32 = scalar_select %p31, 0, %s30
      %s33 = sadd.s32 1, %s17
      %s34 = scalar_select %p31, %s33, %s17
      %p35 = scmp.ge.s32.totalorder %s34, 1
      %s36 = scalar_select %p35, 0, %s34
      %s37 = ssub.s32 %s17, %s36
      %s38 = ssub.s32 %s19, %s28
      %s39 = sor.u32 %s37, %s38
      %p40 = scmp.eq.s32.totalorder %s39, 0
      %s42 = sadd.s32 %s41, 1
      %s43 = scalar_select %p40, %s41, %s42
      %p46 = pneg %p40
      %p47 = scmp.eq.s32.totalorder %s10, 2
      %p48 = por %p46, %p47
      %p49 = scmp.ne.s32.totalorder %s41, %s44
      %p50 = scmp.eq.s32.totalorder %s10, 0
      %p51 = por %p49, %p50
      %p52 = scmp.ne.s32.totalorder %s41, %s44
      %p53 = scmp.eq.s32.totalorder %s15, 2
      %p54 = por %p52, %p53
      %p55 = scmp.ne.s32.totalorder %s44, %s45
      %p56 = scmp.eq.s32.totalorder %s15, 0
      %p57 = por %p55, %p56
      %p58 = scmp.ne.s32.totalorder %s44, %s45
      %p59 = scmp.eq.s32.totalorder %s16, 2
      %p60 = por %p58, %p59
      %p62 = scmp.ne.s32.totalorder %s45, %s61
      %p63 = scmp.eq.s32.totalorder %s16, 0
      %p64 = por %p62, %p63
      %s65 = ssub.s32 %s19, %s28
      %s66 = ssub.s32 %s18, %s32
      %s67 = sor.u32 %s65, %s66
      %p68 = scmp.eq.s32.totalorder %s67, 0
      %s70 = sadd.s32 %s69, 1
      %s71 = scalar_select %p68, %s69, %s70
      %p74 = pneg %p68
      %p75 = scmp.eq.s32.totalorder %s10, 2
      %p76 = por %p74, %p75
      %p77 = scmp.ne.s32.totalorder %s69, %s72
      %p78 = scmp.eq.s32.totalorder %s10, 0
      %p79 = por %p77, %p78
      %p80 = scmp.ne.s32.totalorder %s69, %s72
      %p81 = scmp.eq.s32.totalorder %s15, 2
      %p82 = por %p80, %p81
      %p83 = scmp.ne.s32.totalorder %s72, %s73
      %p84 = scmp.eq.s32.totalorder %s15, 0
      %p85 = por %p83, %p84
      %p86 = scmp.ne.s32.totalorder %s72, %s73
      %p87 = scmp.eq.s32.totalorder %s16, 2
      %p88 = por %p86, %p87
      %p90 = scmp.ne.s32.totalorder %s73, %s89
      %p91 = scmp.eq.s32.totalorder %s16, 0
      %p92 = por %p90, %p91
      %s93 = ssub.s32 %s17, %s36
      %s94 = ssub.s32 %s18, %s32
      %s95 = sor.u32 %s93, %s94
      %p96 = scmp.eq.s32.totalorder %s95, 0
      %s98 = sadd.s32 %s97, 1
      %s99 = scalar_select %p96, %s97, %s98
      %p102 = pneg %p96
      %p103 = scmp.eq.s32.totalorder %s10, 2
      %p104 = por %p102, %p103
      %p105 = scmp.ne.s32.totalorder %s97, %s100
      %p106 = scmp.eq.s32.totalorder %s10, 0
      %p107 = por %p105, %p106
      %p108 = scmp.ne.s32.totalorder %s97, %s100
      %p109 = scmp.eq.s32.totalorder %s15, 2
      %p110 = por %p108, %p109
      %p111 = scmp.ne.s32.totalorder %s100, %s101
      %p112 = scmp.eq.s32.totalorder %s15, 0
      %p113 = por %p111, %p112
      %p114 = scmp.ne.s32.totalorder %s100, %s101
      %p115 = scmp.eq.s32.totalorder %s16, 2
      %p116 = por %p114, %p115
      %p118 = scmp.ne.s32.totalorder %s101, %s117
      %p119 = scmp.eq.s32.totalorder %s16, 0
      %p120 = por %p118, %p119
      %s121 = ssub.s32 %s17, %s36
      %s122 = ssub.s32 %s18, %s32
      %s123 = sor.u32 %s121, %s122
      %p124 = scmp.eq.s32.totalorder %s123, 0
      %s126 = sadd.s32 %s125, 1
      %s127 = scalar_select %p124, %s125, %s126
      %p130 = pneg %p124
      %p131 = scmp.eq.s32.totalorder %s10, 2
      %p132 = por %p130, %p131
      %p133 = scmp.ne.s32.totalorder %s125, %s128
      %p134 = scmp.eq.s32.totalorder %s10, 0
      %p135 = por %p133, %p134
      %p136 = scmp.ne.s32.totalorder %s125, %s128
      %p137 = scmp.eq.s32.totalorder %s15, 2
      %p138 = por %p136, %p137
      %p139 = scmp.ne.s32.totalorder %s128, %s129
      %p140 = scmp.eq.s32.totalorder %s15, 0
      %p141 = por %p139, %p140
      %p142 = scmp.ne.s32.totalorder %s128, %s129
      %p143 = scmp.eq.s32.totalorder %s16, 2
      %p144 = por %p142, %p143
      %p146 = scmp.ne.s32.totalorder %s129, %s145
      %p147 = scmp.eq.s32.totalorder %s16, 0
      %p148 = por %p146, %p147
      %p149 = scmp.le.s32.totalorder 1, %s10
      %p150 = scmp.lt.s32.totalorder %s10, 4
      %p151 = pnand %p149, %p150
      %p152 = pneg %p151
      // Predicated region
      $region9: #{convnet_forward.23} parent=5 // pred_check
        _
      $region10: #{convnet_forward.23} parent=5 // pred_check_branch
        %154 = sbr.rel (%p151) target = $region12
      $region11: #{convnet_forward.23} parent=5 // pred_region
        %s155 = ssub.s32 %s10, 1
      $region12: #{convnet_forward.23} parent=5 // pred_fallthru
        _
      %p156 = scmp.lt.s32.totalorder %s10, 3
      // Predicated region
      $region13: #{convnet_forward.23} parent=5 // pred_check
        %p157 = pneg %p156
      $region14: #{convnet_forward.23} parent=5 // pred_check_branch
        %159 = sbr.rel (%p157) target = $region16
      $region15: #{convnet_forward.23} parent=5 // pred_region
        // Predicated region
        $region17: #{convnet_forward.23} parent=15 // pred_check
          %p160 = pneg %p51
        $region18: #{convnet_forward.23} parent=15 // pred_check_branch
          %162 = sbr.rel (%p160) target = $region20
        $region19: #{convnet_forward.23} parent=15 // pred_region
          %s163 = sand.u32 %s41, 1
          %s164 = sand.u32 %s41, 1
          %s165 = smul.addr %s164, 48
          %s166 = scalar_lea.vmem [#allocation3], %s165
          %s167 = smul.u32 4, %s17
          %s168 = smul.u32 3, %s19
          %s169 = smul.addr %s167, 9
          %s170 = sadd.s32 %s168, %s169
          %s171 = smul.addr %s170, 4
          %s172 = scalar_lea.vmem %s0, %s171
          // Predicated region
          $region21: #{convnet_forward.23} parent=19 // pred_check
            _
          $region22: #{convnet_forward.23} parent=19 // pred_check_branch
            %174 = sbr.rel (0) target = $region24
          $region23: #{convnet_forward.23} parent=19 // pred_region
            // Predicated region
            $region25: #{convnet_forward.23} parent=23 // pred_check
              _
            $region26: #{convnet_forward.23} parent=23 // pred_check_branch
              %176 = sbr.rel (0) target = $region28
            $region27: #{convnet_forward.23} parent=23 // pred_region
              %s177 = scalar_lea.vmem %s172, 8
              %s178 = scalar_lea.vmem %s166, 8 [#allocation3]
              loop: start=0, step=1, limit=1
              $region29: #{convnet_forward.23} parent=27 // loop_pre_header
                _
              $region30: #{convnet_forward.23} parent=27 // loop_header
                %s180 = sphi 0, %s184
                %p181 = scmp.ge.s32.totalorder %s180, 1
                %s185 = sphi %s172, %s172
                %s186 = sphi %s166, %s166
              $region31: #{convnet_forward.23} parent=27 // loop_header_branch
                %183 = sbr.rel (%p181) target = $region35
              $region32: #{convnet_forward.23} parent=27 // loop_body
                %v187 = vld [vmem:[%s185] sm:$0xff]
                %188 = vst [vmem:[%s186] sm:$0xff] %v187
                %v189 = vld [vmem:[%s185 + $0x24] sm:$0xff]
                %190 = vst [vmem:[%s186 + $0xc] sm:$0xff] %v189
                %v191 = vld [vmem:[%s185 + $0x48] sm:$0xff]
                %192 = vst [vmem:[%s186 + $0x18] sm:$0xff] %v191
                %v193 = vld [vmem:[%s185 + $0x6c] sm:$0xff]
                %194 = vst [vmem:[%s186 + $0x24] sm:$0xff] %v193
              $region33: #{convnet_forward.23} parent=27 // loop_footer
                %s184 = sadd.s32 1, %s180
              $region34: #{convnet_forward.23} parent=27 // loop_footer_branch
                %179 = sbr.rel target = $region30
              $region35: #{convnet_forward.23} parent=27 // loop_exit
                _
              loop: start=0, step=1, limit=1
              $region36: #{convnet_forward.23} parent=27 // loop_pre_header
                _
              $region37: #{convnet_forward.23} parent=27 // loop_header
                %s197 = sphi 0, %s201
                %p198 = scmp.ge.s32.totalorder %s197, 1
                %s202 = sphi %s177, %s177
                %s203 = sphi %s178, %s178
              $region38: #{convnet_forward.23} parent=27 // loop_header_branch
                %200 = sbr.rel (%p198) target = $region42
              $region39: #{convnet_forward.23} parent=27 // loop_body
                %v204 = vld [vmem:[%s202] sm:$0xf]
                %205 = vst [vmem:[%s203] sm:$0xf] %v204
                %v206 = vld [vmem:[%s202 + $0x24] sm:$0xf]
                %207 = vst [vmem:[%s203 + $0xc] sm:$0xf] %v206
                %v208 = vld [vmem:[%s202 + $0x48] sm:$0xf]
                %209 = vst [vmem:[%s203 + $0x18] sm:$0xf] %v208
                %v210 = vld [vmem:[%s202 + $0x6c] sm:$0xf]
                %211 = vst [vmem:[%s203 + $0x24] sm:$0xf] %v210
              $region40: #{convnet_forward.23} parent=27 // loop_footer
                %s201 = sadd.s32 1, %s197
              $region41: #{convnet_forward.23} parent=27 // loop_footer_branch
                %196 = sbr.rel target = $region37
              $region42: #{convnet_forward.23} parent=27 // loop_exit
                _
            $region28: #{convnet_forward.23} parent=23 // pred_fallthru
              _
          $region24: #{convnet_forward.23} parent=19 // pred_fallthru
            _
          %212 = vnop
        $region20: #{convnet_forward.23} parent=15 // pred_fallthru
          _
        // Predicated region
        $region43: #{convnet_forward.23} parent=15 // pred_check
          %p213 = pneg %p79
        $region44: #{convnet_forward.23} parent=15 // pred_check_branch
          %215 = sbr.rel (%p213) target = $region46
        $region45: #{convnet_forward.23} parent=15 // pred_region
          %s216 = smul.u32 48, %s19
          %p217 = scmp.lt.s32.totalorder %s216, 143
          %s218 = scalar_select %p217, %s216, 143
          %p219 = scmp.lt.s32.totalorder %s18, 0
          %s220 = scalar_select %p219, %s18, 0
          %s221 = sadd.s32 %s220, %s218
          %s222 = smul.addr %s221, 4
          %s223 = scalar_lea.vmem %s1, %s222
          %s224 = smul.u32 48, %s19
        $region46: #{convnet_forward.23} parent=15 // pred_fallthru
          _
      $region16: #{convnet_forward.23} parent=5 // pred_fallthru
        _
      %p225 = scmp.le.s32.totalorder 1, %s10
      %p226 = scmp.lt.s32.totalorder %s10, 4
      %p227 = pnand %p225, %p226
      %p228 = pneg %p227
      // Predicated region
      $region47: #{convnet_forward.23} parent=5 // pred_check
        _
      $region48: #{convnet_forward.23} parent=5 // pred_check_branch
        %230 = sbr.rel (%p227) target = $region50
      $region49: #{convnet_forward.23} parent=5 // pred_region
        %s231 = ssub.s32 %s10, 1
        %s232 = sand.u32 %s44, 1
        %s233 = sand.u32 %s44, 1
        %s234 = smul.addr %s233, 48
        %s235 = scalar_lea.vmem [#allocation3], %s234
        // Predicated region
        $region51: #{convnet_forward.23} parent=49 // pred_check
          %p236 = pneg %p57
        $region52: #{convnet_forward.23} parent=49 // pred_check_branch
          %238 = sbr.rel (%p236) target = $region54
        $region53: #{convnet_forward.23} parent=49 // pred_region
          _
        $region54: #{convnet_forward.23} parent=49 // pred_fallthru
          _
        %s239 = sand.u32 %s44, 1
        %s240 = sand.u32 %s44, 1
        %s241 = smul.addr %s240, 48
        %s242 = scalar_lea.vmem [#allocation3], %s241
        %p243 = pneg %p57
        %p244 = pneg %p54
        %s245 = smul.u32 48, %s22
        %p246 = scmp.lt.s32.totalorder %s245, 143
        %s247 = scalar_select %p246, %s245, 143
        %p248 = scmp.lt.s32.totalorder %s21, 0
        %s249 = scalar_select %p248, %s21, 0
        %s250 = sadd.s32 %s249, %s247
        %s251 = smul.addr %s250, 4
        %s252 = scalar_lea.vmem %s1, %s251
        %p253 = pneg %p85
        %p254 = pneg %p82
        %p255 = pneg %p113
        %p256 = pneg %p110
        %s257 = smul.u32 4, %s20
        %p258 = scmp.lt.s32.totalorder %s257, 3
        %s259 = scalar_select %p258, %s257, 3
        %p260 = scmp.lt.s32.totalorder %s21, 0
        %s261 = scalar_select %p260, %s21, 0
        %s262 = sadd.s32 %s261, %s259
        %s263 = smul.addr %s262, 8
        %s264 = scalar_lea.vmem %s2, %s263
        %p265 = pneg %p141
        %p266 = pneg %p138
        %p267 = scmp.lt.s32.totalorder %s20, 0
        %s268 = scalar_select %p267, %s20, 0
        %p269 = scmp.lt.s32.totalorder %s21, 0
        %s270 = scalar_select %p269, %s21, 0
        %s271 = sadd.s32 %s270, %s268
        %s272 = smul.addr %s271, 2
        %s273 = scalar_lea.vmem %s3, %s272
        %s274 = smul.u32 4, %s20
        %s275 = smul.u32 3, %s22
        %s276 = smul.u32 48, %s22
        %p277 = scmp.lt.s32.totalorder %s276, 143
        %s278 = scalar_select %p277, %s276, 143
        %p279 = scmp.lt.s32.totalorder %s21, 0
        %s280 = scalar_select %p279, %s21, 0
        %s281 = sadd.s32 %s280, %s278
        %s282 = smul.addr %s281, 4
        %s283 = scalar_lea.vmem %s1, %s282
        %s284 = smul.u32 48, %s22
        %s285 = smul.u32 4, %s20
        %p286 = scmp.lt.s32.totalorder %s285, 3
        %s287 = scalar_select %p286, %s285, 3
        %p288 = scmp.lt.s32.totalorder %s21, 0
        %s289 = scalar_select %p288, %s21, 0
        %s290 = sadd.s32 %s289, %s287
        %s291 = smul.addr %s290, 8
        %s292 = scalar_lea.vmem %s2, %s291
        %s293 = smul.u32 4, %s20
        %p294 = scmp.lt.s32.totalorder %s20, 0
        %s295 = scalar_select %p294, %s20, 0
        %p296 = scmp.lt.s32.totalorder %s21, 0
        %s297 = scalar_select %p296, %s21, 0
        %s298 = sadd.s32 %s297, %s295
        %s299 = smul.addr %s298, 2
        %s300 = scalar_lea.vmem %s3, %s299
        %p302 = scmp.eq.s32.totalorder %s22, 0
        // Predicated region
        $region55: #{convnet_forward.23} parent=49 // pred_check
          %p303 = pneg %p302
        $region56: #{convnet_forward.23} parent=49 // pred_check_branch
          %305 = sbr.rel (%p303) target = $region58
        $region57: #{convnet_forward.23} parent=49 // pred_region
          %306 = vst [vmem:[#allocation2] sm:$0xff] 0.0
          %307 = vst [vmem:[#allocation2 + $0x8] sm:$0xff] 0.0
          %308 = vst [vmem:[#allocation2 + $0x10] sm:$0xff] 0.0
          %309 = vst [vmem:[#allocation2 + $0x18] sm:$0xff] 0.0
        $region58: #{convnet_forward.23} parent=49 // pred_fallthru
          _
        %v310 = vld [vmem:[#allocation2] sm:$0xff]
        %v311 = vld [vmem:[#allocation2 + $0x8] sm:$0xff]
        %v312 = vld [vmem:[#allocation2 + $0x10] sm:$0xff]
        %v313 = vld [vmem:[#allocation2 + $0x18] sm:$0xff]
        %v314 = vld [vmem:[%s235] sm:$0xff]
        %v315 = vld [vmem:[%s235 + $0x8] sm:$0xf]
        %v316 = vld [vmem:[%s235 + $0xc] sm:$0xff]
        %v317 = vld [vmem:[%s235 + $0x14] sm:$0xf]
        %v318 = vld [vmem:[%s235 + $0x18] sm:$0xff]
        %v319 = vld [vmem:[%s235 + $0x20] sm:$0xf]
        %v320 = vld [vmem:[%s235 + $0x24] sm:$0xff]
        %v321 = vld [vmem:[%s235 + $0x2c] sm:$0xf]
        %v322 = vld [vmem:[%s283] sm:$0xf]
        %v323 = vld [vmem:[%s283 + $0x4] sm:$0xf]
        %v324 = vld [vmem:[%s283 + $0x8] sm:$0xf]
        %v325 = vld [vmem:[%s283 + $0xc] sm:$0xf]
        %v326 = vld [vmem:[%s283 + $0x10] sm:$0xf]
        %v327 = vld [vmem:[%s283 + $0x14] sm:$0xf]
        %v328 = vld [vmem:[%s283 + $0x18] sm:$0xf]
        %v329 = vld [vmem:[%s283 + $0x1c] sm:$0xf]
        %v330 = vld [vmem:[%s283 + $0x20] sm:$0xf]
        %v331 = vld [vmem:[%s283 + $0x24] sm:$0xf]
        %v332 = vld [vmem:[%s283 + $0x28] sm:$0xf]
        %v333 = vld [vmem:[%s283 + $0x2c] sm:$0xf]
        %v334 = vld [vmem:[%s283 + $0x30] sm:$0xf]
        %v335 = vld [vmem:[%s283 + $0x34] sm:$0xf]
        %v336 = vld [vmem:[%s283 + $0x38] sm:$0xf]
        %v337 = vld [vmem:[%s283 + $0x3c] sm:$0xf]
        %v338 = vld [vmem:[%s283 + $0x40] sm:$0xf]
        %v339 = vld [vmem:[%s283 + $0x44] sm:$0xf]
        %v340 = vld [vmem:[%s283 + $0x48] sm:$0xf]
        %v341 = vld [vmem:[%s283 + $0x4c] sm:$0xf]
        %v342 = vld [vmem:[%s283 + $0x50] sm:$0xf]
        %v343 = vld [vmem:[%s283 + $0x54] sm:$0xf]
        %v344 = vld [vmem:[%s283 + $0x58] sm:$0xf]
        %v345 = vld [vmem:[%s283 + $0x5c] sm:$0xf]
        %v346 = vld [vmem:[%s283 + $0x60] sm:$0xf]
        %v347 = vld [vmem:[%s283 + $0x64] sm:$0xf]
        %v348 = vld [vmem:[%s283 + $0x68] sm:$0xf]
        %v349 = vld [vmem:[%s283 + $0x6c] sm:$0xf]
        %v350 = vld [vmem:[%s283 + $0x70] sm:$0xf]
        %v351 = vld [vmem:[%s283 + $0x74] sm:$0xf]
        %v352 = vld [vmem:[%s283 + $0x78] sm:$0xf]
        %v353 = vld [vmem:[%s283 + $0x7c] sm:$0xf]
        %v354 = vld [vmem:[%s283 + $0x80] sm:$0xf]
        %v355 = vld [vmem:[%s283 + $0x84] sm:$0xf]
        %v356 = vld [vmem:[%s283 + $0x88] sm:$0xf]
        %v357 = vld [vmem:[%s283 + $0x8c] sm:$0xf]
        %v358 = vld [vmem:[%s283 + $0x90] sm:$0xf]
        %v359 = vld [vmem:[%s283 + $0x94] sm:$0xf]
        %v360 = vld [vmem:[%s283 + $0x98] sm:$0xf]
        %v361 = vld [vmem:[%s283 + $0x9c] sm:$0xf]
        %v362 = vld [vmem:[%s283 + $0xa0] sm:$0xf]
        %v363 = vld [vmem:[%s283 + $0xa4] sm:$0xf]
        %v364 = vld [vmem:[%s283 + $0xa8] sm:$0xf]
        %v365 = vld [vmem:[%s283 + $0xac] sm:$0xf]
        %v366 = vld [vmem:[%s283 + $0xb0] sm:$0xf]
        %v367 = vld [vmem:[%s283 + $0xb4] sm:$0xf]
        %v368 = vld [vmem:[%s283 + $0xb8] sm:$0xf]
        %v369 = vld [vmem:[%s283 + $0xbc] sm:$0xf]
        %v378 = vunpack.c.l.b16 %v314
        %v379 = vunpack.c.h.b16 %v314
        %v380 = vunpack.c.l.b16 %v315
        %v381 = vunpack.c.l.b16 %v316
        %v382 = vunpack.c.h.b16 %v316
        %v383 = vunpack.c.l.b16 %v317
        %v384 = vunpack.c.l.b16 %v318
        %v385 = vunpack.c.h.b16 %v318
        %v386 = vunpack.c.l.b16 %v319
        %v387 = vunpack.c.l.b16 %v320
        %v388 = vunpack.c.h.b16 %v320
        %v389 = vunpack.c.l.b16 %v321
        %v390 = vpack.c.b16 %v381, %v378
        %v391 = vpack.c.b16 %v382, %v379
        %v392 = vpack.c.b16 %v383, %v380
        %v393 = vpack.c.b16 %v387, %v384
        %v394 = vpack.c.b16 %v388, %v385
        %v395 = vpack.c.b16 %v389, %v386
        %v450 = vunpack.c.l.b16 %v322
        %v451 = vunpack.c.l.b16 %v323
        %v452 = vunpack.c.l.b16 %v324
        %v453 = vunpack.c.l.b16 %v325
        %v454 = vunpack.c.l.b16 %v326
        %v455 = vunpack.c.l.b16 %v327
        %v456 = vunpack.c.l.b16 %v328
        %v457 = vunpack.c.l.b16 %v329
        %v458 = vunpack.c.l.b16 %v330
        %v459 = vunpack.c.l.b16 %v331
        %v460 = vunpack.c.l.b16 %v332
        %v461 = vunpack.c.l.b16 %v333
        %v462 = vunpack.c.l.b16 %v334
        %v463 = vunpack.c.l.b16 %v335
        %v464 = vunpack.c.l.b16 %v336
        %v465 = vunpack.c.l.b16 %v337
        %v466 = vunpack.c.l.b16 %v338
        %v467 = vunpack.c.l.b16 %v339
        %v468 = vunpack.c.l.b16 %v340
        %v469 = vunpack.c.l.b16 %v341
        %v470 = vunpack.c.l.b16 %v342
        %v471 = vunpack.c.l.b16 %v343
        %v472 = vunpack.c.l.b16 %v344
        %v473 = vunpack.c.l.b16 %v345
        %v474 = vunpack.c.l.b16 %v346
        %v475 = vunpack.c.l.b16 %v347
        %v476 = vunpack.c.l.b16 %v348
        %v477 = vunpack.c.l.b16 %v349
        %v478 = vunpack.c.l.b16 %v350
        %v479 = vunpack.c.l.b16 %v351
        %v480 = vunpack.c.l.b16 %v352
        %v481 = vunpack.c.l.b16 %v353
        %v482 = vunpack.c.l.b16 %v354
        %v483 = vunpack.c.l.b16 %v355
        %v484 = vunpack.c.l.b16 %v356
        %v485 = vunpack.c.l.b16 %v357
        %v486 = vunpack.c.l.b16 %v358
        %v487 = vunpack.c.l.b16 %v359
        %v488 = vunpack.c.l.b16 %v360
        %v489 = vunpack.c.l.b16 %v361
        %v490 = vunpack.c.l.b16 %v362
        %v491 = vunpack.c.l.b16 %v363
        %v492 = vunpack.c.l.b16 %v364
        %v493 = vunpack.c.l.b16 %v365
        %v494 = vunpack.c.l.b16 %v366
        %v495 = vunpack.c.l.b16 %v367
        %v496 = vunpack.c.l.b16 %v368
        %v497 = vunpack.c.l.b16 %v369
        %v498 = vpack.c.b16 %v451, %v450
        %v499 = vpack.c.b16 %v453, %v452
        %v500 = vpack.c.b16 %v455, %v454
        %v501 = vpack.c.b16 %v457, %v456
        %v502 = vpack.c.b16 %v459, %v458
        %v503 = vpack.c.b16 %v461, %v460
        %v504 = vpack.c.b16 %v463, %v462
        %v505 = vpack.c.b16 %v465, %v464
        %v506 = vpack.c.b16 %v467, %v466
        %v507 = vpack.c.b16 %v469, %v468
        %v508 = vpack.c.b16 %v471, %v470
        %v509 = vpack.c.b16 %v473, %v472
        %v510 = vpack.c.b16 %v475, %v474
        %v511 = vpack.c.b16 %v477, %v476
        %v512 = vpack.c.b16 %v479, %v478
        %v513 = vpack.c.b16 %v481, %v480
        %v514 = vpack.c.b16 %v483, %v482
        %v515 = vpack.c.b16 %v485, %v484
        %v516 = vpack.c.b16 %v487, %v486
        %v517 = vpack.c.b16 %v489, %v488
        %v518 = vpack.c.b16 %v491, %v490
        %v519 = vpack.c.b16 %v493, %v492
        %v520 = vpack.c.b16 %v495, %v494
        %v521 = vpack.c.b16 %v497, %v496
        %546 = vmatprep.subr.bf16.mxu0 0
        %547 = vmatpush1.bf16.msra.mxu0 %v498
        %548 = vmatprep.subr.bf16.mxu0 0
        %549 = vmatpush1.bf16.msra.mxu0 %v499
        %550 = vmatprep.subr.bf16.mxu0 0
        %551 = vmatpush1.bf16.msra.mxu0 %v500
        %552 = vmatprep.subr.bf16.mxu0 0
        %553 = vmatpush1.bf16.msra.mxu0 %v501
        %554 = vmatprep.subr.bf16.mxu0 0
        %555 = vmatpush1.bf16.msra.mxu0 %v502
        %556 = vmatprep.subr.bf16.mxu0 0
        %557 = vmatpush1.bf16.msra.mxu0 %v503
        %558 = vmatprep.subr.bf16.mxu0 0
        %559 = vmatpush1.bf16.msra.mxu0 %v504
        %560 = vmatprep.subr.bf16.mxu0 0
        %561 = vmatpush1.bf16.msra.mxu0 %v505
        %562 = vmatprep.subr.bf16.mxu0 0
        %563 = vmatpush1.bf16.msra.mxu0 %v506
        %564 = vmatprep.subr.bf16.mxu0 0
        %565 = vmatpush1.bf16.msra.mxu0 %v507
        %566 = vmatprep.subr.bf16.mxu0 0
        %567 = vmatpush1.bf16.msra.mxu0 %v508
        %568 = vmatprep.subr.bf16.mxu0 0
        %569 = vmatpush1.bf16.msra.mxu0 %v509
        %570 = vmatprep.subr.bf16.mxu0 0
        %571 = vmatpush1.bf16.msra.mxu0 %v510
        %572 = vmatprep.subr.bf16.mxu0 0
        %573 = vmatpush1.bf16.msra.mxu0 %v511
        %574 = vmatprep.subr.bf16.mxu0 0
        %575 = vmatpush1.bf16.msra.mxu0 %v512
        %576 = vmatprep.subr.bf16.mxu0 0
        %577 = vmatpush1.bf16.msra.mxu0 %v513
        %578 = vmatprep.mubr.bf16.mxu0 %v391
        %579 = vmatmul.mubr.bf16.gmra.mrb[0].mxu0 %v390
        %v580 = vpop.f32.mrb[0].mxu0
        %v581 = vadd.f32 0.0, %v580
        %v582 = vpop.f32.mrb[0].mxu0
        %v583 = vpop.f32.mrb[0].mxu0
        %v584 = vadd.f32 0.0, %v583
        %v585 = vpop.f32.mrb[0].mxu0
        %586 = vmatprep.mubr.bf16.mxu0 %v394
        %587 = vmatmul.mubr.bf16.gmra.mrb[0].mxu0 %v393
        %v588 = vpop.f32.mrb[0].mxu0
        %v589 = vadd.f32 0.0, %v588
        %v590 = vpop.f32.mrb[0].mxu0
        %v591 = vpop.f32.mrb[0].mxu0
        %v592 = vadd.f32 0.0, %v591
        %v593 = vpop.f32.mrb[0].mxu0
        %594 = vdwg.mxu0
        %595 = vmatprep.subr.bf16.mxu0 0
        %596 = vmatpush1.bf16.msra.mxu0 %v514
        %597 = vmatprep.subr.bf16.mxu0 0
        %598 = vmatpush1.bf16.msra.mxu0 %v515
        %599 = vmatprep.subr.bf16.mxu0 0
        %600 = vmatpush1.bf16.msra.mxu0 %v516
        %601 = vmatprep.subr.bf16.mxu0 0
        %602 = vmatpush1.bf16.msra.mxu0 %v517
        %603 = vmatprep.subr.bf16.mxu0 0
        %604 = vmatpush1.bf16.msra.mxu0 %v518
        %605 = vmatprep.subr.bf16.mxu0 0
        %606 = vmatpush1.bf16.msra.mxu0 %v519
        %607 = vmatprep.subr.bf16.mxu0 0
        %608 = vmatpush1.bf16.msra.mxu0 %v520
        %609 = vmatprep.subr.bf16.mxu0 0
        %610 = vmatpush1.bf16.msra.mxu0 %v521
        %611 = vmatprep.subr.bf16.mxu0 0
        %612 = vmatpush1.bf16.msra.mxu0 0
        %613 = vmatprep.subr.bf16.mxu0 0
        %614 = vmatpush1.bf16.msra.mxu0 0
        %615 = vmatprep.subr.bf16.mxu0 0
        %616 = vmatpush1.bf16.msra.mxu0 0
        %617 = vmatprep.subr.bf16.mxu0 0
        %618 = vmatpush1.bf16.msra.mxu0 0
        %619 = vmatprep.subr.bf16.mxu0 0
        %620 = vmatpush1.bf16.msra.mxu0 0
        %621 = vmatprep.subr.bf16.mxu0 0
        %622 = vmatpush1.bf16.msra.mxu0 0
        %623 = vmatprep.subr.bf16.mxu0 0
        %624 = vmatpush1.bf16.msra.mxu0 0
        %625 = vmatprep.subr.bf16.mxu0 0
        %626 = vmatpush1.bf16.msra.mxu0 0
        %627 = vmatprep.mubr.bf16.mxu0 0
        %628 = vmatmul.mubr.bf16.gmra.mrb[0].mxu0 %v392
        %v629 = vpop.f32.mrb[0].mxu0
        %v630 = vadd.f32 %v581, %v629
        %v631 = vpop.f32.mrb[0].mxu0
        %v632 = vpop.f32.mrb[0].mxu0
        %v633 = vadd.f32 %v584, %v632
        %v634 = vpop.f32.mrb[0].mxu0
        %635 = vmatprep.mubr.bf16.mxu0 0
        %636 = vmatmul.mubr.bf16.gmra.mrb[0].mxu0 %v395
        %v637 = vpop.f32.mrb[0].mxu0
        %v638 = vadd.f32 %v589, %v637
        %v639 = vpop.f32.mrb[0].mxu0
        %v640 = vpop.f32.mrb[0].mxu0
        %v641 = vadd.f32 %v592, %v640
        %v642 = vpop.f32.mrb[0].mxu0
        %643 = vdwg.mxu0
        %v644 = vadd.f32 %v310, %v630
        %v645 = vadd.f32 %v311, %v633
        %v646 = vadd.f32 %v312, %v638
        %v647 = vadd.f32 %v313, %v641
        %648 = vst [vmem:[#allocation2] sm:$0xff] %v644
        %649 = vst [vmem:[#allocation2 + $0x8] sm:$0xff] %v645
        %650 = vst [vmem:[#allocation2 + $0x10] sm:$0xff] %v646
        %651 = vst [vmem:[#allocation2 + $0x18] sm:$0xff] %v647
        %p652 = scmp.eq.s32.totalorder %s22, 2
        // Predicated region
        $region59: #{convnet_forward.23} parent=49 // pred_check
          %p653 = pneg %p652
        $region60: #{convnet_forward.23} parent=49 // pred_check_branch
          %655 = sbr.rel (%p653) target = $region62
        $region61: #{convnet_forward.23} parent=49 // pred_region
          %v656 = vld [vmem:[#allocation2] sm:$0xff]
          %v657 = vld [vmem:[#allocation2 + $0x8] sm:$0xff]
          %v658 = vld [vmem:[#allocation2 + $0x10] sm:$0xff]
          %v659 = vld [vmem:[#allocation2 + $0x18] sm:$0xff]
          %660 = vst [vmem:[%s292] sm:$0xff] %v656
          %661 = vst [vmem:[%s292 + $0x8] sm:$0xff] %v657
          %662 = vst [vmem:[%s292 + $0x10] sm:$0xff] %v658
          %663 = vst [vmem:[%s292 + $0x18] sm:$0xff] %v659
          %v664 = vadd.f32 %v656, %v657
          %v665 = vadd.f32 %v664, %v658
          %v666 = vadd.f32 %v665, %v659
          %v667 = vrot.slane %v666, 4
          %v668 = vadd.f32 %v666, %v667
          %v669 = vrot.slane %v668, 2
          %v670 = vadd.f32 %v668, %v669
          %v671 = vrot.slane %v670, 1
          %v672 = vadd.f32 %v670, %v671
          %v673 = vmul.f32 %v656, %v656
          %v674 = vmul.f32 %v657, %v657
          %v675 = vmul.f32 %v658, %v658
          %v676 = vmul.f32 %v659, %v659
          %v677 = vadd.f32 %v673, %v674
          %v678 = vadd.f32 %v677, %v675
          %v679 = vadd.f32 %v678, %v676
          %v680 = vrot.slane %v679, 4
          %v681 = vadd.f32 %v679, %v680
          %v682 = vrot.slane %v681, 2
          %v683 = vadd.f32 %v681, %v682
          %v684 = vrot.slane %v683, 1
          %v685 = vadd.f32 %v683, %v684
          %vm686 = vcmask 1040384
          %v687 = vsel %vm686, %v672, %v685
          %688 = vst [vmem:[%s300] sm:$0x3] %v687
        $region62: #{convnet_forward.23} parent=49 // pred_fallthru
          _
        %s689 = smul.u32 4, %s20
        %p690 = scmp.lt.s32.totalorder %s689, 3
        %s691 = scalar_select %p690, %s689, 3
        %p692 = scmp.lt.s32.totalorder %s21, 0
        %s693 = scalar_select %p692, %s21, 0
        %s694 = sadd.s32 %s693, %s691
        %s695 = smul.addr %s694, 8
        %s696 = scalar_lea.vmem %s2, %s695
        %p697 = scmp.lt.s32.totalorder %s20, 0
        %s698 = scalar_select %p697, %s20, 0
        %p699 = scmp.lt.s32.totalorder %s21, 0
        %s700 = scalar_select %p699, %s21, 0
        %s701 = sadd.s32 %s700, %s698
        %s702 = smul.addr %s701, 2
        %s703 = scalar_lea.vmem %s3, %s702
        // Predicated region
        $region63: #{convnet_forward.23} parent=49 // pred_check
          %p704 = pneg %p110
        $region64: #{convnet_forward.23} parent=49 // pred_check_branch
          %706 = sbr.rel (%p704) target = $region66
        $region65: #{convnet_forward.23} parent=49 // pred_region
          %s707 = smul.u32 4, %s20
        $region66: #{convnet_forward.23} parent=49 // pred_fallthru
          _
        // Predicated region
        $region67: #{convnet_forward.23} parent=49 // pred_check
          %p708 = pneg %p138
        $region68: #{convnet_forward.23} parent=49 // pred_check_branch
          %710 = sbr.rel (%p708) target = $region70
        $region69: #{convnet_forward.23} parent=49 // pred_region
          _
        $region70: #{convnet_forward.23} parent=49 // pred_fallthru
          _
        // Predicated region
        $region71: #{convnet_forward.23} parent=49 // pred_check
          %p711 = pneg %p110
        $region72: #{convnet_forward.23} parent=49 // pred_check_branch
          %713 = sbr.rel (%p711) target = $region74
        $region73: #{convnet_forward.23} parent=49 // pred_region
          %s714 = smul.u32 4, %s20
          %p715 = scmp.lt.s32.totalorder %s714, 3
          %s716 = scalar_select %p715, %s714, 3
          %p717 = scmp.lt.s32.totalorder %s21, 0
          %s718 = scalar_select %p717, %s21, 0
          %s719 = sadd.s32 %s718, %s716
          %s720 = smul.addr %s719, 8
          %s721 = scalar_lea.vmem %s2, %s720
        $region74: #{convnet_forward.23} parent=49 // pred_fallthru
          _
        // Predicated region
        $region75: #{convnet_forward.23} parent=49 // pred_check
          %p722 = pneg %p138
        $region76: #{convnet_forward.23} parent=49 // pred_check_branch
          %724 = sbr.rel (%p722) target = $region78
        $region77: #{convnet_forward.23} parent=49 // pred_region
          %p725 = scmp.lt.s32.totalorder %s20, 0
          %s726 = scalar_select %p725, %s20, 0
          %p727 = scmp.lt.s32.totalorder %s21, 0
          %s728 = scalar_select %p727, %s21, 0
          %s729 = sadd.s32 %s728, %s726
          %s730 = smul.addr %s729, 2
          %s731 = scalar_lea.vmem %s3, %s730
        $region78: #{convnet_forward.23} parent=49 // pred_fallthru
          _
      $region50: #{convnet_forward.23} parent=5 // pred_fallthru
        _
      %p732 = scmp.le.s32.totalorder 2, %s10
      // Predicated region
      $region79: #{convnet_forward.23} parent=5 // pred_check
        %p733 = pneg %p732
      $region80: #{convnet_forward.23} parent=5 // pred_check_branch
        %735 = sbr.rel (%p733) target = $region82
      $region81: #{convnet_forward.23} parent=5 // pred_region
        %s736 = ssub.s32 %s10, 2
      $region82: #{convnet_forward.23} parent=5 // pred_fallthru
        _
    $region6: #{convnet_forward.23} parent=1 // loop_footer
      %s14 = sadd.s32 1, %s10
    $region7: #{convnet_forward.23} parent=1 // loop_footer_branch
      %9 = sbr.rel target = $region3
    $region8: #{convnet_forward.23} parent=1 // loop_exit
      _

// kernel: convnet_forward.28
$region0: #{convnet_forward.28}
  #allocation0 [shape = 'u32[]', space=smem, size = 0x4, offset = 0x4, fixed_abs, tag = 'smem constant byte address 0x4 - core index']
  #allocation1 [shape = 'u32[144,128]{1,0:T(1,128)}', space=vmem, size = 0x12000, scoped, tag = 'internal scratch']
  %s0 = inlined_call_operand.vmem [shape: f32[32,128], index: 0, kind: input, shape index: {}]
  %s1 = inlined_call_operand.vmem [shape: f32[1,128], index: 1, kind: input, shape index: {}]
  %s2 = inlined_call_operand.vmem [shape: f32[1,128], index: 2, kind: input, shape index: {}]
  %s3 = inlined_call_operand.vmem [shape: f32[32,128], index: 3, kind: input, shape index: {}]
  %s4 = inlined_call_operand.vmem [shape: f32[32,128], index: 4, kind: output, shape index: {}]
  %s5 = sld [smem:[#allocation0]]
  $region26: #{convnet_forward.28} parent=0
    _
  %s7 = ssub.s32 1, %s5
  %s8 = scalar_select 0, %s7, %s5
  // Predicated region
  $region2: #{convnet_forward.28} parent=0 // pred_check
    _
  $region3: #{convnet_forward.28} parent=0 // pred_check_branch
    %10 = sbr.rel (0) target = $region5
  $region4: #{convnet_forward.28} parent=0 // pred_region
    _
  $region5: #{convnet_forward.28} parent=0 // pred_fallthru
    _
  // Predicated region
  $region6: #{convnet_forward.28} parent=0 // pred_check
    _
  $region7: #{convnet_forward.28} parent=0 // pred_check_branch
    %12 = sbr.rel (0) target = $region9
  $region8: #{convnet_forward.28} parent=0 // pred_region
    _
  $region9: #{convnet_forward.28} parent=0 // pred_fallthru
    _
  // Predicated region
  $region10: #{convnet_forward.28} parent=0 // pred_check
    _
  $region11: #{convnet_forward.28} parent=0 // pred_check_branch
    %14 = sbr.rel (0) target = $region13
  $region12: #{convnet_forward.28} parent=0 // pred_region
    _
  $region13: #{convnet_forward.28} parent=0 // pred_fallthru
    _
  // Predicated region
  $region14: #{convnet_forward.28} parent=0 // pred_check
    _
  $region15: #{convnet_forward.28} parent=0 // pred_check_branch
    %16 = sbr.rel (0) target = $region17
  $region16: #{convnet_forward.28} parent=0 // pred_region
    _
  $region17: #{convnet_forward.28} parent=0 // pred_fallthru
    _
  %v17 = vld [vmem:[%s0] sm:$0xff]
  %v18 = vld [vmem:[%s0 + $0x8] sm:$0xff]
  %v19 = vld [vmem:[%s0 + $0x10] sm:$0xff]
  %v20 = vld [vmem:[%s0 + $0x18] sm:$0xff]
  %v21 = vld [vmem:[%s1] sm:$0x1]
  %v23 = vlaneseq
  %v24 = vshrl.u32 %v23, 7
  %v25 = vsub.s32 0, %v24
  %v26 = vrot.slane %v21, %v25
  %v28 = vmul.f32 %v17, %v26
  %v29 = vmul.f32 %v18, %v26
  %v30 = vmul.f32 %v19, %v26
  %v31 = vmul.f32 %v20, %v26
  %v32 = vld [vmem:[%s2] sm:$0x1]
  %v34 = vlaneseq
  %v35 = vshrl.u32 %v34, 7
  %v36 = vsub.s32 0, %v35
  %v37 = vrot.slane %v32, %v36
  %v39 = vadd.f32 %v28, %v37
  %v40 = vadd.f32 %v29, %v37
  %v41 = vadd.f32 %v30, %v37
  %v42 = vadd.f32 %v31, %v37
  %v43 = vmax.f32 %v39, 0.0
  %v44 = vmax.f32 %v40, 0.0
  %v45 = vmax.f32 %v41, 0.0
  %v46 = vmax.f32 %v42, 0.0
  %v47 = vld [vmem:[%s3] sm:$0xff]
  %v48 = vld [vmem:[%s3 + $0x8] sm:$0xff]
  %v49 = vld [vmem:[%s3 + $0x10] sm:$0xff]
  %v50 = vld [vmem:[%s3 + $0x18] sm:$0xff]
  %v51 = vadd.f32 %v43, %v47
  %v52 = vadd.f32 %v44, %v48
  %v53 = vadd.f32 %v45, %v49
  %v54 = vadd.f32 %v46, %v50
  %55 = vst [vmem:[%s4] sm:$0xff] %v51
  %56 = vst [vmem:[%s4 + $0x8] sm:$0xff] %v52
  %57 = vst [vmem:[%s4 + $0x10] sm:$0xff] %v53
  %58 = vst [vmem:[%s4 + $0x18] sm:$0xff] %v54
  // Predicated region
  $region18: #{convnet_forward.28} parent=0 // pred_check
    _
  $region19: #{convnet_forward.28} parent=0 // pred_check_branch
    %60 = sbr.rel (0) target = $region21
  $region20: #{convnet_forward.28} parent=0 // pred_region
    _
  $region21: #{convnet_forward.28} parent=0 // pred_fallthru
    _
  // Predicated region
  $region22: #{convnet_forward.28} parent=0 // pred_check
    _
  $region23: #{convnet_forward.28} parent=0 // pred_check_branch
    %62 = sbr.rel (0) target = $region25
  $region24: #{convnet_forward.28} parent=0 // pred_region
    _
  $region25: #{convnet_forward.28} parent=0 // pred_fallthru
    _

// kernel: convnet_forward.31
$region0: #{convnet_forward.31}
  #allocation0 [shape = 'u32[]', space=smem, size = 0x4, offset = 0x4, fixed_abs, tag = 'smem constant byte address 0x4 - core index']
  #allocation1 [shape = 'u32[144,128]{1,0:T(1,128)}', space=vmem, size = 0x12000, scoped, tag = 'internal scratch']
  #allocation2 [shape = 'f32[16,128]{1,0:T(8,128)}', space=vmem, size = 0x2000, scoped, tag = 'scratch operand']
  %s0 = inlined_call_operand.vmem [shape: bf16[16,128], index: 0, kind: input, shape index: {}]
  %s1 = inlined_call_operand.vmem [shape: bf16[128,128], index: 1, kind: input, shape index: {}]
  %s2 = inlined_call_operand.vmem [shape: f32[16,128], index: 2, kind: output, shape index: {0}]
  %s3 = inlined_call_operand.vmem [shape: f32[1,2,128], index: 3, kind: output, shape index: {1}]
  %4 = xla_tuple %s2, %s3
  %s5 = sld [smem:[#allocation0]]
  $region34: #{convnet_forward.31} parent=0
    _
  %s7 = ssub.s32 1, %s5
  %s8 = scalar_select 0, %s7, %s5
  // Predicated region
  $region2: #{convnet_forward.31} parent=0 // pred_check
    _
  $region3: #{convnet_forward.31} parent=0 // pred_check_branch
    %10 = sbr.rel (0) target = $region5
  $region4: #{convnet_forward.31} parent=0 // pred_region
    _
  $region5: #{convnet_forward.31} parent=0 // pred_fallthru
    _
  // Predicated region
  $region6: #{convnet_forward.31} parent=0 // pred_check
    _
  $region7: #{convnet_forward.31} parent=0 // pred_check_branch
    %12 = sbr.rel (0) target = $region9
  $region8: #{convnet_forward.31} parent=0 // pred_region
    _
  $region9: #{convnet_forward.31} parent=0 // pred_fallthru
    _
  %p14 = scmp.eq.s32.totalorder 0, 0
  // Predicated region
  $region10: #{convnet_forward.31} parent=0 // pred_check
    %p15 = pneg %p14
  $region11: #{convnet_forward.31} parent=0 // pred_check_branch
    %17 = sbr.rel (%p15) target = $region13
  $region12: #{convnet_forward.31} parent=0 // pred_region
    %18 = vst [vmem:[#allocation2] sm:$0xff] 0.0
    %19 = vst [vmem:[#allocation2 + $0x8] sm:$0xff] 0.0
  $region13: #{convnet_forward.31} parent=0 // pred_fallthru
    _
  %v20 = vld [vmem:[#allocation2] sm:$0xff]
  %v21 = vld [vmem:[#allocation2 + $0x8] sm:$0xff]
  %v22 = vld [vmem:[%s0] sm:$0xf]
  %v23 = vld [vmem:[%s0 + $0x4] sm:$0xf]
  %v24 = vld [vmem:[%s1] sm:$0xf]
  %v25 = vld [vmem:[%s1 + $0x4] sm:$0xf]
  %v26 = vld [vmem:[%s1 + $0x8] sm:$0xf]
  %v27 = vld [vmem:[%s1 + $0xc] sm:$0xf]
  %v28 = vld [vmem:[%s1 + $0x10] sm:$0xf]
  %v29 = vld [vmem:[%s1 + $0x14] sm:$0xf]
  %v30 = vld [vmem:[%s1 + $0x18] sm:$0xf]
  %v31 = vld [vmem:[%s1 + $0x1c] sm:$0xf]
  %v32 = vld [vmem:[%s1 + $0x20] sm:$0xf]
  %v33 = vld [vmem:[%s1 + $0x24] sm:$0xf]
  %v34 = vld [vmem:[%s1 + $0x28] sm:$0xf]
  %v35 = vld [vmem:[%s1 + $0x2c] sm:$0xf]
  %v36 = vld [vmem:[%s1 + $0x30] sm:$0xf]
  %v37 = vld [vmem:[%s1 + $0x34] sm:$0xf]
  %v38 = vld [vmem:[%s1 + $0x38] sm:$0xf]
  %v39 = vld [vmem:[%s1 + $0x3c] sm:$0xf]
  %v42 = vunpack.c.l.b16 %v22
  %v43 = vunpack.c.l.b16 %v23
  %v44 = vpack.c.b16 %v43, %v42
  %v62 = vunpack.c.l.b16 %v24
  %v63 = vunpack.c.l.b16 %v25
  %v64 = vunpack.c.l.b16 %v26
  %v65 = vunpack.c.l.b16 %v27
  %v66 = vunpack.c.l.b16 %v28
  %v67 = vunpack.c.l.b16 %v29
  %v68 = vunpack.c.l.b16 %v30
  %v69 = vunpack.c.l.b16 %v31
  %v70 = vunpack.c.l.b16 %v32
  %v71 = vunpack.c.l.b16 %v33
  %v72 = vunpack.c.l.b16 %v34
  %v73 = vunpack.c.l.b16 %v35
  %v74 = vunpack.c.l.b16 %v36
  %v75 = vunpack.c.l.b16 %v37
  %v76 = vunpack.c.l.b16 %v38
  %v77 = vunpack.c.l.b16 %v39
  %v78 = vpack.c.b16 %v63, %v62
  %v79 = vpack.c.b16 %v65, %v64
  %v80 = vpack.c.b16 %v67, %v66
  %v81 = vpack.c.b16 %v69, %v68
  %v82 = vpack.c.b16 %v71, %v70
  %v83 = vpack.c.b16 %v73, %v72
  %v84 = vpack.c.b16 %v75, %v74
  %v85 = vpack.c.b16 %v77, %v76
  %94 = vmatprep.subr.bf16.mxu0 0
  %95 = vmatpush1.bf16.msra.mxu0 %v78
  %96 = vmatprep.subr.bf16.mxu0 0
  %97 = vmatpush1.bf16.msra.mxu0 %v79
  %98 = vmatprep.subr.bf16.mxu0 0
  %99 = vmatpush1.bf16.msra.mxu0 %v80
  %100 = vmatprep.subr.bf16.mxu0 0
  %101 = vmatpush1.bf16.msra.mxu0 %v81
  %102 = vmatprep.subr.bf16.mxu0 0
  %103 = vmatpush1.bf16.msra.mxu0 %v82
  %104 = vmatprep.subr.bf16.mxu0 0
  %105 = vmatpush1.bf16.msra.mxu0 %v83
  %106 = vmatprep.subr.bf16.mxu0 0
  %107 = vmatpush1.bf16.msra.mxu0 %v84
  %108 = vmatprep.subr.bf16.mxu0 0
  %109 = vmatpush1.bf16.msra.mxu0 %v85
  %110 = vmatprep.subr.bf16.mxu0 0
  %111 = vmatpush1.bf16.msra.mxu0 0
  %112 = vmatprep.subr.bf16.mxu0 0
  %113 = vmatpush1.bf16.msra.mxu0 0
  %114 = vmatprep.subr.bf16.mxu0 0
  %115 = vmatpush1.bf16.msra.mxu0 0
  %116 = vmatprep.subr.bf16.mxu0 0
  %117 = vmatpush1.bf16.msra.mxu0 0
  %118 = vmatprep.subr.bf16.mxu0 0
  %119 = vmatpush1.bf16.msra.mxu0 0
  %120 = vmatprep.subr.bf16.mxu0 0
  %121 = vmatpush1.bf16.msra.mxu0 0
  %122 = vmatprep.subr.bf16.mxu0 0
  %123 = vmatpush1.bf16.msra.mxu0 0
  %124 = vmatprep.subr.bf16.mxu0 0
  %125 = vmatpush1.bf16.msra.mxu0 0
  %126 = vmatprep.mubr.bf16.mxu0 0
  %127 = vmatmul.mubr.bf16.gmra.mrb[0].mxu0 %v44
  %v128 = vpop.f32.mrb[0].mxu0
  %v129 = vadd.f32 0.0, %v128
  %v130 = vpop.f32.mrb[0].mxu0
  %v131 = vpop.f32.mrb[0].mxu0
  %v132 = vadd.f32 0.0, %v131
  %v133 = vpop.f32.mrb[0].mxu0
  %134 = vdwg.mxu0
  %v135 = vadd.f32 %v20, %v129
  %v136 = vadd.f32 %v21, %v132
  %137 = vst [vmem:[#allocation2] sm:$0xff] %v135
  %138 = vst [vmem:[#allocation2 + $0x8] sm:$0xff] %v136
  // Predicated region
  $region14: #{convnet_forward.31} parent=0 // pred_check
    %p139 = pneg %p14
  $region15: #{convnet_forward.31} parent=0 // pred_check_branch
    %141 = sbr.rel (%p139) target = $region17
  $region16: #{convnet_forward.31} parent=0 // pred_region
    %v142 = vld [vmem:[#allocation2] sm:$0xff]
    %v143 = vld [vmem:[#allocation2 + $0x8] sm:$0xff]
    %144 = vst [vmem:[%s2] sm:$0xff] %v142
    %145 = vst [vmem:[%s2 + $0x8] sm:$0xff] %v143
    %v146 = vadd.f32 %v142, %v143
    %v147 = vrot.slane %v146, 4
    %v148 = vadd.f32 %v146, %v147
    %v149 = vrot.slane %v148, 2
    %v150 = vadd.f32 %v148, %v149
    %v151 = vrot.slane %v150, 1
    %v152 = vadd.f32 %v150, %v151
    %v153 = vmul.f32 %v142, %v142
    %v154 = vmul.f32 %v143, %v143
    %v155 = vadd.f32 %v153, %v154
    %v156 = vrot.slane %v155, 4
    %v157 = vadd.f32 %v155, %v156
    %v158 = vrot.slane %v157, 2
    %v159 = vadd.f32 %v157, %v158
    %v160 = vrot.slane %v159, 1
    %v161 = vadd.f32 %v159, %v160
    %vm162 = vcmask 1040384
    %v163 = vsel %vm162, %v152, %v161
    %164 = vst [vmem:[%s3] sm:$0x3] %v163
  $region17: #{convnet_forward.31} parent=0 // pred_fallthru
    _
  // Predicated region
  $region18: #{convnet_forward.31} parent=0 // pred_check
    _
  $region19: #{convnet_forward.31} parent=0 // pred_check_branch
    %166 = sbr.rel (0) target = $region21
  $region20: #{convnet_forward.31} parent=0 // pred_region
    _
  $region21: #{convnet_forward.31} parent=0 // pred_fallthru
    _
  // Predicated region
  $region22: #{convnet_forward.31} parent=0 // pred_check
    _
  $region23: #{convnet_forward.31} parent=0 // pred_check_branch
    %168 = sbr.rel (0) target = $region25
  $region24: #{convnet_forward.31} parent=0 // pred_region
    _
  $region25: #{convnet_forward.31} parent=0 // pred_fallthru
    _
  // Predicated region
  $region26: #{convnet_forward.31} parent=0 // pred_check
    _
  $region27: #{convnet_forward.31} parent=0 // pred_check_branch
    %170 = sbr.rel (0) target = $region29
  $region28: #{convnet_forward.31} parent=0 // pred_region
    _
  $region29: #{convnet_forward.31} parent=0 // pred_fallthru
    _
  // Predicated region
  $region30: #{convnet_forward.31} parent=0 // pred_check
    _
  $region31: #{convnet_forward.31} parent=0 // pred_check_branch
    %172 = sbr.rel (0) target = $region33
  $region32: #{convnet_forward.31} parent=0 // pred_region
    _
  $region33: #{convnet_forward.31} parent=0 // pred_fallthru
    _

// kernel: convnet_forward.32
$region0: #{convnet_forward.32}
  #allocation0 [shape = 'u32[]', space=smem, size = 0x4, offset = 0x4, fixed_abs, tag = 'smem constant byte address 0x4 - core index']
  #allocation1 [shape = 'u32[144,128]{1,0:T(1,128)}', space=vmem, size = 0x12000, scoped, tag = 'internal scratch']
  %s0 = inlined_call_operand.vmem [shape: f32[16,128], index: 0, kind: input, shape index: {}]
  %s1 = inlined_call_operand.vmem [shape: f32[1,128], index: 1, kind: input, shape index: {}]
  %s2 = inlined_call_operand.vmem [shape: f32[1,128], index: 2, kind: input, shape index: {}]
  %s3 = inlined_call_operand.vmem [shape: f32[16,128], index: 3, kind: output, shape index: {}]
  %s4 = sld [smem:[#allocation0]]
  $region22: #{convnet_forward.32} parent=0
    _
  %s6 = ssub.s32 1, %s4
  %s7 = scalar_select 0, %s6, %s4
  // Predicated region
  $region2: #{convnet_forward.32} parent=0 // pred_check
    _
  $region3: #{convnet_forward.32} parent=0 // pred_check_branch
    %9 = sbr.rel (0) target = $region5
  $region4: #{convnet_forward.32} parent=0 // pred_region
    _
  $region5: #{convnet_forward.32} parent=0 // pred_fallthru
    _
  // Predicated region
  $region6: #{convnet_forward.32} parent=0 // pred_check
    _
  $region7: #{convnet_forward.32} parent=0 // pred_check_branch
    %11 = sbr.rel (0) target = $region9
  $region8: #{convnet_forward.32} parent=0 // pred_region
    _
  $region9: #{convnet_forward.32} parent=0 // pred_fallthru
    _
  // Predicated region
  $region10: #{convnet_forward.32} parent=0 // pred_check
    _
  $region11: #{convnet_forward.32} parent=0 // pred_check_branch
    %13 = sbr.rel (0) target = $region13
  $region12: #{convnet_forward.32} parent=0 // pred_region
    _
  $region13: #{convnet_forward.32} parent=0 // pred_fallthru
    _
  %v14 = vld [vmem:[%s0] sm:$0xff]
  %v15 = vld [vmem:[%s0 + $0x8] sm:$0xff]
  %v16 = vld [vmem:[%s1] sm:$0x1]
  %v18 = vlaneseq
  %v19 = vshrl.u32 %v18, 7
  %v20 = vsub.s32 0, %v19
  %v21 = vrot.slane %v16, %v20
  %v23 = vmul.f32 %v14, %v21
  %v24 = vmul.f32 %v15, %v21
  %v25 = vld [vmem:[%s2] sm:$0x1]
  %v27 = vlaneseq
  %v28 = vshrl.u32 %v27, 7
  %v29 = vsub.s32 0, %v28
  %v30 = vrot.slane %v25, %v29
  %v32 = vadd.f32 %v23, %v30
  %v33 = vadd.f32 %v24, %v30
  %34 = vst [vmem:[%s3] sm:$0xff] %v32
  %35 = vst [vmem:[%s3 + $0x8] sm:$0xff] %v33
  // Predicated region
  $region14: #{convnet_forward.32} parent=0 // pred_check
    _
  $region15: #{convnet_forward.32} parent=0 // pred_check_branch
    %37 = sbr.rel (0) target = $region17
  $region16: #{convnet_forward.32} parent=0 // pred_region
    _
  $region17: #{convnet_forward.32} parent=0 // pred_fallthru
    _
  // Predicated region
  $region18: #{convnet_forward.32} parent=0 // pred_check
    _
  $region19: #{convnet_forward.32} parent=0 // pred_check_branch
    %39 = sbr.rel (0) target = $region21
  $region20: #{convnet_forward.32} parent=0 // pred_region
    _
  $region21: #{convnet_forward.32} parent=0 // pred_fallthru
    _

// kernel: convnet_forward.30
$region0: #{convnet_forward.30}
  #allocation0 [shape = 'u32[]', space=smem, size = 0x4, offset = 0x4, fixed_abs, tag = 'smem constant byte address 0x4 - core index']
  #allocation1 [shape = 'u32[144,128]{1,0:T(1,128)}', space=vmem, size = 0x12000, scoped, tag = 'internal scratch']
  %s0 = inlined_call_operand.vmem [shape: f32[16,128], index: 0, kind: input, shape index: {}]
  %s1 = inlined_call_operand.vmem [shape: f32[1,128], index: 1, kind: input, shape index: {}]
  %s2 = inlined_call_operand.vmem [shape: f32[1,128], index: 2, kind: input, shape index: {}]
  %s3 = inlined_call_operand.vmem [shape: f32[16,128], index: 3, kind: output, shape index: {}]
  %s4 = sld [smem:[#allocation0]]
  $region22: #{convnet_forward.30} parent=0
    _
  %s6 = ssub.s32 1, %s4
  %s7 = scalar_select 0, %s6, %s4
  // Predicated region
  $region2: #{convnet_forward.30} parent=0 // pred_check
    _
  $region3: #{convnet_forward.30} parent=0 // pred_check_branch
    %9 = sbr.rel (0) target = $region5
  $region4: #{convnet_forward.30} parent=0 // pred_region
    _
  $region5: #{convnet_forward.30} parent=0 // pred_fallthru
    _
  // Predicated region
  $region6: #{convnet_forward.30} parent=0 // pred_check
    _
  $region7: #{convnet_forward.30} parent=0 // pred_check_branch
    %11 = sbr.rel (0) target = $region9
  $region8: #{convnet_forward.30} parent=0 // pred_region
    _
  $region9: #{convnet_forward.30} parent=0 // pred_fallthru
    _
  // Predicated region
  $region10: #{convnet_forward.30} parent=0 // pred_check
    _
  $region11: #{convnet_forward.30} parent=0 // pred_check_branch
    %13 = sbr.rel (0) target = $region13
  $region12: #{convnet_forward.30} parent=0 // pred_region
    _
  $region13: #{convnet_forward.30} parent=0 // pred_fallthru
    _
  %v14 = vld [vmem:[%s0] sm:$0xff]
  %v15 = vld [vmem:[%s0 + $0x8] sm:$0xff]
  %v16 = vld [vmem:[%s1] sm:$0x1]
  %v18 = vlaneseq
  %v19 = vshrl.u32 %v18, 7
  %v20 = vsub.s32 0, %v19
  %v21 = vrot.slane %v16, %v20
  %v23 = vmul.f32 %v14, %v21
  %v24 = vmul.f32 %v15, %v21
  %v25 = vld [vmem:[%s2] sm:$0x1]
  %v27 = vlaneseq
  %v28 = vshrl.u32 %v27, 7
  %v29 = vsub.s32 0, %v28
  %v30 = vrot.slane %v25, %v29
  %v32 = vadd.f32 %v23, %v30
  %v33 = vadd.f32 %v24, %v30
  %v34 = vmax.f32 %v32, 0.0
  %v35 = vmax.f32 %v33, 0.0
  %36 = vst [vmem:[%s3] sm:$0xff] %v34
  %37 = vst [vmem:[%s3 + $0x8] sm:$0xff] %v35
  // Predicated region
  $region14: #{convnet_forward.30} parent=0 // pred_check
    _
  $region15: #{convnet_forward.30} parent=0 // pred_check_branch
    %39 = sbr.rel (0) target = $region17
  $region16: #{convnet_forward.30} parent=0 // pred_region
    _
  $region17: #{convnet_forward.30} parent=0 // pred_fallthru
    _
  // Predicated region
  $region18: #{convnet_forward.30} parent=0 // pred_check
    _
  $region19: #{convnet_forward.30} parent=0 // pred_check_branch
    %41 = sbr.rel (0) target = $region21
  $region20: #{convnet_forward.30} parent=0 // pred_region
    _
  $region21: #{convnet_forward.30} parent=0 // pred_fallthru
    _

// kernel: convnet_forward.29
$region0: #{convnet_forward.29}
  #allocation0 [shape = 'u32[]', space=smem, size = 0x4, offset = 0x4, fixed_abs, tag = 'smem constant byte address 0x4 - core index']
  #allocation1 [shape = 'u32[144,128]{1,0:T(1,128)}', space=vmem, size = 0x12000, scoped, tag = 'internal scratch']
  #allocation2 [shape = 'f32[16,128]{1,0:T(8,128)}', space=vmem, size = 0x2000, scoped, tag = 'scratch operand']
  %s0 = inlined_call_operand.vmem [shape: bf16[16,1152], index: 0, kind: input, shape index: {}]
  %s1 = inlined_call_operand.vmem [shape: bf16[1152,128], index: 1, kind: input, shape index: {}]
  %s2 = inlined_call_operand.vmem [shape: f32[16,128], index: 2, kind: output, shape index: {0}]
  %s3 = inlined_call_operand.vmem [shape: f32[1,2,128], index: 3, kind: output, shape index: {1}]
  %4 = xla_tuple %s2, %s3
  %s5 = sld [smem:[#allocation0]]
  $region83: #{convnet_forward.29} parent=0
    _
  %s7 = ssub.s32 1, %s5
  %s8 = scalar_select 0, %s7, %s5
  $region1: #{convnet_forward.29} parent=0
    #allocation3 [shape = 'u8[24576]{0}', space=vmem, size = 0x6000, scoped, tag = 'input window, operand 0']
    loop: start=0, step=1, limit=5
    $region2: #{convnet_forward.29} parent=1 // loop_pre_header
      _
    $region3: #{convnet_forward.29} parent=1 // loop_header
      %s10 = sphi 0, %s14
      %p11 = scmp.ge.s32.totalorder %s10, 5
      %s17 = sphi 0, %s36
      %s18 = sphi 0, %s32
      %s19 = sphi 0, %s28
      %s20 = sphi 0, %s17
      %s21 = sphi 0, %s18
      %s22 = sphi 0, %s19
      %s23 = sphi 0, %s20
      %s24 = sphi 0, %s21
      %s25 = sphi 0, %s22
      %s41 = sphi 0, %s43
      %s44 = sphi 0, %s41
      %s45 = sphi 0, %s44
      %s61 = sphi 0, %s45
      %s69 = sphi 0, %s71
      %s72 = sphi 0, %s69
      %s73 = sphi 0, %s72
      %s89 = sphi 0, %s73
      %s97 = sphi 0, %s99
      %s100 = sphi 0, %s97
      %s101 = sphi 0, %s100
      %s117 = sphi 0, %s101
      %s125 = sphi 0, %s127
      %s128 = sphi 0, %s125
      %s129 = sphi 0, %s128
      %s145 = sphi 0, %s129
    $region4: #{convnet_forward.29} parent=1 // loop_header_branch
      %13 = sbr.rel (%p11) target = $region8
    $region5: #{convnet_forward.29} parent=1 // loop_body
      %s15 = ssub.s32 %s10, 1
      %s16 = ssub.s32 %s10, 2
      %s26 = sadd.s32 1, %s19
      %p27 = scmp.ge.s32.totalorder %s26, 3
      %s28 = scalar_select %p27, 0, %s26
      %s29 = sadd.s32 1, %s18
      %s30 = scalar_select %p27, %s29, %s18
      %p31 = scmp.ge.s32.totalorder %s30, 1
      %s32 = scalar_select %p31, 0, %s30
      %s33 = sadd.s32 1, %s17
      %s34 = scalar_select %p31, %s33, %s17
      %p35 = scmp.ge.s32.totalorder %s34, 1
      %s36 = scalar_select %p35, 0, %s34
      %s37 = ssub.s32 %s17, %s36
      %s38 = ssub.s32 %s19, %s28
      %s39 = sor.u32 %s37, %s38
      %p40 = scmp.eq.s32.totalorder %s39, 0
      %s42 = sadd.s32 %s41, 1
      %s43 = scalar_select %p40, %s41, %s42
      %p46 = pneg %p40
      %p47 = scmp.eq.s32.totalorder %s10, 2
      %p48 = por %p46, %p47
      %p49 = scmp.ne.s32.totalorder %s41, %s44
      %p50 = scmp.eq.s32.totalorder %s10, 0
      %p51 = por %p49, %p50
      %p52 = scmp.ne.s32.totalorder %s41, %s44
      %p53 = scmp.eq.s32.totalorder %s15, 2
      %p54 = por %p52, %p53
      %p55 = scmp.ne.s32.totalorder %s44, %s45
      %p56 = scmp.eq.s32.totalorder %s15, 0
      %p57 = por %p55, %p56
      %p58 = scmp.ne.s32.totalorder %s44, %s45
      %p59 = scmp.eq.s32.totalorder %s16, 2
      %p60 = por %p58, %p59
      %p62 = scmp.ne.s32.totalorder %s45, %s61
      %p63 = scmp.eq.s32.totalorder %s16, 0
      %p64 = por %p62, %p63
      %s65 = ssub.s32 %s19, %s28
      %s66 = ssub.s32 %s18, %s32
      %s67 = sor.u32 %s65, %s66
      %p68 = scmp.eq.s32.totalorder %s67, 0
      %s70 = sadd.s32 %s69, 1
      %s71 = scalar_select %p68, %s69, %s70
      %p74 = pneg %p68
      %p75 = scmp.eq.s32.totalorder %s10, 2
      %p76 = por %p74, %p75
      %p77 = scmp.ne.s32.totalorder %s69, %s72
      %p78 = scmp.eq.s32.totalorder %s10, 0
      %p79 = por %p77, %p78
      %p80 = scmp.ne.s32.totalorder %s69, %s72
      %p81 = scmp.eq.s32.totalorder %s15, 2
      %p82 = por %p80, %p81
      %p83 = scmp.ne.s32.totalorder %s72, %s73
      %p84 = scmp.eq.s32.totalorder %s15, 0
      %p85 = por %p83, %p84
      %p86 = scmp.ne.s32.totalorder %s72, %s73
      %p87 = scmp.eq.s32.totalorder %s16, 2
      %p88 = por %p86, %p87
      %p90 = scmp.ne.s32.totalorder %s73, %s89
      %p91 = scmp.eq.s32.totalorder %s16, 0
      %p92 = por %p90, %p91
      %s93 = ssub.s32 %s17, %s36
      %s94 = ssub.s32 %s18, %s32
      %s95 = sor.u32 %s93, %s94
      %p96 = scmp.eq.s32.totalorder %s95, 0
      %s98 = sadd.s32 %s97, 1
      %s99 = scalar_select %p96, %s97, %s98
      %p102 = pneg %p96
      %p103 = scmp.eq.s32.totalorder %s10, 2
      %p104 = por %p102, %p103
      %p105 = scmp.ne.s32.totalorder %s97, %s100
      %p106 = scmp.eq.s32.totalorder %s10, 0
      %p107 = por %p105, %p106
      %p108 = scmp.ne.s32.totalorder %s97, %s100
      %p109 = scmp.eq.s32.totalorder %s15, 2
      %p110 = por %p108, %p109
      %p111 = scmp.ne.s32.totalorder %s100, %s101
      %p112 = scmp.eq.s32.totalorder %s15, 0
      %p113 = por %p111, %p112
      %p114 = scmp.ne.s32.totalorder %s100, %s101
      %p115 = scmp.eq.s32.totalorder %s16, 2
      %p116 = por %p114, %p115
      %p118 = scmp.ne.s32.totalorder %s101, %s117
      %p119 = scmp.eq.s32.totalorder %s16, 0
      %p120 = por %p118, %p119
      %s121 = ssub.s32 %s17, %s36
      %s122 = ssub.s32 %s18, %s32
      %s123 = sor.u32 %s121, %s122
      %p124 = scmp.eq.s32.totalorder %s123, 0
      %s126 = sadd.s32 %s125, 1
      %s127 = scalar_select %p124, %s125, %s126
      %p130 = pneg %p124
      %p131 = scmp.eq.s32.totalorder %s10, 2
      %p132 = por %p130, %p131
      %p133 = scmp.ne.s32.totalorder %s125, %s128
      %p134 = scmp.eq.s32.totalorder %s10, 0
      %p135 = por %p133, %p134
      %p136 = scmp.ne.s32.totalorder %s125, %s128
      %p137 = scmp.eq.s32.totalorder %s15, 2
      %p138 = por %p136, %p137
      %p139 = scmp.ne.s32.totalorder %s128, %s129
      %p140 = scmp.eq.s32.totalorder %s15, 0
      %p141 = por %p139, %p140
      %p142 = scmp.ne.s32.totalorder %s128, %s129
      %p143 = scmp.eq.s32.totalorder %s16, 2
      %p144 = por %p142, %p143
      %p146 = scmp.ne.s32.totalorder %s129, %s145
      %p147 = scmp.eq.s32.totalorder %s16, 0
      %p148 = por %p146, %p147
      %p149 = scmp.le.s32.totalorder 1, %s10
      %p150 = scmp.lt.s32.totalorder %s10, 4
      %p151 = pnand %p149, %p150
      %p152 = pneg %p151
      // Predicated region
      $region9: #{convnet_forward.29} parent=5 // pred_check
        _
      $region10: #{convnet_forward.29} parent=5 // pred_check_branch
        %154 = sbr.rel (%p151) target = $region12
      $region11: #{convnet_forward.29} parent=5 // pred_region
        %s155 = ssub.s32 %s10, 1
      $region12: #{convnet_forward.29} parent=5 // pred_fallthru
        _
      %p156 = scmp.lt.s32.totalorder %s10, 3
      // Predicated region
      $region13: #{convnet_forward.29} parent=5 // pred_check
        %p157 = pneg %p156
      $region14: #{convnet_forward.29} parent=5 // pred_check_branch
        %159 = sbr.rel (%p157) target = $region16
      $region15: #{convnet_forward.29} parent=5 // pred_region
        // Predicated region
        $region17: #{convnet_forward.29} parent=15 // pred_check
          %p160 = pneg %p51
        $region18: #{convnet_forward.29} parent=15 // pred_check_branch
          %162 = sbr.rel (%p160) target = $region20
        $region19: #{convnet_forward.29} parent=15 // pred_region
          %s163 = sand.u32 %s41, 1
          %s164 = sand.u32 %s41, 1
          %s165 = smul.addr %s164, 24
          %s166 = scalar_lea.vmem [#allocation3], %s165
          %s167 = smul.u32 2, %s17
          %s168 = smul.u32 3, %s19
          %s169 = smul.addr %s167, 9
          %s170 = sadd.s32 %s168, %s169
          %s171 = smul.addr %s170, 4
          %s172 = scalar_lea.vmem %s0, %s171
          // Predicated region
          $region21: #{convnet_forward.29} parent=19 // pred_check
            _
          $region22: #{convnet_forward.29} parent=19 // pred_check_branch
            %174 = sbr.rel (0) target = $region24
          $region23: #{convnet_forward.29} parent=19 // pred_region
            // Predicated region
            $region25: #{convnet_forward.29} parent=23 // pred_check
              _
            $region26: #{convnet_forward.29} parent=23 // pred_check_branch
              %176 = sbr.rel (0) target = $region28
            $region27: #{convnet_forward.29} parent=23 // pred_region
              %s177 = scalar_lea.vmem %s172, 8
              %s178 = scalar_lea.vmem %s166, 8 [#allocation3]
              loop: start=0, step=1, limit=1
              $region29: #{convnet_forward.29} parent=27 // loop_pre_header
                _
              $region30: #{convnet_forward.29} parent=27 // loop_header
                %s180 = sphi 0, %s184
                %p181 = scmp.ge.s32.totalorder %s180, 1
                %s185 = sphi %s172, %s172
                %s186 = sphi %s166, %s166
              $region31: #{convnet_forward.29} parent=27 // loop_header_branch
                %183 = sbr.rel (%p181) target = $region35
              $region32: #{convnet_forward.29} parent=27 // loop_body
                %v187 = vld [vmem:[%s185] sm:$0xff]
                %188 = vst [vmem:[%s186] sm:$0xff] %v187
                %v189 = vld [vmem:[%s185 + $0x24] sm:$0xff]
                %190 = vst [vmem:[%s186 + $0xc] sm:$0xff] %v189
              $region33: #{convnet_forward.29} parent=27 // loop_footer
                %s184 = sadd.s32 1, %s180
              $region34: #{convnet_forward.29} parent=27 // loop_footer_branch
                %179 = sbr.rel target = $region30
              $region35: #{convnet_forward.29} parent=27 // loop_exit
                _
              loop: start=0, step=1, limit=1
              $region36: #{convnet_forward.29} parent=27 // loop_pre_header
                _
              $region37: #{convnet_forward.29} parent=27 // loop_header
                %s193 = sphi 0, %s197
                %p194 = scmp.ge.s32.totalorder %s193, 1
                %s198 = sphi %s177, %s177
                %s199 = sphi %s178, %s178
              $region38: #{convnet_forward.29} parent=27 // loop_header_branch
                %196 = sbr.rel (%p194) target = $region42
              $region39: #{convnet_forward.29} parent=27 // loop_body
                %v200 = vld [vmem:[%s198] sm:$0xf]
                %201 = vst [vmem:[%s199] sm:$0xf] %v200
                %v202 = vld [vmem:[%s198 + $0x24] sm:$0xf]
                %203 = vst [vmem:[%s199 + $0xc] sm:$0xf] %v202
              $region40: #{convnet_forward.29} parent=27 // loop_footer
                %s197 = sadd.s32 1, %s193
              $region41: #{convnet_forward.29} parent=27 // loop_footer_branch
                %192 = sbr.rel target = $region37
              $region42: #{convnet_forward.29} parent=27 // loop_exit
                _
            $region28: #{convnet_forward.29} parent=23 // pred_fallthru
              _
          $region24: #{convnet_forward.29} parent=19 // pred_fallthru
            _
          %204 = vnop
        $region20: #{convnet_forward.29} parent=15 // pred_fallthru
          _
        // Predicated region
        $region43: #{convnet_forward.29} parent=15 // pred_check
          %p205 = pneg %p79
        $region44: #{convnet_forward.29} parent=15 // pred_check_branch
          %207 = sbr.rel (%p205) target = $region46
        $region45: #{convnet_forward.29} parent=15 // pred_region
          %s208 = smul.u32 48, %s19
          %p209 = scmp.lt.s32.totalorder %s208, 143
          %s210 = scalar_select %p209, %s208, 143
          %p211 = scmp.lt.s32.totalorder %s18, 0
          %s212 = scalar_select %p211, %s18, 0
          %s213 = sadd.s32 %s212, %s210
          %s214 = smul.addr %s213, 4
          %s215 = scalar_lea.vmem %s1, %s214
          %s216 = smul.u32 48, %s19
        $region46: #{convnet_forward.29} parent=15 // pred_fallthru
          _
      $region16: #{convnet_forward.29} parent=5 // pred_fallthru
        _
      %p217 = scmp.le.s32.totalorder 1, %s10
      %p218 = scmp.lt.s32.totalorder %s10, 4
      %p219 = pnand %p217, %p218
      %p220 = pneg %p219
      // Predicated region
      $region47: #{convnet_forward.29} parent=5 // pred_check
        _
      $region48: #{convnet_forward.29} parent=5 // pred_check_branch
        %222 = sbr.rel (%p219) target = $region50
      $region49: #{convnet_forward.29} parent=5 // pred_region
        %s223 = ssub.s32 %s10, 1
        %s224 = sand.u32 %s44, 1
        %s225 = sand.u32 %s44, 1
        %s226 = smul.addr %s225, 24
        %s227 = scalar_lea.vmem [#allocation3], %s226
        // Predicated region
        $region51: #{convnet_forward.29} parent=49 // pred_check
          %p228 = pneg %p57
        $region52: #{convnet_forward.29} parent=49 // pred_check_branch
          %230 = sbr.rel (%p228) target = $region54
        $region53: #{convnet_forward.29} parent=49 // pred_region
          _
        $region54: #{convnet_forward.29} parent=49 // pred_fallthru
          _
        %s231 = sand.u32 %s44, 1
        %s232 = sand.u32 %s44, 1
        %s233 = smul.addr %s232, 24
        %s234 = scalar_lea.vmem [#allocation3], %s233
        %p235 = pneg %p57
        %p236 = pneg %p54
        %s237 = smul.u32 48, %s22
        %p238 = scmp.lt.s32.totalorder %s237, 143
        %s239 = scalar_select %p238, %s237, 143
        %p240 = scmp.lt.s32.totalorder %s21, 0
        %s241 = scalar_select %p240, %s21, 0
        %s242 = sadd.s32 %s241, %s239
        %s243 = smul.addr %s242, 4
        %s244 = scalar_lea.vmem %s1, %s243
        %p245 = pneg %p85
        %p246 = pneg %p82
        %p247 = pneg %p113
        %p248 = pneg %p110
        %s249 = smul.u32 2, %s20
        %p250 = scmp.lt.s32.totalorder %s249, 1
        %s251 = scalar_select %p250, %s249, 1
        %p252 = scmp.lt.s32.totalorder %s21, 0
        %s253 = scalar_select %p252, %s21, 0
        %s254 = sadd.s32 %s253, %s251
        %s255 = smul.addr %s254, 8
        %s256 = scalar_lea.vmem %s2, %s255
        %p257 = pneg %p141
        %p258 = pneg %p138
        %p259 = scmp.lt.s32.totalorder %s20, 0
        %s260 = scalar_select %p259, %s20, 0
        %p261 = scmp.lt.s32.totalorder %s21, 0
        %s262 = scalar_select %p261, %s21, 0
        %s263 = sadd.s32 %s262, %s260
        %s264 = smul.addr %s263, 2
        %s265 = scalar_lea.vmem %s3, %s264
        %s266 = smul.u32 2, %s20
        %s267 = smul.u32 3, %s22
        %s268 = smul.u32 48, %s22
        %p269 = scmp.lt.s32.totalorder %s268, 143
        %s270 = scalar_select %p269, %s268, 143
        %p271 = scmp.lt.s32.totalorder %s21, 0
        %s272 = scalar_select %p271, %s21, 0
        %s273 = sadd.s32 %s272, %s270
        %s274 = smul.addr %s273, 4
        %s275 = scalar_lea.vmem %s1, %s274
        %s276 = smul.u32 48, %s22
        %s277 = smul.u32 2, %s20
        %p278 = scmp.lt.s32.totalorder %s277, 1
        %s279 = scalar_select %p278, %s277, 1
        %p280 = scmp.lt.s32.totalorder %s21, 0
        %s281 = scalar_select %p280, %s21, 0
        %s282 = sadd.s32 %s281, %s279
        %s283 = smul.addr %s282, 8
        %s284 = scalar_lea.vmem %s2, %s283
        %s285 = smul.u32 2, %s20
        %p286 = scmp.lt.s32.totalorder %s20, 0
        %s287 = scalar_select %p286, %s20, 0
        %p288 = scmp.lt.s32.totalorder %s21, 0
        %s289 = scalar_select %p288, %s21, 0
        %s290 = sadd.s32 %s289, %s287
        %s291 = smul.addr %s290, 2
        %s292 = scalar_lea.vmem %s3, %s291
        %p294 = scmp.eq.s32.totalorder %s22, 0
        // Predicated region
        $region55: #{convnet_forward.29} parent=49 // pred_check
          %p295 = pneg %p294
        $region56: #{convnet_forward.29} parent=49 // pred_check_branch
          %297 = sbr.rel (%p295) target = $region58
        $region57: #{convnet_forward.29} parent=49 // pred_region
          %298 = vst [vmem:[#allocation2] sm:$0xff] 0.0
          %299 = vst [vmem:[#allocation2 + $0x8] sm:$0xff] 0.0
        $region58: #{convnet_forward.29} parent=49 // pred_fallthru
          _
        %v300 = vld [vmem:[#allocation2] sm:$0xff]
        %v301 = vld [vmem:[#allocation2 + $0x8] sm:$0xff]
        %v302 = vld [vmem:[%s227] sm:$0xff]
        %v303 = vld [vmem:[%s227 + $0x8] sm:$0xf]
        %v304 = vld [vmem:[%s227 + $0xc] sm:$0xff]
        %v305 = vld [vmem:[%s227 + $0x14] sm:$0xf]
        %v306 = vld [vmem:[%s275] sm:$0xf]
        %v307 = vld [vmem:[%s275 + $0x4] sm:$0xf]
        %v308 = vld [vmem:[%s275 + $0x8] sm:$0xf]
        %v309 = vld [vmem:[%s275 + $0xc] sm:$0xf]
        %v310 = vld [vmem:[%s275 + $0x10] sm:$0xf]
        %v311 = vld [vmem:[%s275 + $0x14] sm:$0xf]
        %v312 = vld [vmem:[%s275 + $0x18] sm:$0xf]
        %v313 = vld [vmem:[%s275 + $0x1c] sm:$0xf]
        %v314 = vld [vmem:[%s275 + $0x20] sm:$0xf]
        %v315 = vld [vmem:[%s275 + $0x24] sm:$0xf]
        %v316 = vld [vmem:[%s275 + $0x28] sm:$0xf]
        %v317 = vld [vmem:[%s275 + $0x2c] sm:$0xf]
        %v318 = vld [vmem:[%s275 + $0x30] sm:$0xf]
        %v319 = vld [vmem:[%s275 + $0x34] sm:$0xf]
        %v320 = vld [vmem:[%s275 + $0x38] sm:$0xf]
        %v321 = vld [vmem:[%s275 + $0x3c] sm:$0xf]
        %v322 = vld [vmem:[%s275 + $0x40] sm:$0xf]
        %v323 = vld [vmem:[%s275 + $0x44] sm:$0xf]
        %v324 = vld [vmem:[%s275 + $0x48] sm:$0xf]
        %v325 = vld [vmem:[%s275 + $0x4c] sm:$0xf]
        %v326 = vld [vmem:[%s275 + $0x50] sm:$0xf]
        %v327 = vld [vmem:[%s275 + $0x54] sm:$0xf]
        %v328 = vld [vmem:[%s275 + $0x58] sm:$0xf]
        %v329 = vld [vmem:[%s275 + $0x5c] sm:$0xf]
        %v330 = vld [vmem:[%s275 + $0x60] sm:$0xf]
        %v331 = vld [vmem:[%s275 + $0x64] sm:$0xf]
        %v332 = vld [vmem:[%s275 + $0x68] sm:$0xf]
        %v333 = vld [vmem:[%s275 + $0x6c] sm:$0xf]
        %v334 = vld [vmem:[%s275 + $0x70] sm:$0xf]
        %v335 = vld [vmem:[%s275 + $0x74] sm:$0xf]
        %v336 = vld [vmem:[%s275 + $0x78] sm:$0xf]
        %v337 = vld [vmem:[%s275 + $0x7c] sm:$0xf]
        %v338 = vld [vmem:[%s275 + $0x80] sm:$0xf]
        %v339 = vld [vmem:[%s275 + $0x84] sm:$0xf]
        %v340 = vld [vmem:[%s275 + $0x88] sm:$0xf]
        %v341 = vld [vmem:[%s275 + $0x8c] sm:$0xf]
        %v342 = vld [vmem:[%s275 + $0x90] sm:$0xf]
        %v343 = vld [vmem:[%s275 + $0x94] sm:$0xf]
        %v344 = vld [vmem:[%s275 + $0x98] sm:$0xf]
        %v345 = vld [vmem:[%s275 + $0x9c] sm:$0xf]
        %v346 = vld [vmem:[%s275 + $0xa0] sm:$0xf]
        %v347 = vld [vmem:[%s275 + $0xa4] sm:$0xf]
        %v348 = vld [vmem:[%s275 + $0xa8] sm:$0xf]
        %v349 = vld [vmem:[%s275 + $0xac] sm:$0xf]
        %v350 = vld [vmem:[%s275 + $0xb0] sm:$0xf]
        %v351 = vld [vmem:[%s275 + $0xb4] sm:$0xf]
        %v352 = vld [vmem:[%s275 + $0xb8] sm:$0xf]
        %v353 = vld [vmem:[%s275 + $0xbc] sm:$0xf]
        %v358 = vunpack.c.l.b16 %v302
        %v359 = vunpack.c.h.b16 %v302
        %v360 = vunpack.c.l.b16 %v303
        %v361 = vunpack.c.l.b16 %v304
        %v362 = vunpack.c.h.b16 %v304
        %v363 = vunpack.c.l.b16 %v305
        %v364 = vpack.c.b16 %v361, %v358
        %v365 = vpack.c.b16 %v362, %v359
        %v366 = vpack.c.b16 %v363, %v360
        %v418 = vunpack.c.l.b16 %v306
        %v419 = vunpack.c.l.b16 %v307
        %v420 = vunpack.c.l.b16 %v308
        %v421 = vunpack.c.l.b16 %v309
        %v422 = vunpack.c.l.b16 %v310
        %v423 = vunpack.c.l.b16 %v311
        %v424 = vunpack.c.l.b16 %v312
        %v425 = vunpack.c.l.b16 %v313
        %v426 = vunpack.c.l.b16 %v314
        %v427 = vunpack.c.l.b16 %v315
        %v428 = vunpack.c.l.b16 %v316
        %v429 = vunpack.c.l.b16 %v317
        %v430 = vunpack.c.l.b16 %v318
        %v431 = vunpack.c.l.b16 %v319
        %v432 = vunpack.c.l.b16 %v320
        %v433 = vunpack.c.l.b16 %v321
        %v434 = vunpack.c.l.b16 %v322
        %v435 = vunpack.c.l.b16 %v323
        %v436 = vunpack.c.l.b16 %v324
        %v437 = vunpack.c.l.b16 %v325
        %v438 = vunpack.c.l.b16 %v326
        %v439 = vunpack.c.l.b16 %v327
        %v440 = vunpack.c.l.b16 %v328
        %v441 = vunpack.c.l.b16 %v329
        %v442 = vunpack.c.l.b16 %v330
        %v443 = vunpack.c.l.b16 %v331
        %v444 = vunpack.c.l.b16 %v332
        %v445 = vunpack.c.l.b16 %v333
        %v446 = vunpack.c.l.b16 %v334
        %v447 = vunpack.c.l.b16 %v335
        %v448 = vunpack.c.l.b16 %v336
        %v449 = vunpack.c.l.b16 %v337
        %v450 = vunpack.c.l.b16 %v338
        %v451 = vunpack.c.l.b16 %v339
        %v452 = vunpack.c.l.b16 %v340
        %v453 = vunpack.c.l.b16 %v341
        %v454 = vunpack.c.l.b16 %v342
        %v455 = vunpack.c.l.b16 %v343
        %v456 = vunpack.c.l.b16 %v344
        %v457 = vunpack.c.l.b16 %v345
        %v458 = vunpack.c.l.b16 %v346
        %v459 = vunpack.c.l.b16 %v347
        %v460 = vunpack.c.l.b16 %v348
        %v461 = vunpack.c.l.b16 %v349
        %v462 = vunpack.c.l.b16 %v350
        %v463 = vunpack.c.l.b16 %v351
        %v464 = vunpack.c.l.b16 %v352
        %v465 = vunpack.c.l.b16 %v353
        %v466 = vpack.c.b16 %v419, %v418
        %v467 = vpack.c.b16 %v421, %v420
        %v468 = vpack.c.b16 %v423, %v422
        %v469 = vpack.c.b16 %v425, %v424
        %v470 = vpack.c.b16 %v427, %v426
        %v471 = vpack.c.b16 %v429, %v428
        %v472 = vpack.c.b16 %v431, %v430
        %v473 = vpack.c.b16 %v433, %v432
        %v474 = vpack.c.b16 %v435, %v434
        %v475 = vpack.c.b16 %v437, %v436
        %v476 = vpack.c.b16 %v439, %v438
        %v477 = vpack.c.b16 %v441, %v440
        %v478 = vpack.c.b16 %v443, %v442
        %v479 = vpack.c.b16 %v445, %v444
        %v480 = vpack.c.b16 %v447, %v446
        %v481 = vpack.c.b16 %v449, %v448
        %v482 = vpack.c.b16 %v451, %v450
        %v483 = vpack.c.b16 %v453, %v452
        %v484 = vpack.c.b16 %v455, %v454
        %v485 = vpack.c.b16 %v457, %v456
        %v486 = vpack.c.b16 %v459, %v458
        %v487 = vpack.c.b16 %v461, %v460
        %v488 = vpack.c.b16 %v463, %v462
        %v489 = vpack.c.b16 %v465, %v464
        %514 = vmatprep.subr.bf16.mxu0 0
        %515 = vmatpush1.bf16.msra.mxu0 %v466
        %516 = vmatprep.subr.bf16.mxu0 0
        %517 = vmatpush1.bf16.msra.mxu0 %v467
        %518 = vmatprep.subr.bf16.mxu0 0
        %519 = vmatpush1.bf16.msra.mxu0 %v468
        %520 = vmatprep.subr.bf16.mxu0 0
        %521 = vmatpush1.bf16.msra.mxu0 %v469
        %522 = vmatprep.subr.bf16.mxu0 0
        %523 = vmatpush1.bf16.msra.mxu0 %v470
        %524 = vmatprep.subr.bf16.mxu0 0
        %525 = vmatpush1.bf16.msra.mxu0 %v471
        %526 = vmatprep.subr.bf16.mxu0 0
        %527 = vmatpush1.bf16.msra.mxu0 %v472
        %528 = vmatprep.subr.bf16.mxu0 0
        %529 = vmatpush1.bf16.msra.mxu0 %v473
        %530 = vmatprep.subr.bf16.mxu0 0
        %531 = vmatpush1.bf16.msra.mxu0 %v474
        %532 = vmatprep.subr.bf16.mxu0 0
        %533 = vmatpush1.bf16.msra.mxu0 %v475
        %534 = vmatprep.subr.bf16.mxu0 0
        %535 = vmatpush1.bf16.msra.mxu0 %v476
        %536 = vmatprep.subr.bf16.mxu0 0
        %537 = vmatpush1.bf16.msra.mxu0 %v477
        %538 = vmatprep.subr.bf16.mxu0 0
        %539 = vmatpush1.bf16.msra.mxu0 %v478
        %540 = vmatprep.subr.bf16.mxu0 0
        %541 = vmatpush1.bf16.msra.mxu0 %v479
        %542 = vmatprep.subr.bf16.mxu0 0
        %543 = vmatpush1.bf16.msra.mxu0 %v480
        %544 = vmatprep.subr.bf16.mxu0 0
        %545 = vmatpush1.bf16.msra.mxu0 %v481
        %546 = vmatprep.mubr.bf16.mxu0 %v365
        %547 = vmatmul.mubr.bf16.gmra.mrb[0].mxu0 %v364
        %v548 = vpop.f32.mrb[0].mxu0
        %v549 = vadd.f32 0.0, %v548
        %v550 = vpop.f32.mrb[0].mxu0
        %v551 = vpop.f32.mrb[0].mxu0
        %v552 = vadd.f32 0.0, %v551
        %v553 = vpop.f32.mrb[0].mxu0
        %554 = vdwg.mxu0
        %555 = vmatprep.subr.bf16.mxu0 0
        %556 = vmatpush1.bf16.msra.mxu0 %v482
        %557 = vmatprep.subr.bf16.mxu0 0
        %558 = vmatpush1.bf16.msra.mxu0 %v483
        %559 = vmatprep.subr.bf16.mxu0 0
        %560 = vmatpush1.bf16.msra.mxu0 %v484
        %561 = vmatprep.subr.bf16.mxu0 0
        %562 = vmatpush1.bf16.msra.mxu0 %v485
        %563 = vmatprep.subr.bf16.mxu0 0
        %564 = vmatpush1.bf16.msra.mxu0 %v486
        %565 = vmatprep.subr.bf16.mxu0 0
        %566 = vmatpush1.bf16.msra.mxu0 %v487
        %567 = vmatprep.subr.bf16.mxu0 0
        %568 = vmatpush1.bf16.msra.mxu0 %v488
        %569 = vmatprep.subr.bf16.mxu0 0
        %570 = vmatpush1.bf16.msra.mxu0 %v489
        %571 = vmatprep.subr.bf16.mxu0 0
        %572 = vmatpush1.bf16.msra.mxu0 0
        %573 = vmatprep.subr.bf16.mxu0 0
        %574 = vmatpush1.bf16.msra.mxu0 0
        %575 = vmatprep.subr.bf16.mxu0 0
        %576 = vmatpush1.bf16.msra.mxu0 0
        %577 = vmatprep.subr.bf16.mxu0 0
        %578 = vmatpush1.bf16.msra.mxu0 0
        %579 = vmatprep.subr.bf16.mxu0 0
        %580 = vmatpush1.bf16.msra.mxu0 0
        %581 = vmatprep.subr.bf16.mxu0 0
        %582 = vmatpush1.bf16.msra.mxu0 0
        %583 = vmatprep.subr.bf16.mxu0 0
        %584 = vmatpush1.bf16.msra.mxu0 0
        %585 = vmatprep.subr.bf16.mxu0 0
        %586 = vmatpush1.bf16.msra.mxu0 0
        %587 = vmatprep.mubr.bf16.mxu0 0
        %588 = vmatmul.mubr.bf16.gmra.mrb[0].mxu0 %v366
        %v589 = vpop.f32.mrb[0].mxu0
        %v590 = vadd.f32 %v549, %v589
        %v591 = vpop.f32.mrb[0].mxu0
        %v592 = vpop.f32.mrb[0].mxu0
        %v593 = vadd.f32 %v552, %v592
        %v594 = vpop.f32.mrb[0].mxu0
        %595 = vdwg.mxu0
        %v596 = vadd.f32 %v300, %v590
        %v597 = vadd.f32 %v301, %v593
        %598 = vst [vmem:[#allocation2] sm:$0xff] %v596
        %599 = vst [vmem:[#allocation2 + $0x8] sm:$0xff] %v597
        %p600 = scmp.eq.s32.totalorder %s22, 2
        // Predicated region
        $region59: #{convnet_forward.29} parent=49 // pred_check
          %p601 = pneg %p600
        $region60: #{convnet_forward.29} parent=49 // pred_check_branch
          %603 = sbr.rel (%p601) target = $region62
        $region61: #{convnet_forward.29} parent=49 // pred_region
          %v604 = vld [vmem:[#allocation2] sm:$0xff]
          %v605 = vld [vmem:[#allocation2 + $0x8] sm:$0xff]
          %606 = vst [vmem:[%s284] sm:$0xff] %v604
          %607 = vst [vmem:[%s284 + $0x8] sm:$0xff] %v605
          %v608 = vadd.f32 %v604, %v605
          %v609 = vrot.slane %v608, 4
          %v610 = vadd.f32 %v608, %v609
          %v611 = vrot.slane %v610, 2
          %v612 = vadd.f32 %v610, %v611
          %v613 = vrot.slane %v612, 1
          %v614 = vadd.f32 %v612, %v613
          %v615 = vmul.f32 %v604, %v604
          %v616 = vmul.f32 %v605, %v605
          %v617 = vadd.f32 %v615, %v616
          %v618 = vrot.slane %v617, 4
          %v619 = vadd.f32 %v617, %v618
          %v620 = vrot.slane %v619, 2
          %v621 = vadd.f32 %v619, %v620
          %v622 = vrot.slane %v621, 1
          %v623 = vadd.f32 %v621, %v622
          %vm624 = vcmask 1040384
          %v625 = vsel %vm624, %v614, %v623
          %626 = vst [vmem:[%s292] sm:$0x3] %v625
        $region62: #{convnet_forward.29} parent=49 // pred_fallthru
          _
        %s627 = smul.u32 2, %s20
        %p628 = scmp.lt.s32.totalorder %s627, 1
        %s629 = scalar_select %p628, %s627, 1
        %p630 = scmp.lt.s32.totalorder %s21, 0
        %s631 = scalar_select %p630, %s21, 0
        %s632 = sadd.s32 %s631, %s629
        %s633 = smul.addr %s632, 8
        %s634 = scalar_lea.vmem %s2, %s633
        %p635 = scmp.lt.s32.totalorder %s20, 0
        %s636 = scalar_select %p635, %s20, 0
        %p637 = scmp.lt.s32.totalorder %s21, 0
        %s638 = scalar_select %p637, %s21, 0
        %s639 = sadd.s32 %s638, %s636
        %s640 = smul.addr %s639, 2
        %s641 = scalar_lea.vmem %s3, %s640
        // Predicated region
        $region63: #{convnet_forward.29} parent=49 // pred_check
          %p642 = pneg %p110
        $region64: #{convnet_forward.29} parent=49 // pred_check_branch
          %644 = sbr.rel (%p642) target = $region66
        $region65: #{convnet_forward.29} parent=49 // pred_region
          %s645 = smul.u32 2, %s20
        $region66: #{convnet_forward.29} parent=49 // pred_fallthru
          _
        // Predicated region
        $region67: #{convnet_forward.29} parent=49 // pred_check
          %p646 = pneg %p138
        $region68: #{convnet_forward.29} parent=49 // pred_check_branch
          %648 = sbr.rel (%p646) target = $region70
        $region69: #{convnet_forward.29} parent=49 // pred_region
          _
        $region70: #{convnet_forward.29} parent=49 // pred_fallthru
          _
        // Predicated region
        $region71: #{convnet_forward.29} parent=49 // pred_check
          %p649 = pneg %p110
        $region72: #{convnet_forward.29} parent=49 // pred_check_branch
          %651 = sbr.rel (%p649) target = $region74
        $region73: #{convnet_forward.29} parent=49 // pred_region
          %s652 = smul.u32 2, %s20
          %p653 = scmp.lt.s32.totalorder %s652, 1
          %s654 = scalar_select %p653, %s652, 1
          %p655 = scmp.lt.s32.totalorder %s21, 0
          %s656 = scalar_select %p655, %s21, 0
          %s657 = sadd.s32 %s656, %s654
          %s658 = smul.addr %s657, 8
          %s659 = scalar_lea.vmem %s2, %s658
        $region74: #{convnet_forward.29} parent=49 // pred_fallthru
          _
        // Predicated region
        $region75: #{convnet_forward.29} parent=49 // pred_check
          %p660 = pneg %p138
        $region76: #{convnet_forward.29} parent=49 // pred_check_branch
          %662 = sbr.rel (%p660) target = $region78
        $region77: #{convnet_forward.29} parent=49 // pred_region
          %p663 = scmp.lt.s32.totalorder %s20, 0
          %s664 = scalar_select %p663, %s20, 0
          %p665 = scmp.lt.s32.totalorder %s21, 0
          %s666 = scalar_select %p665, %s21, 0
          %s667 = sadd.s32 %s666, %s664
          %s668 = smul.addr %s667, 2
          %s669 = scalar_lea.vmem %s3, %s668
        $region78: #{convnet_forward.29} parent=49 // pred_fallthru
          _
      $region50: #{convnet_forward.29} parent=5 // pred_fallthru
        _
      %p670 = scmp.le.s32.totalorder 2, %s10
      // Predicated region
      $region79: #{convnet_forward.29} parent=5 // pred_check
        %p671 = pneg %p670
      $region80: #{convnet_forward.29} parent=5 // pred_check_branch
        %673 = sbr.rel (%p671) target = $region82
      $region81: #{convnet_forward.29} parent=5 // pred_region
        %s674 = ssub.s32 %s10, 2
      $region82: #{convnet_forward.29} parent=5 // pred_fallthru
        _
    $region6: #{convnet_forward.29} parent=1 // loop_footer
      %s14 = sadd.s32 1, %s10
    $region7: #{convnet_forward.29} parent=1 // loop_footer_branch
      %9 = sbr.rel target = $region3
    $region8: #{convnet_forward.29} parent=1 // loop_exit
      _

// kernel: convnet_forward.34
$region0: #{convnet_forward.34}
  #allocation0 [shape = 'u32[]', space=smem, size = 0x4, offset = 0x4, fixed_abs, tag = 'smem constant byte address 0x4 - core index']
  #allocation1 [shape = 'u32[144,128]{1,0:T(1,128)}', space=vmem, size = 0x12000, scoped, tag = 'internal scratch']
  %s0 = inlined_call_operand.vmem [shape: f32[16,128], index: 0, kind: input, shape index: {}]
  %s1 = inlined_call_operand.vmem [shape: f32[1,128], index: 1, kind: input, shape index: {}]
  %s2 = inlined_call_operand.vmem [shape: f32[1,128], index: 2, kind: input, shape index: {}]
  %s3 = inlined_call_operand.vmem [shape: f32[16,128], index: 3, kind: input, shape index: {}]
  %s4 = inlined_call_operand.vmem [shape: f32[16,128], index: 4, kind: output, shape index: {}]
  %s5 = sld [smem:[#allocation0]]
  $region26: #{convnet_forward.34} parent=0
    _
  %s7 = ssub.s32 1, %s5
  %s8 = scalar_select 0, %s7, %s5
  // Predicated region
  $region2: #{convnet_forward.34} parent=0 // pred_check
    _
  $region3: #{convnet_forward.34} parent=0 // pred_check_branch
    %10 = sbr.rel (0) target = $region5
  $region4: #{convnet_forward.34} parent=0 // pred_region
    _
  $region5: #{convnet_forward.34} parent=0 // pred_fallthru
    _
  // Predicated region
  $region6: #{convnet_forward.34} parent=0 // pred_check
    _
  $region7: #{convnet_forward.34} parent=0 // pred_check_branch
    %12 = sbr.rel (0) target = $region9
  $region8: #{convnet_forward.34} parent=0 // pred_region
    _
  $region9: #{convnet_forward.34} parent=0 // pred_fallthru
    _
  // Predicated region
  $region10: #{convnet_forward.34} parent=0 // pred_check
    _
  $region11: #{convnet_forward.34} parent=0 // pred_check_branch
    %14 = sbr.rel (0) target = $region13
  $region12: #{convnet_forward.34} parent=0 // pred_region
    _
  $region13: #{convnet_forward.34} parent=0 // pred_fallthru
    _
  // Predicated region
  $region14: #{convnet_forward.34} parent=0 // pred_check
    _
  $region15: #{convnet_forward.34} parent=0 // pred_check_branch
    %16 = sbr.rel (0) target = $region17
  $region16: #{convnet_forward.34} parent=0 // pred_region
    _
  $region17: #{convnet_forward.34} parent=0 // pred_fallthru
    _
  %v17 = vld [vmem:[%s0] sm:$0xff]
  %v18 = vld [vmem:[%s0 + $0x8] sm:$0xff]
  %v19 = vld [vmem:[%s1] sm:$0x1]
  %v21 = vlaneseq
  %v22 = vshrl.u32 %v21, 7
  %v23 = vsub.s32 0, %v22
  %v24 = vrot.slane %v19, %v23
  %v26 = vmul.f32 %v17, %v24
  %v27 = vmul.f32 %v18, %v24
  %v28 = vld [vmem:[%s2] sm:$0x1]
  %v30 = vlaneseq
  %v31 = vshrl.u32 %v30, 7
  %v32 = vsub.s32 0, %v31
  %v33 = vrot.slane %v28, %v32
  %v35 = vadd.f32 %v26, %v33
  %v36 = vadd.f32 %v27, %v33
  %v37 = vmax.f32 %v35, 0.0
  %v38 = vmax.f32 %v36, 0.0
  %v39 = vld [vmem:[%s3] sm:$0xff]
  %v40 = vld [vmem:[%s3 + $0x8] sm:$0xff]
  %v41 = vadd.f32 %v37, %v39
  %v42 = vadd.f32 %v38, %v40
  %43 = vst [vmem:[%s4] sm:$0xff] %v41
  %44 = vst [vmem:[%s4 + $0x8] sm:$0xff] %v42
  // Predicated region
  $region18: #{convnet_forward.34} parent=0 // pred_check
    _
  $region19: #{convnet_forward.34} parent=0 // pred_check_branch
    %46 = sbr.rel (0) target = $region21
  $region20: #{convnet_forward.34} parent=0 // pred_region
    _
  $region21: #{convnet_forward.34} parent=0 // pred_fallthru
    _
  // Predicated region
  $region22: #{convnet_forward.34} parent=0 // pred_check
    _
  $region23: #{convnet_forward.34} parent=0 // pred_check_branch
    %48 = sbr.rel (0) target = $region25
  $region24: #{convnet_forward.34} parent=0 // pred_region
    _
  $region25: #{convnet_forward.34} parent=0 // pred_fallthru
    _

// kernel: convnet_forward.41
$region0: #{convnet_forward.41}
  #allocation0 [shape = 'u32[]', space=smem, size = 0x4, offset = 0x4, fixed_abs, tag = 'smem constant byte address 0x4 - core index']
  #allocation1 [shape = 'u32[144,128]{1,0:T(1,128)}', space=vmem, size = 0x12000, scoped, tag = 'internal scratch']
  #allocation2 [shape = 'f32[1,1]{1,0:T(1,128)S(1)}', space=vmem, size = 0x200, scoped, tag = 'scoped memory for convnet_forward.41']
  %s0 = inlined_call_operand.vmem [shape: f32[2,1,128], index: 0, kind: input, shape index: {}]
  %s1 = inlined_call_operand.vmem [shape: f32[1,1,128], index: 1, kind: input, shape index: {}]
  %s2 = inlined_call_operand.<no memory space> [shape: f32[1,1], index: 2, kind: input, shape index: {}]
  %s3 = inlined_call_operand.vmem [shape: f32[2,1], index: 3, kind: output, shape index: {}]
  %s4 = sld [smem:[#allocation0]]
  $region22: #{convnet_forward.41} parent=0
    _
  %s6 = ssub.s32 1, %s4
  %s7 = scalar_select 0, %s6, %s4
  %v8 = vstv %s2
  %9 = vst [vmem:[#allocation2] sm:$0x1] %v8
  // Predicated region
  $region2: #{convnet_forward.41} parent=0 // pred_check
    _
  $region3: #{convnet_forward.41} parent=0 // pred_check_branch
    %11 = sbr.rel (0) target = $region5
  $region4: #{convnet_forward.41} parent=0 // pred_region
    _
  $region5: #{convnet_forward.41} parent=0 // pred_fallthru
    _
  // Predicated region
  $region6: #{convnet_forward.41} parent=0 // pred_check
    _
  $region7: #{convnet_forward.41} parent=0 // pred_check_branch
    %13 = sbr.rel (0) target = $region9
  $region8: #{convnet_forward.41} parent=0 // pred_region
    _
  $region9: #{convnet_forward.41} parent=0 // pred_fallthru
    _
  // Predicated region
  $region10: #{convnet_forward.41} parent=0 // pred_check
    _
  $region11: #{convnet_forward.41} parent=0 // pred_check_branch
    %15 = sbr.rel (0) target = $region13
  $region12: #{convnet_forward.41} parent=0 // pred_region
    _
  $region13: #{convnet_forward.41} parent=0 // pred_fallthru
    _
  %v16 = vld [vmem:[%s0] sm:$0x1]
  %v17 = vld [vmem:[%s0 + $0x1] sm:$0x1]
  %v18 = vld [vmem:[%s1] sm:$0x1]
  %v19 = vmul.f32 %v16, %v18
  %v20 = vmul.f32 %v17, %v18
  %vm21 = vcmask 1040384
  %v22 = vsel %vm21, %v19, 0.0
  %23 = vadd.xlane.f32.xlu0 %v22
  %v24 = vpop.xlane.xlu0 %23
  %v25 = vsel %vm21, %v20, 0.0
  %26 = vadd.xlane.f32.xlu0 %v25
  %v27 = vpop.xlane.xlu0 %26
  %v28 = vadd.f32 %v24, 0.0
  %v29 = vadd.f32 %v27, 0.0
  %v30 = vld [vmem:[#allocation2] sm:$0x1]
  %v32 = vlaneseq
  %v33 = vshrl.u32 %v32, 7
  %v34 = vsub.s32 0, %v33
  %v35 = vrot.slane %v30, %v34
  %v37 = vadd.f32 %v28, %v35
  %v38 = vadd.f32 %v29, %v35
  %v41 = vrot.slane %v38, 7
  %vm42 = vcmask 1041409
  %v43 = vsel %vm42, %v41, %v37
  %vm45 = vcmask 1024
  %46 = vst.msk [vmem:[%s3] sm:$0x3] %vm45, %v43
  // Predicated region
  $region14: #{convnet_forward.41} parent=0 // pred_check
    _
  $region15: #{convnet_forward.41} parent=0 // pred_check_branch
    %48 = sbr.rel (0) target = $region17
  $region16: #{convnet_forward.41} parent=0 // pred_region
    _
  $region17: #{convnet_forward.41} parent=0 // pred_fallthru
    _
  // Predicated region
  $region18: #{convnet_forward.41} parent=0 // pred_check
    _
  $region19: #{convnet_forward.41} parent=0 // pred_check_branch
    %50 = sbr.rel (0) target = $region21
  $region20: #{convnet_forward.41} parent=0 // pred_region
    _
  $region21: #{convnet_forward.41} parent=0 // pred_fallthru
    _

</llo_original>
